<compile_context>
chip_gen: v7x
topology: tpu7x:2x2x1
jax: 0.10.0
libtpu: 0.0.40
codegen_flags: <defaults>
</compile_context>

<pallas_src>
import math
import functools

import jax
import jax.numpy as jnp
from jax.experimental import pallas as pl
from jax.experimental.pallas import tpu as pltpu

# ---------------- synthetic config (matches module __init__ shape logic) ----------------
VOCAB_SIZE = 50
EMBEDDING_SIZE = 16      # config.embedding_size
HIDDEN_SIZE = 32         # config.hidden_size  (!= embedding_size -> embedding_proj exists)
FFN_SIZE = 64            # config.ffn_size
NUM_LAYERS = 2           # config.num_layers
NUM_HEADS = 4            # config.num_heads
MAX_LENGTH = 64          # config.max_length
PAD_TOKEN_ID = 0         # config.pad_token_id
DROPOUT = 0.0            # config.dropout -> identity
SINOID = True            # config.sinoid
LN_EPS = 1e-12           # HF Bert layer_norm_eps


# ---------------------------------- fused Pallas kernel ----------------------------------
def _encoder_kernel(emb_tab_ref, tok_ref, pw_ref, pt_ref, evec_ref,
                    wqkv_ref, wo_ref, w1_ref, w2_ref, lvec_ref,
                    x_ref, sub_ref, *, B, S, K, NH, DH, L, V, H, FF):
    """Whole TransformerEncoder forward in one kernel; everything stays in VMEM."""
    M = B * S

    # --- SubtokenEmbeddings: fused one-hot gather + weighted mean (single MXU matmul) ---
    # NOTE: the PyTorch module hard-codes subtokens.ne(0) (not pad_token_id).
    tok = tok_ref[...]                                               # (M, K) int32
    w = (tok != 0).astype(jnp.float32)                               # (M, K)
    w = w / (jnp.sum(w, axis=1, keepdims=True) + 1e-9)
    vocab_iota = jax.lax.broadcasted_iota(jnp.int32, (M, V), 1)      # (M, V)
    sel = jnp.zeros((M, V), jnp.float32)
    for k in range(K):                                               # K tiny & static
        sel = sel + (vocab_iota == tok[:, k:k + 1]).astype(jnp.float32) * w[:, k:k + 1]
    acc = jnp.dot(sel, emb_tab_ref[...], preferred_element_type=jnp.float32)   # (M, E)

    # --- embedding_proj (E -> H), packed emb-vector slab: [proj_b; ln_g; ln_b] ---
    proj_b = evec_ref[0:1, :]
    g_e = evec_ref[1:2, :]
    b_e = evec_ref[2:3, :]
    sub = jnp.dot(acc, pw_ref[...], preferred_element_type=jnp.float32) + proj_b
    sub_ref[...] = sub                                               # module return value 2

    # --- BertEmbeddings: + sinusoidal positions + token_type(0) (pre-tiled), LayerNorm ---
    y = sub + pt_ref[...]                                            # (M, H)
    mean = jnp.mean(y, axis=-1, keepdims=True)
    var = jnp.mean((y - mean) ** 2, axis=-1, keepdims=True)
    x = (y - mean) * jax.lax.rsqrt(var + LN_EPS) * g_e + b_e

    # --- BertEncoder: all layers inside the kernel (weights VMEM-resident, static unroll) ---
    for l in range(L):
        vec = lvec_ref[l]                                            # (8, W) packed slab
        bqkv = vec[0:1, :3 * H]
        bo   = vec[1:2, :H]
        g1   = vec[2:3, :H]
        b1n  = vec[3:4, :H]
        bf1  = vec[4:5, :FF]
        bf2  = vec[5:6, :H]
        g2   = vec[6:7, :H]
        b2n  = vec[7:8, :H]

        # fused QKV projection: single [H, 3H] matmul (1/sqrt(dh) folded into Wq)
        qkv = jnp.dot(x, wqkv_ref[l], preferred_element_type=jnp.float32) + bqkv  # (M, 3H)

        # per-head attention entirely in VMEM; heads concatenated for ONE output proj
        ctxs = []
        for h in range(NH):                                          # static unroll
            qh = qkv[:, h * DH:(h + 1) * DH].reshape(B, S, DH)
            kh = qkv[:, H + h * DH:H + (h + 1) * DH].reshape(B, S, DH)
            vh = qkv[:, 2 * H + h * DH:2 * H + (h + 1) * DH].reshape(B, S, DH)
            s = jnp.einsum("bqd,bkd->bqk", qh, kh,
                           preferred_element_type=jnp.float32)       # (B, S, S)
            m = jnp.max(s, axis=-1, keepdims=True)
            p = jnp.exp(s - m)
            p = p / jnp.sum(p, axis=-1, keepdims=True)               # exact (parity)
            ctx = jnp.einsum("bqk,bkd->bqd", p, vh,
                             preferred_element_type=jnp.float32)     # (B, S, DH)
            ctxs.append(ctx.reshape(M, DH))
        ctx_all = jnp.concatenate(ctxs, axis=-1)                     # (M, H)
        attn = jnp.dot(ctx_all, wo_ref[l], preferred_element_type=jnp.float32) + bo

        # residual + LayerNorm 1 (BertSelfOutput)
        y1 = attn + x
        mean1 = jnp.mean(y1, axis=-1, keepdims=True)
        var1 = jnp.mean((y1 - mean1) ** 2, axis=-1, keepdims=True)
        x1 = (y1 - mean1) * jax.lax.rsqrt(var1 + LN_EPS) * g1 + b1n

        # FFN: linear + exact erf-GELU + linear (BertIntermediate / BertOutput)
        hact = jnp.dot(x1, w1_ref[l], preferred_element_type=jnp.float32) + bf1
        hact = 0.5 * hact * (1.0 + jax.lax.erf(hact * 0.7071067811865476))
        f = jnp.dot(hact, w2_ref[l], preferred_element_type=jnp.float32) + bf2

        # residual + LayerNorm 2
        y2 = f + x1
        mean2 = jnp.mean(y2, axis=-1, keepdims=True)
        var2 = jnp.mean((y2 - mean2) ** 2, axis=-1, keepdims=True)
        x = (y2 - mean2) * jax.lax.rsqrt(var2 + LN_EPS) * g2 + b2n

    x_ref[...] = x


# ------------------------------- pallas_call wrapper --------------------------------
def _vmem():
    return pl.BlockSpec(memory_space=pltpu.MemorySpace.VMEM)


@jax.jit
def transformer_encoder_forward(params, tokens):
    # tokens: [B, S, K] int32
    B, S, K = tokens.shape
    M = B * S
    tok2d = tokens.reshape(M, K).astype(jnp.int32)

    # Sinusoidal positions (position_ids default arange) + token_type row 0, broadcast
    # to (M, H) at trace time so the kernel stays purely 2D for this add.
    pos_type = params["pe"][:S] + params["type_emb"][0][None, :]     # (S, H)
    pos_type = jnp.tile(pos_type, (B, 1))                            # (M, H)

    kern = functools.partial(
        _encoder_kernel, B=B, S=S, K=K,
        NH=NUM_HEADS, DH=HIDDEN_SIZE // NUM_HEADS, L=NUM_LAYERS,
        V=VOCAB_SIZE, H=HIDDEN_SIZE, FF=FFN_SIZE)

    hidden, subtoken = pl.pallas_call(
        kern,
        out_shape=(jax.ShapeDtypeStruct((M, HIDDEN_SIZE), jnp.float32),   # final hidden
                   jax.ShapeDtypeStruct((M, HIDDEN_SIZE), jnp.float32)),  # subtoken (post-proj)
        in_specs=[_vmem()] * 10,
        out_specs=(_vmem(), _vmem()),
        compiler_params=pltpu.CompilerParams(vmem_limit_bytes=32 * 1024 * 1024),
    )(params["word_emb"], tok2d, params["proj_w"], pos_type, params["emb_vec"],
      params["wqkv"], params["wo"], params["w1"], params["w2"], params["lvec"])

    return hidden.reshape(B, S, HIDDEN_SIZE), subtoken.reshape(B, S, HIDDEN_SIZE)


# ------------------------------------ parameters ------------------------------------
def sinusoidal_pe(max_len, d_model):
    position = jnp.arange(max_len, dtype=jnp.float32)[:, None]
    div_term = jnp.exp(
        jnp.arange(0, d_model, 2, dtype=jnp.float32) * (-math.log(10000.0) / d_model)
    )
    pe = jnp.zeros((max_len, d_model), jnp.float32)
    pe = pe.at[:, 0::2].set(jnp.sin(position * div_term))
    pe = pe.at[:, 1::2].set(jnp.cos(position * div_term))
    return pe


def init_params(key):
    keys = jax.random.split(key, 4 + NUM_LAYERS)

    def normal(k, shape):
        return 0.02 * jax.random.normal(k, shape, jnp.float32)

    H, FF = HIDDEN_SIZE, FFN_SIZE
    W = max(3 * H, FF)                      # packed per-layer vector-slab width

    word_emb = normal(keys[0], (VOCAB_SIZE, EMBEDDING_SIZE))
    word_emb = word_emb.at[PAD_TOKEN_ID].set(0.0)   # nn.Embedding padding_idx semantics

    dh = H // NUM_HEADS
    scale = 1.0 / math.sqrt(dh)

    # packed embedding-side vectors: [proj_b ; emb_ln_gamma ; emb_ln_beta]  -> (3, H)
    emb_vec = jnp.stack([
        jnp.zeros((H,), jnp.float32),
        jnp.ones((H,), jnp.float32),
        jnp.zeros((H,), jnp.float32),
    ], axis=0)

    def pad_to(v, width):
        return jnp.pad(v, (0, width - v.shape[0]))

    wqkv_l, wo_l, w1_l, w2_l, vec_l = [], [], [], [], []
    for i in range(NUM_LAYERS):
        lk = jax.random.split(keys[4 + i], 6)
        wq = normal(lk[0], (H, H))
        wk = normal(lk[1], (H, H))
        wv = normal(lk[2], (H, H))
        # Fold attention scale 1/sqrt(dh) into Wq (and bq, which is zero here).
        wqkv_l.append(jnp.concatenate([wq * scale, wk, wv], axis=1))    # (H, 3H)
        wo_l.append(normal(lk[3], (H, H)))
        w1_l.append(normal(lk[4], (H, FF)))
        w2_l.append(normal(lk[5], (FF, H)))
        # packed per-layer vectors: one (8, W) slab -> one DMA instead of ~8
        vec_l.append(jnp.stack([
            pad_to(jnp.zeros((3 * H,), jnp.float32), W),   # bqkv
            pad_to(jnp.zeros((H,), jnp.float32), W),       # bo
            pad_to(jnp.ones((H,), jnp.float32), W),        # ln1 gamma
            pad_to(jnp.zeros((H,), jnp.float32), W),       # ln1 beta
            pad_to(jnp.zeros((FF,), jnp.float32), W),      # b1
            pad_to(jnp.zeros((H,), jnp.float32), W),       # b2
            pad_to(jnp.ones((H,), jnp.float32), W),        # ln2 gamma
            pad_to(jnp.zeros((H,), jnp.float32), W),       # ln2 beta
        ], axis=0))

    return {
        "word_emb": word_emb,
        "proj_w": normal(keys[1], (EMBEDDING_SIZE, H)),
        "type_emb": normal(keys[2], (2, H)),               # token_type_ids default 0
        "pe": sinusoidal_pe(5000, H),                      # precomputed once
        "emb_vec": emb_vec,
        "wqkv": jnp.stack(wqkv_l),                         # (L, H, 3H)
        "wo": jnp.stack(wo_l),                             # (L, H, H)
        "w1": jnp.stack(w1_l),                             # (L, H, FF)
        "w2": jnp.stack(w2_l),                             # (L, FF, H)
        "lvec": jnp.stack(vec_l),                          # (L, 8, W)
    }


# --------------------------------------- main ----------------------------------------
if __name__ == "__main__":
    key = jax.random.PRNGKey(0)
    pkey, tkey = jax.random.split(key)
    params = init_params(pkey)

    B, S, K = 2, 8, 3
    tokens = jax.random.randint(tkey, (B, S, K), 0, VOCAB_SIZE, dtype=jnp.int32)

    hidden, subtoken = transformer_encoder_forward(params, tokens)
    jax.block_until_ready((hidden, subtoken))

    assert hidden.shape == (B, S, HIDDEN_SIZE)
    assert subtoken.shape == (B, S, HIDDEN_SIZE)
    assert hidden.dtype == jnp.float32 and subtoken.dtype == jnp.float32
    assert bool(jnp.all(jnp.isfinite(hidden))) and bool(jnp.all(jnp.isfinite(subtoken)))
    print("KERNEL_OK")
</pallas_src>

<mosaic_0001>
module attributes {stable_mosaic.version = 11 : i64} {
  func.func @_encoder_kernel(%arg0: memref<50x16xf32, #tpu.memory_space<vmem>>, %arg1: memref<16x3xi32, #tpu.memory_space<vmem>>, %arg2: memref<16x32xf32, #tpu.memory_space<vmem>>, %arg3: memref<16x32xf32, #tpu.memory_space<vmem>>, %arg4: memref<3x32xf32, #tpu.memory_space<vmem>>, %arg5: memref<2x32x96xf32, #tpu.memory_space<vmem>>, %arg6: memref<2x32x32xf32, #tpu.memory_space<vmem>>, %arg7: memref<2x32x64xf32, #tpu.memory_space<vmem>>, %arg8: memref<2x64x32xf32, #tpu.memory_space<vmem>>, %arg9: memref<2x8x96xf32, #tpu.memory_space<vmem>>, %arg10: memref<16x32xf32, #tpu.memory_space<vmem>>, %arg11: memref<16x32xf32, #tpu.memory_space<vmem>>) attributes {dimension_semantics = [], scalar_prefetch = 0 : i64, scratch_operands = 0 : i64, tpu.core_type = #tpu.core_type<tc>} {
    %c0 = arith.constant 0 : index
    %c0_0 = arith.constant 0 : index
    %0 = vector.load %arg1[%c0, %c0_0] : memref<16x3xi32, #tpu.memory_space<vmem>>, vector<16x3xi32>
    %c0_i32 = arith.constant 0 : i32
    %1 = vector.broadcast %c0_i32 : i32 to vector<16x3xi32>
    %2 = arith.cmpi ne, %0, %1 : vector<16x3xi32>
    %3 = arith.extui %2 : vector<16x3xi1> to vector<16x3xi32>
    %4 = arith.sitofp %3 : vector<16x3xi32> to vector<16x3xf32>
    %cst = arith.constant dense<0.000000e+00> : vector<16xf32>
    %5 = vector.multi_reduction <add>, %4, %cst [1] : vector<16x3xf32> to vector<16xf32>
    %6 = vector.shape_cast %5 : vector<16xf32> to vector<16x1xf32>
    %cst_1 = arith.constant 9.99999971E-10 : f32
    %7 = vector.broadcast %cst_1 : f32 to vector<16x1xf32>
    %8 = arith.addf %6, %7 : vector<16x1xf32>
    %9 = vector.broadcast %8 : vector<16x1xf32> to vector<16x3xf32>
    %10 = arith.divf %4, %9 : vector<16x3xf32>
    %11 = tpu.iota {dimensions = array<i32: 1>} : vector<16x50xi32>
    %cst_2 = arith.constant 0.000000e+00 : f32
    %12 = vector.broadcast %cst_2 : f32 to vector<16x50xf32>
    %13 = vector.extract_strided_slice %0 {offsets = [0, 0], sizes = [16, 1], strides = [1, 1]} : vector<16x3xi32> to vector<16x1xi32>
    %14 = vector.broadcast %13 : vector<16x1xi32> to vector<16x50xi32>
    %15 = arith.cmpi eq, %11, %14 : vector<16x50xi32>
    %16 = arith.extui %15 : vector<16x50xi1> to vector<16x50xi32>
    %17 = arith.sitofp %16 : vector<16x50xi32> to vector<16x50xf32>
    %18 = vector.extract_strided_slice %10 {offsets = [0, 0], sizes = [16, 1], strides = [1, 1]} : vector<16x3xf32> to vector<16x1xf32>
    %19 = vector.broadcast %18 : vector<16x1xf32> to vector<16x50xf32>
    %20 = arith.mulf %17, %19 : vector<16x50xf32>
    %21 = arith.addf %12, %20 : vector<16x50xf32>
    %22 = vector.extract_strided_slice %0 {offsets = [0, 1], sizes = [16, 1], strides = [1, 1]} : vector<16x3xi32> to vector<16x1xi32>
    %23 = vector.broadcast %22 : vector<16x1xi32> to vector<16x50xi32>
    %24 = arith.cmpi eq, %11, %23 : vector<16x50xi32>
    %25 = arith.extui %24 : vector<16x50xi1> to vector<16x50xi32>
    %26 = arith.sitofp %25 : vector<16x50xi32> to vector<16x50xf32>
    %27 = vector.extract_strided_slice %10 {offsets = [0, 1], sizes = [16, 1], strides = [1, 1]} : vector<16x3xf32> to vector<16x1xf32>
    %28 = vector.broadcast %27 : vector<16x1xf32> to vector<16x50xf32>
    %29 = arith.mulf %26, %28 : vector<16x50xf32>
    %30 = arith.addf %21, %29 : vector<16x50xf32>
    %31 = vector.extract_strided_slice %0 {offsets = [0, 2], sizes = [16, 1], strides = [1, 1]} : vector<16x3xi32> to vector<16x1xi32>
    %32 = vector.broadcast %31 : vector<16x1xi32> to vector<16x50xi32>
    %33 = arith.cmpi eq, %11, %32 : vector<16x50xi32>
    %34 = arith.extui %33 : vector<16x50xi1> to vector<16x50xi32>
    %35 = arith.sitofp %34 : vector<16x50xi32> to vector<16x50xf32>
    %36 = vector.extract_strided_slice %10 {offsets = [0, 2], sizes = [16, 1], strides = [1, 1]} : vector<16x3xf32> to vector<16x1xf32>
    %37 = vector.broadcast %36 : vector<16x1xf32> to vector<16x50xf32>
    %38 = arith.mulf %35, %37 : vector<16x50xf32>
    %39 = arith.addf %30, %38 : vector<16x50xf32>
    %c0_3 = arith.constant 0 : index
    %c0_4 = arith.constant 0 : index
    %40 = vector.load %arg0[%c0_3, %c0_4] : memref<50x16xf32, #tpu.memory_space<vmem>>, vector<50x16xf32>
    %cst_5 = arith.constant dense<0.000000e+00> : vector<16x16xf32>
    %41 = tpu.matmul %39, %40, %cst_5 {dimension_numbers = #tpu.dot_dimension_numbers<[1], [0], [0], [1], [0, 0, 1, 1], [], []>} : vector<16x50xf32>, vector<50x16xf32>, vector<16x16xf32> -> vector<16x16xf32>
    %c0_6 = arith.constant 0 : index
    %c0_7 = arith.constant 0 : index
    %42 = vector.load %arg4[%c0_6, %c0_7] : memref<3x32xf32, #tpu.memory_space<vmem>>, vector<1x32xf32>
    %c1 = arith.constant 1 : index
    %c0_8 = arith.constant 0 : index
    %43 = vector.load %arg4[%c1, %c0_8] : memref<3x32xf32, #tpu.memory_space<vmem>>, vector<1x32xf32>
    %c2 = arith.constant 2 : index
    %c0_9 = arith.constant 0 : index
    %44 = vector.load %arg4[%c2, %c0_9] : memref<3x32xf32, #tpu.memory_space<vmem>>, vector<1x32xf32>
    %c0_10 = arith.constant 0 : index
    %c0_11 = arith.constant 0 : index
    %45 = vector.load %arg2[%c0_10, %c0_11] : memref<16x32xf32, #tpu.memory_space<vmem>>, vector<16x32xf32>
    %cst_12 = arith.constant dense<0.000000e+00> : vector<16x32xf32>
    %46 = tpu.matmul %41, %45, %cst_12 {dimension_numbers = #tpu.dot_dimension_numbers<[1], [0], [0], [1], [0, 0, 1, 1], [], []>} : vector<16x16xf32>, vector<16x32xf32>, vector<16x32xf32> -> vector<16x32xf32>
    %47 = vector.broadcast %42 : vector<1x32xf32> to vector<16x32xf32>
    %48 = arith.addf %46, %47 : vector<16x32xf32>
    %c0_13 = arith.constant 0 : index
    %c0_14 = arith.constant 0 : index
    %49 = vector.load %arg11[%c0_13, %c0_14] : memref<16x32xf32, #tpu.memory_space<vmem>>, vector<16x32xf32>
    tpu.vector_store %arg11[%c0_13, %c0_14], %48 {strides = array<i32>} : memref<16x32xf32, #tpu.memory_space<vmem>>, vector<16x32xf32>,
    %c0_15 = arith.constant 0 : index
    %c0_16 = arith.constant 0 : index
    %50 = vector.load %arg3[%c0_15, %c0_16] : memref<16x32xf32, #tpu.memory_space<vmem>>, vector<16x32xf32>
    %51 = arith.addf %48, %50 : vector<16x32xf32>
    %cst_17 = arith.constant dense<0.000000e+00> : vector<16xf32>
    %52 = vector.multi_reduction <add>, %51, %cst_17 [1] : vector<16x32xf32> to vector<16xf32>
    %53 = vector.shape_cast %52 : vector<16xf32> to vector<16x1xf32>
    %cst_18 = arith.constant 3.200000e+01 : f32
    %54 = vector.broadcast %cst_18 : f32 to vector<16x1xf32>
    %55 = arith.divf %53, %54 : vector<16x1xf32>
    %56 = vector.broadcast %55 : vector<16x1xf32> to vector<16x32xf32>
    %57 = arith.subf %51, %56 : vector<16x32xf32>
    %58 = arith.mulf %57, %57 : vector<16x32xf32>
    %cst_19 = arith.constant dense<0.000000e+00> : vector<16xf32>
    %59 = vector.multi_reduction <add>, %58, %cst_19 [1] : vector<16x32xf32> to vector<16xf32>
    %60 = vector.shape_cast %59 : vector<16xf32> to vector<16x1xf32>
    %cst_20 = arith.constant 3.200000e+01 : f32
    %61 = vector.broadcast %cst_20 : f32 to vector<16x1xf32>
    %62 = arith.divf %60, %61 : vector<16x1xf32>
    %63 = vector.broadcast %55 : vector<16x1xf32> to vector<16x32xf32>
    %64 = arith.subf %51, %63 : vector<16x32xf32>
    %cst_21 = arith.constant 9.99999996E-13 : f32
    %65 = vector.broadcast %cst_21 : f32 to vector<16x1xf32>
    %66 = arith.addf %62, %65 : vector<16x1xf32>
    %67 = math.rsqrt %66 : vector<16x1xf32>
    %68 = vector.broadcast %67 : vector<16x1xf32> to vector<16x32xf32>
    %69 = arith.mulf %64, %68 : vector<16x32xf32>
    %70 = vector.broadcast %43 : vector<1x32xf32> to vector<16x32xf32>
    %71 = arith.mulf %69, %70 : vector<16x32xf32>
    %72 = vector.broadcast %44 : vector<1x32xf32> to vector<16x32xf32>
    %73 = arith.addf %71, %72 : vector<16x32xf32>
    %c0_22 = arith.constant 0 : index
    %c0_23 = arith.constant 0 : index
    %c0_24 = arith.constant 0 : index
    %74 = vector.load %arg9[%c0_22, %c0_23, %c0_24] : memref<2x8x96xf32, #tpu.memory_space<vmem>>, vector<1x8x96xf32>
    %75 = vector.shape_cast %74 : vector<1x8x96xf32> to vector<8x96xf32>
    %76 = vector.extract_strided_slice %75 {offsets = [0, 0], sizes = [1, 96], strides = [1, 1]} : vector<8x96xf32> to vector<1x96xf32>
    %77 = vector.extract_strided_slice %75 {offsets = [1, 0], sizes = [1, 32], strides = [1, 1]} : vector<8x96xf32> to vector<1x32xf32>
    %78 = vector.extract_strided_slice %75 {offsets = [2, 0], sizes = [1, 32], strides = [1, 1]} : vector<8x96xf32> to vector<1x32xf32>
    %79 = vector.extract_strided_slice %75 {offsets = [3, 0], sizes = [1, 32], strides = [1, 1]} : vector<8x96xf32> to vector<1x32xf32>
    %80 = vector.extract_strided_slice %75 {offsets = [4, 0], sizes = [1, 64], strides = [1, 1]} : vector<8x96xf32> to vector<1x64xf32>
    %81 = vector.extract_strided_slice %75 {offsets = [5, 0], sizes = [1, 32], strides = [1, 1]} : vector<8x96xf32> to vector<1x32xf32>
    %82 = vector.extract_strided_slice %75 {offsets = [6, 0], sizes = [1, 32], strides = [1, 1]} : vector<8x96xf32> to vector<1x32xf32>
    %83 = vector.extract_strided_slice %75 {offsets = [7, 0], sizes = [1, 32], strides = [1, 1]} : vector<8x96xf32> to vector<1x32xf32>
    %c0_25 = arith.constant 0 : index
    %c0_26 = arith.constant 0 : index
    %c0_27 = arith.constant 0 : index
    %84 = vector.load %arg5[%c0_25, %c0_26, %c0_27] : memref<2x32x96xf32, #tpu.memory_space<vmem>>, vector<1x32x96xf32>
    %85 = vector.shape_cast %84 : vector<1x32x96xf32> to vector<32x96xf32>
    %cst_28 = arith.constant dense<0.000000e+00> : vector<16x96xf32>
    %86 = tpu.matmul %73, %85, %cst_28 {dimension_numbers = #tpu.dot_dimension_numbers<[1], [0], [0], [1], [0, 0, 1, 1], [], []>} : vector<16x32xf32>, vector<32x96xf32>, vector<16x96xf32> -> vector<16x96xf32>
    %87 = vector.broadcast %76 : vector<1x96xf32> to vector<16x96xf32>
    %88 = arith.addf %86, %87 : vector<16x96xf32>
    %89 = vector.extract_strided_slice %88 {offsets = [0, 0], sizes = [16, 8], strides = [1, 1]} : vector<16x96xf32> to vector<16x8xf32>
    %90 = vector.shape_cast %89 : vector<16x8xf32> to vector<2x8x8xf32>
    %91 = vector.extract_strided_slice %88 {offsets = [0, 32], sizes = [16, 8], strides = [1, 1]} : vector<16x96xf32> to vector<16x8xf32>
    %92 = vector.shape_cast %91 : vector<16x8xf32> to vector<2x8x8xf32>
    %93 = vector.extract_strided_slice %88 {offsets = [0, 64], sizes = [16, 8], strides = [1, 1]} : vector<16x96xf32> to vector<16x8xf32>
    %94 = vector.shape_cast %93 : vector<16x8xf32> to vector<2x8x8xf32>
    "tpu.trace_start"() <{level = 10 : i32, message = "bqd,bkd->bqk"}> : () -> ()
    %cst_29 = arith.constant dense<0.000000e+00> : vector<2x8x8xf32>
    %95 = tpu.matmul %90, %92, %cst_29 {dimension_numbers = #tpu.dot_dimension_numbers<[2], [2], [1], [1], [0, 0, 0, 1, 1, 1], [0], [0]>} : vector<2x8x8xf32>, vector<2x8x8xf32>, vector<2x8x8xf32> -> vector<2x8x8xf32>
    "tpu.trace_stop"() : () -> ()
    %cst_30 = arith.constant dense<0xFF800000> : vector<2x8xf32>
    %96 = vector.multi_reduction <maximumf>, %95, %cst_30 [2] : vector<2x8x8xf32> to vector<2x8xf32>
    %97 = vector.shape_cast %96 : vector<2x8xf32> to vector<2x8x1xf32>
    %98 = vector.broadcast %97 : vector<2x8x1xf32> to vector<2x8x8xf32>
    %99 = arith.subf %95, %98 : vector<2x8x8xf32>
    %100 = math.exp %99 : vector<2x8x8xf32>
    %cst_31 = arith.constant dense<0.000000e+00> : vector<2x8xf32>
    %101 = vector.multi_reduction <add>, %100, %cst_31 [2] : vector<2x8x8xf32> to vector<2x8xf32>
    %102 = vector.shape_cast %101 : vector<2x8xf32> to vector<2x8x1xf32>
    %103 = vector.broadcast %102 : vector<2x8x1xf32> to vector<2x8x8xf32>
    %104 = arith.divf %100, %103 : vector<2x8x8xf32>
    "tpu.trace_start"() <{level = 10 : i32, message = "bqk,bkd->bqd"}> : () -> ()
    %cst_32 = arith.constant dense<0.000000e+00> : vector<2x8x8xf32>
    %105 = tpu.matmul %104, %94, %cst_32 {dimension_numbers = #tpu.dot_dimension_numbers<[2], [1], [1], [2], [0, 0, 0, 1, 1, 2], [0], [0]>} : vector<2x8x8xf32>, vector<2x8x8xf32>, vector<2x8x8xf32> -> vector<2x8x8xf32>
    "tpu.trace_stop"() : () -> ()
    %106 = vector.shape_cast %105 : vector<2x8x8xf32> to vector<16x8xf32>
    %107 = vector.extract_strided_slice %88 {offsets = [0, 8], sizes = [16, 8], strides = [1, 1]} : vector<16x96xf32> to vector<16x8xf32>
    %108 = vector.shape_cast %107 : vector<16x8xf32> to vector<2x8x8xf32>
    %109 = vector.extract_strided_slice %88 {offsets = [0, 40], sizes = [16, 8], strides = [1, 1]} : vector<16x96xf32> to vector<16x8xf32>
    %110 = vector.shape_cast %109 : vector<16x8xf32> to vector<2x8x8xf32>
    %111 = vector.extract_strided_slice %88 {offsets = [0, 72], sizes = [16, 8], strides = [1, 1]} : vector<16x96xf32> to vector<16x8xf32>
    %112 = vector.shape_cast %111 : vector<16x8xf32> to vector<2x8x8xf32>
    "tpu.trace_start"() <{level = 10 : i32, message = "bqd,bkd->bqk"}> : () -> ()
    %cst_33 = arith.constant dense<0.000000e+00> : vector<2x8x8xf32>
    %113 = tpu.matmul %108, %110, %cst_33 {dimension_numbers = #tpu.dot_dimension_numbers<[2], [2], [1], [1], [0, 0, 0, 1, 1, 1], [0], [0]>} : vector<2x8x8xf32>, vector<2x8x8xf32>, vector<2x8x8xf32> -> vector<2x8x8xf32>
    "tpu.trace_stop"() : () -> ()
    %cst_34 = arith.constant dense<0xFF800000> : vector<2x8xf32>
    %114 = vector.multi_reduction <maximumf>, %113, %cst_34 [2] : vector<2x8x8xf32> to vector<2x8xf32>
    %115 = vector.shape_cast %114 : vector<2x8xf32> to vector<2x8x1xf32>
    %116 = vector.broadcast %115 : vector<2x8x1xf32> to vector<2x8x8xf32>
    %117 = arith.subf %113, %116 : vector<2x8x8xf32>
    %118 = math.exp %117 : vector<2x8x8xf32>
    %cst_35 = arith.constant dense<0.000000e+00> : vector<2x8xf32>
    %119 = vector.multi_reduction <add>, %118, %cst_35 [2] : vector<2x8x8xf32> to vector<2x8xf32>
    %120 = vector.shape_cast %119 : vector<2x8xf32> to vector<2x8x1xf32>
    %121 = vector.broadcast %120 : vector<2x8x1xf32> to vector<2x8x8xf32>
    %122 = arith.divf %118, %121 : vector<2x8x8xf32>
    "tpu.trace_start"() <{level = 10 : i32, message = "bqk,bkd->bqd"}> : () -> ()
    %cst_36 = arith.constant dense<0.000000e+00> : vector<2x8x8xf32>
    %123 = tpu.matmul %122, %112, %cst_36 {dimension_numbers = #tpu.dot_dimension_numbers<[2], [1], [1], [2], [0, 0, 0, 1, 1, 2], [0], [0]>} : vector<2x8x8xf32>, vector<2x8x8xf32>, vector<2x8x8xf32> -> vector<2x8x8xf32>
    "tpu.trace_stop"() : () -> ()
    %124 = vector.shape_cast %123 : vector<2x8x8xf32> to vector<16x8xf32>
    %125 = vector.extract_strided_slice %88 {offsets = [0, 16], sizes = [16, 8], strides = [1, 1]} : vector<16x96xf32> to vector<16x8xf32>
    %126 = vector.shape_cast %125 : vector<16x8xf32> to vector<2x8x8xf32>
    %127 = vector.extract_strided_slice %88 {offsets = [0, 48], sizes = [16, 8], strides = [1, 1]} : vector<16x96xf32> to vector<16x8xf32>
    %128 = vector.shape_cast %127 : vector<16x8xf32> to vector<2x8x8xf32>
    %129 = vector.extract_strided_slice %88 {offsets = [0, 80], sizes = [16, 8], strides = [1, 1]} : vector<16x96xf32> to vector<16x8xf32>
    %130 = vector.shape_cast %129 : vector<16x8xf32> to vector<2x8x8xf32>
    "tpu.trace_start"() <{level = 10 : i32, message = "bqd,bkd->bqk"}> : () -> ()
    %cst_37 = arith.constant dense<0.000000e+00> : vector<2x8x8xf32>
    %131 = tpu.matmul %126, %128, %cst_37 {dimension_numbers = #tpu.dot_dimension_numbers<[2], [2], [1], [1], [0, 0, 0, 1, 1, 1], [0], [0]>} : vector<2x8x8xf32>, vector<2x8x8xf32>, vector<2x8x8xf32> -> vector<2x8x8xf32>
    "tpu.trace_stop"() : () -> ()
    %cst_38 = arith.constant dense<0xFF800000> : vector<2x8xf32>
    %132 = vector.multi_reduction <maximumf>, %131, %cst_38 [2] : vector<2x8x8xf32> to vector<2x8xf32>
    %133 = vector.shape_cast %132 : vector<2x8xf32> to vector<2x8x1xf32>
    %134 = vector.broadcast %133 : vector<2x8x1xf32> to vector<2x8x8xf32>
    %135 = arith.subf %131, %134 : vector<2x8x8xf32>
    %136 = math.exp %135 : vector<2x8x8xf32>
    %cst_39 = arith.constant dense<0.000000e+00> : vector<2x8xf32>
    %137 = vector.multi_reduction <add>, %136, %cst_39 [2] : vector<2x8x8xf32> to vector<2x8xf32>
    %138 = vector.shape_cast %137 : vector<2x8xf32> to vector<2x8x1xf32>
    %139 = vector.broadcast %138 : vector<2x8x1xf32> to vector<2x8x8xf32>
    %140 = arith.divf %136, %139 : vector<2x8x8xf32>
    "tpu.trace_start"() <{level = 10 : i32, message = "bqk,bkd->bqd"}> : () -> ()
    %cst_40 = arith.constant dense<0.000000e+00> : vector<2x8x8xf32>
    %141 = tpu.matmul %140, %130, %cst_40 {dimension_numbers = #tpu.dot_dimension_numbers<[2], [1], [1], [2], [0, 0, 0, 1, 1, 2], [0], [0]>} : vector<2x8x8xf32>, vector<2x8x8xf32>, vector<2x8x8xf32> -> vector<2x8x8xf32>
    "tpu.trace_stop"() : () -> ()
    %142 = vector.shape_cast %141 : vector<2x8x8xf32> to vector<16x8xf32>
    %143 = vector.extract_strided_slice %88 {offsets = [0, 24], sizes = [16, 8], strides = [1, 1]} : vector<16x96xf32> to vector<16x8xf32>
    %144 = vector.shape_cast %143 : vector<16x8xf32> to vector<2x8x8xf32>
    %145 = vector.extract_strided_slice %88 {offsets = [0, 56], sizes = [16, 8], strides = [1, 1]} : vector<16x96xf32> to vector<16x8xf32>
    %146 = vector.shape_cast %145 : vector<16x8xf32> to vector<2x8x8xf32>
    %147 = vector.extract_strided_slice %88 {offsets = [0, 88], sizes = [16, 8], strides = [1, 1]} : vector<16x96xf32> to vector<16x8xf32>
    %148 = vector.shape_cast %147 : vector<16x8xf32> to vector<2x8x8xf32>
    "tpu.trace_start"() <{level = 10 : i32, message = "bqd,bkd->bqk"}> : () -> ()
    %cst_41 = arith.constant dense<0.000000e+00> : vector<2x8x8xf32>
    %149 = tpu.matmul %144, %146, %cst_41 {dimension_numbers = #tpu.dot_dimension_numbers<[2], [2], [1], [1], [0, 0, 0, 1, 1, 1], [0], [0]>} : vector<2x8x8xf32>, vector<2x8x8xf32>, vector<2x8x8xf32> -> vector<2x8x8xf32>
    "tpu.trace_stop"() : () -> ()
    %cst_42 = arith.constant dense<0xFF800000> : vector<2x8xf32>
    %150 = vector.multi_reduction <maximumf>, %149, %cst_42 [2] : vector<2x8x8xf32> to vector<2x8xf32>
    %151 = vector.shape_cast %150 : vector<2x8xf32> to vector<2x8x1xf32>
    %152 = vector.broadcast %151 : vector<2x8x1xf32> to vector<2x8x8xf32>
    %153 = arith.subf %149, %152 : vector<2x8x8xf32>
    %154 = math.exp %153 : vector<2x8x8xf32>
    %cst_43 = arith.constant dense<0.000000e+00> : vector<2x8xf32>
    %155 = vector.multi_reduction <add>, %154, %cst_43 [2] : vector<2x8x8xf32> to vector<2x8xf32>
    %156 = vector.shape_cast %155 : vector<2x8xf32> to vector<2x8x1xf32>
    %157 = vector.broadcast %156 : vector<2x8x1xf32> to vector<2x8x8xf32>
    %158 = arith.divf %154, %157 : vector<2x8x8xf32>
    "tpu.trace_start"() <{level = 10 : i32, message = "bqk,bkd->bqd"}> : () -> ()
    %cst_44 = arith.constant dense<0.000000e+00> : vector<2x8x8xf32>
    %159 = tpu.matmul %158, %148, %cst_44 {dimension_numbers = #tpu.dot_dimension_numbers<[2], [1], [1], [2], [0, 0, 0, 1, 1, 2], [0], [0]>} : vector<2x8x8xf32>, vector<2x8x8xf32>, vector<2x8x8xf32> -> vector<2x8x8xf32>
    "tpu.trace_stop"() : () -> ()
    %160 = vector.shape_cast %159 : vector<2x8x8xf32> to vector<16x8xf32>
    %161 = tpu.concatenate %106, %124, %142, %160 in 1 : vector<16x8xf32>, vector<16x8xf32>, vector<16x8xf32>, vector<16x8xf32> -> vector<16x32xf32>
    %c0_45 = arith.constant 0 : index
    %c0_46 = arith.constant 0 : index
    %c0_47 = arith.constant 0 : index
    %162 = vector.load %arg6[%c0_45, %c0_46, %c0_47] : memref<2x32x32xf32, #tpu.memory_space<vmem>>, vector<1x32x32xf32>
    %163 = vector.shape_cast %162 : vector<1x32x32xf32> to vector<32x32xf32>
    %cst_48 = arith.constant dense<0.000000e+00> : vector<16x32xf32>
    %164 = tpu.matmul %161, %163, %cst_48 {dimension_numbers = #tpu.dot_dimension_numbers<[1], [0], [0], [1], [0, 0, 1, 1], [], []>} : vector<16x32xf32>, vector<32x32xf32>, vector<16x32xf32> -> vector<16x32xf32>
    %165 = vector.broadcast %77 : vector<1x32xf32> to vector<16x32xf32>
    %166 = arith.addf %164, %165 : vector<16x32xf32>
    %167 = arith.addf %166, %73 : vector<16x32xf32>
    %cst_49 = arith.constant dense<0.000000e+00> : vector<16xf32>
    %168 = vector.multi_reduction <add>, %167, %cst_49 [1] : vector<16x32xf32> to vector<16xf32>
    %169 = vector.shape_cast %168 : vector<16xf32> to vector<16x1xf32>
    %cst_50 = arith.constant 3.200000e+01 : f32
    %170 = vector.broadcast %cst_50 : f32 to vector<16x1xf32>
    %171 = arith.divf %169, %170 : vector<16x1xf32>
    %172 = vector.broadcast %171 : vector<16x1xf32> to vector<16x32xf32>
    %173 = arith.subf %167, %172 : vector<16x32xf32>
    %174 = arith.mulf %173, %173 : vector<16x32xf32>
    %cst_51 = arith.constant dense<0.000000e+00> : vector<16xf32>
    %175 = vector.multi_reduction <add>, %174, %cst_51 [1] : vector<16x32xf32> to vector<16xf32>
    %176 = vector.shape_cast %175 : vector<16xf32> to vector<16x1xf32>
    %cst_52 = arith.constant 3.200000e+01 : f32
    %177 = vector.broadcast %cst_52 : f32 to vector<16x1xf32>
    %178 = arith.divf %176, %177 : vector<16x1xf32>
    %179 = vector.broadcast %171 : vector<16x1xf32> to vector<16x32xf32>
    %180 = arith.subf %167, %179 : vector<16x32xf32>
    %cst_53 = arith.constant 9.99999996E-13 : f32
    %181 = vector.broadcast %cst_53 : f32 to vector<16x1xf32>
    %182 = arith.addf %178, %181 : vector<16x1xf32>
    %183 = math.rsqrt %182 : vector<16x1xf32>
    %184 = vector.broadcast %183 : vector<16x1xf32> to vector<16x32xf32>
    %185 = arith.mulf %180, %184 : vector<16x32xf32>
    %186 = vector.broadcast %78 : vector<1x32xf32> to vector<16x32xf32>
    %187 = arith.mulf %185, %186 : vector<16x32xf32>
    %188 = vector.broadcast %79 : vector<1x32xf32> to vector<16x32xf32>
    %189 = arith.addf %187, %188 : vector<16x32xf32>
    %c0_54 = arith.constant 0 : index
    %c0_55 = arith.constant 0 : index
    %c0_56 = arith.constant 0 : index
    %190 = vector.load %arg7[%c0_54, %c0_55, %c0_56] : memref<2x32x64xf32, #tpu.memory_space<vmem>>, vector<1x32x64xf32>
    %191 = vector.shape_cast %190 : vector<1x32x64xf32> to vector<32x64xf32>
    %cst_57 = arith.constant dense<0.000000e+00> : vector<16x64xf32>
    %192 = tpu.matmul %189, %191, %cst_57 {dimension_numbers = #tpu.dot_dimension_numbers<[1], [0], [0], [1], [0, 0, 1, 1], [], []>} : vector<16x32xf32>, vector<32x64xf32>, vector<16x64xf32> -> vector<16x64xf32>
    %193 = vector.broadcast %80 : vector<1x64xf32> to vector<16x64xf32>
    %194 = arith.addf %192, %193 : vector<16x64xf32>
    %cst_58 = arith.constant 5.000000e-01 : f32
    %195 = vector.broadcast %cst_58 : f32 to vector<16x64xf32>
    %196 = arith.mulf %195, %194 : vector<16x64xf32>
    %cst_59 = arith.constant 0.707106769 : f32
    %197 = vector.broadcast %cst_59 : f32 to vector<16x64xf32>
    %198 = arith.mulf %194, %197 : vector<16x64xf32>
    %199 = math.erf %198 : vector<16x64xf32>
    %cst_60 = arith.constant 1.000000e+00 : f32
    %200 = vector.broadcast %cst_60 : f32 to vector<16x64xf32>
    %201 = arith.addf %200, %199 : vector<16x64xf32>
    %202 = arith.mulf %196, %201 : vector<16x64xf32>
    %c0_61 = arith.constant 0 : index
    %c0_62 = arith.constant 0 : index
    %c0_63 = arith.constant 0 : index
    %203 = vector.load %arg8[%c0_61, %c0_62, %c0_63] : memref<2x64x32xf32, #tpu.memory_space<vmem>>, vector<1x64x32xf32>
    %204 = vector.shape_cast %203 : vector<1x64x32xf32> to vector<64x32xf32>
    %cst_64 = arith.constant dense<0.000000e+00> : vector<16x32xf32>
    %205 = tpu.matmul %202, %204, %cst_64 {dimension_numbers = #tpu.dot_dimension_numbers<[1], [0], [0], [1], [0, 0, 1, 1], [], []>} : vector<16x64xf32>, vector<64x32xf32>, vector<16x32xf32> -> vector<16x32xf32>
    %206 = vector.broadcast %81 : vector<1x32xf32> to vector<16x32xf32>
    %207 = arith.addf %205, %206 : vector<16x32xf32>
    %208 = arith.addf %207, %189 : vector<16x32xf32>
    %cst_65 = arith.constant dense<0.000000e+00> : vector<16xf32>
    %209 = vector.multi_reduction <add>, %208, %cst_65 [1] : vector<16x32xf32> to vector<16xf32>
    %210 = vector.shape_cast %209 : vector<16xf32> to vector<16x1xf32>
    %cst_66 = arith.constant 3.200000e+01 : f32
    %211 = vector.broadcast %cst_66 : f32 to vector<16x1xf32>
    %212 = arith.divf %210, %211 : vector<16x1xf32>
    %213 = vector.broadcast %212 : vector<16x1xf32> to vector<16x32xf32>
    %214 = arith.subf %208, %213 : vector<16x32xf32>
    %215 = arith.mulf %214, %214 : vector<16x32xf32>
    %cst_67 = arith.constant dense<0.000000e+00> : vector<16xf32>
    %216 = vector.multi_reduction <add>, %215, %cst_67 [1] : vector<16x32xf32> to vector<16xf32>
    %217 = vector.shape_cast %216 : vector<16xf32> to vector<16x1xf32>
    %cst_68 = arith.constant 3.200000e+01 : f32
    %218 = vector.broadcast %cst_68 : f32 to vector<16x1xf32>
    %219 = arith.divf %217, %218 : vector<16x1xf32>
    %220 = vector.broadcast %212 : vector<16x1xf32> to vector<16x32xf32>
    %221 = arith.subf %208, %220 : vector<16x32xf32>
    %cst_69 = arith.constant 9.99999996E-13 : f32
    %222 = vector.broadcast %cst_69 : f32 to vector<16x1xf32>
    %223 = arith.addf %219, %222 : vector<16x1xf32>
    %224 = math.rsqrt %223 : vector<16x1xf32>
    %225 = vector.broadcast %224 : vector<16x1xf32> to vector<16x32xf32>
    %226 = arith.mulf %221, %225 : vector<16x32xf32>
    %227 = vector.broadcast %82 : vector<1x32xf32> to vector<16x32xf32>
    %228 = arith.mulf %226, %227 : vector<16x32xf32>
    %229 = vector.broadcast %83 : vector<1x32xf32> to vector<16x32xf32>
    %230 = arith.addf %228, %229 : vector<16x32xf32>
    %c1_70 = arith.constant 1 : index
    %c0_71 = arith.constant 0 : index
    %c0_72 = arith.constant 0 : index
    %231 = vector.load %arg9[%c1_70, %c0_71, %c0_72] : memref<2x8x96xf32, #tpu.memory_space<vmem>>, vector<1x8x96xf32>
    %232 = vector.shape_cast %231 : vector<1x8x96xf32> to vector<8x96xf32>
    %233 = vector.extract_strided_slice %232 {offsets = [0, 0], sizes = [1, 96], strides = [1, 1]} : vector<8x96xf32> to vector<1x96xf32>
    %234 = vector.extract_strided_slice %232 {offsets = [1, 0], sizes = [1, 32], strides = [1, 1]} : vector<8x96xf32> to vector<1x32xf32>
    %235 = vector.extract_strided_slice %232 {offsets = [2, 0], sizes = [1, 32], strides = [1, 1]} : vector<8x96xf32> to vector<1x32xf32>
    %236 = vector.extract_strided_slice %232 {offsets = [3, 0], sizes = [1, 32], strides = [1, 1]} : vector<8x96xf32> to vector<1x32xf32>
    %237 = vector.extract_strided_slice %232 {offsets = [4, 0], sizes = [1, 64], strides = [1, 1]} : vector<8x96xf32> to vector<1x64xf32>
    %238 = vector.extract_strided_slice %232 {offsets = [5, 0], sizes = [1, 32], strides = [1, 1]} : vector<8x96xf32> to vector<1x32xf32>
    %239 = vector.extract_strided_slice %232 {offsets = [6, 0], sizes = [1, 32], strides = [1, 1]} : vector<8x96xf32> to vector<1x32xf32>
    %240 = vector.extract_strided_slice %232 {offsets = [7, 0], sizes = [1, 32], strides = [1, 1]} : vector<8x96xf32> to vector<1x32xf32>
    %c1_73 = arith.constant 1 : index
    %c0_74 = arith.constant 0 : index
    %c0_75 = arith.constant 0 : index
    %241 = vector.load %arg5[%c1_73, %c0_74, %c0_75] : memref<2x32x96xf32, #tpu.memory_space<vmem>>, vector<1x32x96xf32>
    %242 = vector.shape_cast %241 : vector<1x32x96xf32> to vector<32x96xf32>
    %cst_76 = arith.constant dense<0.000000e+00> : vector<16x96xf32>
    %243 = tpu.matmul %230, %242, %cst_76 {dimension_numbers = #tpu.dot_dimension_numbers<[1], [0], [0], [1], [0, 0, 1, 1], [], []>} : vector<16x32xf32>, vector<32x96xf32>, vector<16x96xf32> -> vector<16x96xf32>
    %244 = vector.broadcast %233 : vector<1x96xf32> to vector<16x96xf32>
    %245 = arith.addf %243, %244 : vector<16x96xf32>
    %246 = vector.extract_strided_slice %245 {offsets = [0, 0], sizes = [16, 8], strides = [1, 1]} : vector<16x96xf32> to vector<16x8xf32>
    %247 = vector.shape_cast %246 : vector<16x8xf32> to vector<2x8x8xf32>
    %248 = vector.extract_strided_slice %245 {offsets = [0, 32], sizes = [16, 8], strides = [1, 1]} : vector<16x96xf32> to vector<16x8xf32>
    %249 = vector.shape_cast %248 : vector<16x8xf32> to vector<2x8x8xf32>
    %250 = vector.extract_strided_slice %245 {offsets = [0, 64], sizes = [16, 8], strides = [1, 1]} : vector<16x96xf32> to vector<16x8xf32>
    %251 = vector.shape_cast %250 : vector<16x8xf32> to vector<2x8x8xf32>
    "tpu.trace_start"() <{level = 10 : i32, message = "bqd,bkd->bqk"}> : () -> ()
    %cst_77 = arith.constant dense<0.000000e+00> : vector<2x8x8xf32>
    %252 = tpu.matmul %247, %249, %cst_77 {dimension_numbers = #tpu.dot_dimension_numbers<[2], [2], [1], [1], [0, 0, 0, 1, 1, 1], [0], [0]>} : vector<2x8x8xf32>, vector<2x8x8xf32>, vector<2x8x8xf32> -> vector<2x8x8xf32>
    "tpu.trace_stop"() : () -> ()
    %cst_78 = arith.constant dense<0xFF800000> : vector<2x8xf32>
    %253 = vector.multi_reduction <maximumf>, %252, %cst_78 [2] : vector<2x8x8xf32> to vector<2x8xf32>
    %254 = vector.shape_cast %253 : vector<2x8xf32> to vector<2x8x1xf32>
    %255 = vector.broadcast %254 : vector<2x8x1xf32> to vector<2x8x8xf32>
    %256 = arith.subf %252, %255 : vector<2x8x8xf32>
    %257 = math.exp %256 : vector<2x8x8xf32>
    %cst_79 = arith.constant dense<0.000000e+00> : vector<2x8xf32>
    %258 = vector.multi_reduction <add>, %257, %cst_79 [2] : vector<2x8x8xf32> to vector<2x8xf32>
    %259 = vector.shape_cast %258 : vector<2x8xf32> to vector<2x8x1xf32>
    %260 = vector.broadcast %259 : vector<2x8x1xf32> to vector<2x8x8xf32>
    %261 = arith.divf %257, %260 : vector<2x8x8xf32>
    "tpu.trace_start"() <{level = 10 : i32, message = "bqk,bkd->bqd"}> : () -> ()
    %cst_80 = arith.constant dense<0.000000e+00> : vector<2x8x8xf32>
    %262 = tpu.matmul %261, %251, %cst_80 {dimension_numbers = #tpu.dot_dimension_numbers<[2], [1], [1], [2], [0, 0, 0, 1, 1, 2], [0], [0]>} : vector<2x8x8xf32>, vector<2x8x8xf32>, vector<2x8x8xf32> -> vector<2x8x8xf32>
    "tpu.trace_stop"() : () -> ()
    %263 = vector.shape_cast %262 : vector<2x8x8xf32> to vector<16x8xf32>
    %264 = vector.extract_strided_slice %245 {offsets = [0, 8], sizes = [16, 8], strides = [1, 1]} : vector<16x96xf32> to vector<16x8xf32>
    %265 = vector.shape_cast %264 : vector<16x8xf32> to vector<2x8x8xf32>
    %266 = vector.extract_strided_slice %245 {offsets = [0, 40], sizes = [16, 8], strides = [1, 1]} : vector<16x96xf32> to vector<16x8xf32>
    %267 = vector.shape_cast %266 : vector<16x8xf32> to vector<2x8x8xf32>
    %268 = vector.extract_strided_slice %245 {offsets = [0, 72], sizes = [16, 8], strides = [1, 1]} : vector<16x96xf32> to vector<16x8xf32>
    %269 = vector.shape_cast %268 : vector<16x8xf32> to vector<2x8x8xf32>
    "tpu.trace_start"() <{level = 10 : i32, message = "bqd,bkd->bqk"}> : () -> ()
    %cst_81 = arith.constant dense<0.000000e+00> : vector<2x8x8xf32>
    %270 = tpu.matmul %265, %267, %cst_81 {dimension_numbers = #tpu.dot_dimension_numbers<[2], [2], [1], [1], [0, 0, 0, 1, 1, 1], [0], [0]>} : vector<2x8x8xf32>, vector<2x8x8xf32>, vector<2x8x8xf32> -> vector<2x8x8xf32>
    "tpu.trace_stop"() : () -> ()
    %cst_82 = arith.constant dense<0xFF800000> : vector<2x8xf32>
    %271 = vector.multi_reduction <maximumf>, %270, %cst_82 [2] : vector<2x8x8xf32> to vector<2x8xf32>
    %272 = vector.shape_cast %271 : vector<2x8xf32> to vector<2x8x1xf32>
    %273 = vector.broadcast %272 : vector<2x8x1xf32> to vector<2x8x8xf32>
    %274 = arith.subf %270, %273 : vector<2x8x8xf32>
    %275 = math.exp %274 : vector<2x8x8xf32>
    %cst_83 = arith.constant dense<0.000000e+00> : vector<2x8xf32>
    %276 = vector.multi_reduction <add>, %275, %cst_83 [2] : vector<2x8x8xf32> to vector<2x8xf32>
    %277 = vector.shape_cast %276 : vector<2x8xf32> to vector<2x8x1xf32>
    %278 = vector.broadcast %277 : vector<2x8x1xf32> to vector<2x8x8xf32>
    %279 = arith.divf %275, %278 : vector<2x8x8xf32>
    "tpu.trace_start"() <{level = 10 : i32, message = "bqk,bkd->bqd"}> : () -> ()
    %cst_84 = arith.constant dense<0.000000e+00> : vector<2x8x8xf32>
    %280 = tpu.matmul %279, %269, %cst_84 {dimension_numbers = #tpu.dot_dimension_numbers<[2], [1], [1], [2], [0, 0, 0, 1, 1, 2], [0], [0]>} : vector<2x8x8xf32>, vector<2x8x8xf32>, vector<2x8x8xf32> -> vector<2x8x8xf32>
    "tpu.trace_stop"() : () -> ()
    %281 = vector.shape_cast %280 : vector<2x8x8xf32> to vector<16x8xf32>
    %282 = vector.extract_strided_slice %245 {offsets = [0, 16], sizes = [16, 8], strides = [1, 1]} : vector<16x96xf32> to vector<16x8xf32>
    %283 = vector.shape_cast %282 : vector<16x8xf32> to vector<2x8x8xf32>
    %284 = vector.extract_strided_slice %245 {offsets = [0, 48], sizes = [16, 8], strides = [1, 1]} : vector<16x96xf32> to vector<16x8xf32>
    %285 = vector.shape_cast %284 : vector<16x8xf32> to vector<2x8x8xf32>
    %286 = vector.extract_strided_slice %245 {offsets = [0, 80], sizes = [16, 8], strides = [1, 1]} : vector<16x96xf32> to vector<16x8xf32>
    %287 = vector.shape_cast %286 : vector<16x8xf32> to vector<2x8x8xf32>
    "tpu.trace_start"() <{level = 10 : i32, message = "bqd,bkd->bqk"}> : () -> ()
    %cst_85 = arith.constant dense<0.000000e+00> : vector<2x8x8xf32>
    %288 = tpu.matmul %283, %285, %cst_85 {dimension_numbers = #tpu.dot_dimension_numbers<[2], [2], [1], [1], [0, 0, 0, 1, 1, 1], [0], [0]>} : vector<2x8x8xf32>, vector<2x8x8xf32>, vector<2x8x8xf32> -> vector<2x8x8xf32>
    "tpu.trace_stop"() : () -> ()
    %cst_86 = arith.constant dense<0xFF800000> : vector<2x8xf32>
    %289 = vector.multi_reduction <maximumf>, %288, %cst_86 [2] : vector<2x8x8xf32> to vector<2x8xf32>
    %290 = vector.shape_cast %289 : vector<2x8xf32> to vector<2x8x1xf32>
    %291 = vector.broadcast %290 : vector<2x8x1xf32> to vector<2x8x8xf32>
    %292 = arith.subf %288, %291 : vector<2x8x8xf32>
    %293 = math.exp %292 : vector<2x8x8xf32>
    %cst_87 = arith.constant dense<0.000000e+00> : vector<2x8xf32>
    %294 = vector.multi_reduction <add>, %293, %cst_87 [2] : vector<2x8x8xf32> to vector<2x8xf32>
    %295 = vector.shape_cast %294 : vector<2x8xf32> to vector<2x8x1xf32>
    %296 = vector.broadcast %295 : vector<2x8x1xf32> to vector<2x8x8xf32>
    %297 = arith.divf %293, %296 : vector<2x8x8xf32>
    "tpu.trace_start"() <{level = 10 : i32, message = "bqk,bkd->bqd"}> : () -> ()
    %cst_88 = arith.constant dense<0.000000e+00> : vector<2x8x8xf32>
    %298 = tpu.matmul %297, %287, %cst_88 {dimension_numbers = #tpu.dot_dimension_numbers<[2], [1], [1], [2], [0, 0, 0, 1, 1, 2], [0], [0]>} : vector<2x8x8xf32>, vector<2x8x8xf32>, vector<2x8x8xf32> -> vector<2x8x8xf32>
    "tpu.trace_stop"() : () -> ()
    %299 = vector.shape_cast %298 : vector<2x8x8xf32> to vector<16x8xf32>
    %300 = vector.extract_strided_slice %245 {offsets = [0, 24], sizes = [16, 8], strides = [1, 1]} : vector<16x96xf32> to vector<16x8xf32>
    %301 = vector.shape_cast %300 : vector<16x8xf32> to vector<2x8x8xf32>
    %302 = vector.extract_strided_slice %245 {offsets = [0, 56], sizes = [16, 8], strides = [1, 1]} : vector<16x96xf32> to vector<16x8xf32>
    %303 = vector.shape_cast %302 : vector<16x8xf32> to vector<2x8x8xf32>
    %304 = vector.extract_strided_slice %245 {offsets = [0, 88], sizes = [16, 8], strides = [1, 1]} : vector<16x96xf32> to vector<16x8xf32>
    %305 = vector.shape_cast %304 : vector<16x8xf32> to vector<2x8x8xf32>
    "tpu.trace_start"() <{level = 10 : i32, message = "bqd,bkd->bqk"}> : () -> ()
    %cst_89 = arith.constant dense<0.000000e+00> : vector<2x8x8xf32>
    %306 = tpu.matmul %301, %303, %cst_89 {dimension_numbers = #tpu.dot_dimension_numbers<[2], [2], [1], [1], [0, 0, 0, 1, 1, 1], [0], [0]>} : vector<2x8x8xf32>, vector<2x8x8xf32>, vector<2x8x8xf32> -> vector<2x8x8xf32>
    "tpu.trace_stop"() : () -> ()
    %cst_90 = arith.constant dense<0xFF800000> : vector<2x8xf32>
    %307 = vector.multi_reduction <maximumf>, %306, %cst_90 [2] : vector<2x8x8xf32> to vector<2x8xf32>
    %308 = vector.shape_cast %307 : vector<2x8xf32> to vector<2x8x1xf32>
    %309 = vector.broadcast %308 : vector<2x8x1xf32> to vector<2x8x8xf32>
    %310 = arith.subf %306, %309 : vector<2x8x8xf32>
    %311 = math.exp %310 : vector<2x8x8xf32>
    %cst_91 = arith.constant dense<0.000000e+00> : vector<2x8xf32>
    %312 = vector.multi_reduction <add>, %311, %cst_91 [2] : vector<2x8x8xf32> to vector<2x8xf32>
    %313 = vector.shape_cast %312 : vector<2x8xf32> to vector<2x8x1xf32>
    %314 = vector.broadcast %313 : vector<2x8x1xf32> to vector<2x8x8xf32>
    %315 = arith.divf %311, %314 : vector<2x8x8xf32>
    "tpu.trace_start"() <{level = 10 : i32, message = "bqk,bkd->bqd"}> : () -> ()
    %cst_92 = arith.constant dense<0.000000e+00> : vector<2x8x8xf32>
    %316 = tpu.matmul %315, %305, %cst_92 {dimension_numbers = #tpu.dot_dimension_numbers<[2], [1], [1], [2], [0, 0, 0, 1, 1, 2], [0], [0]>} : vector<2x8x8xf32>, vector<2x8x8xf32>, vector<2x8x8xf32> -> vector<2x8x8xf32>
    "tpu.trace_stop"() : () -> ()
    %317 = vector.shape_cast %316 : vector<2x8x8xf32> to vector<16x8xf32>
    %318 = tpu.concatenate %263, %281, %299, %317 in 1 : vector<16x8xf32>, vector<16x8xf32>, vector<16x8xf32>, vector<16x8xf32> -> vector<16x32xf32>
    %c1_93 = arith.constant 1 : index
    %c0_94 = arith.constant 0 : index
    %c0_95 = arith.constant 0 : index
    %319 = vector.load %arg6[%c1_93, %c0_94, %c0_95] : memref<2x32x32xf32, #tpu.memory_space<vmem>>, vector<1x32x32xf32>
    %320 = vector.shape_cast %319 : vector<1x32x32xf32> to vector<32x32xf32>
    %cst_96 = arith.constant dense<0.000000e+00> : vector<16x32xf32>
    %321 = tpu.matmul %318, %320, %cst_96 {dimension_numbers = #tpu.dot_dimension_numbers<[1], [0], [0], [1], [0, 0, 1, 1], [], []>} : vector<16x32xf32>, vector<32x32xf32>, vector<16x32xf32> -> vector<16x32xf32>
    %322 = vector.broadcast %234 : vector<1x32xf32> to vector<16x32xf32>
    %323 = arith.addf %321, %322 : vector<16x32xf32>
    %324 = arith.addf %323, %230 : vector<16x32xf32>
    %cst_97 = arith.constant dense<0.000000e+00> : vector<16xf32>
    %325 = vector.multi_reduction <add>, %324, %cst_97 [1] : vector<16x32xf32> to vector<16xf32>
    %326 = vector.shape_cast %325 : vector<16xf32> to vector<16x1xf32>
    %cst_98 = arith.constant 3.200000e+01 : f32
    %327 = vector.broadcast %cst_98 : f32 to vector<16x1xf32>
    %328 = arith.divf %326, %327 : vector<16x1xf32>
    %329 = vector.broadcast %328 : vector<16x1xf32> to vector<16x32xf32>
    %330 = arith.subf %324, %329 : vector<16x32xf32>
    %331 = arith.mulf %330, %330 : vector<16x32xf32>
    %cst_99 = arith.constant dense<0.000000e+00> : vector<16xf32>
    %332 = vector.multi_reduction <add>, %331, %cst_99 [1] : vector<16x32xf32> to vector<16xf32>
    %333 = vector.shape_cast %332 : vector<16xf32> to vector<16x1xf32>
    %cst_100 = arith.constant 3.200000e+01 : f32
    %334 = vector.broadcast %cst_100 : f32 to vector<16x1xf32>
    %335 = arith.divf %333, %334 : vector<16x1xf32>
    %336 = vector.broadcast %328 : vector<16x1xf32> to vector<16x32xf32>
    %337 = arith.subf %324, %336 : vector<16x32xf32>
    %cst_101 = arith.constant 9.99999996E-13 : f32
    %338 = vector.broadcast %cst_101 : f32 to vector<16x1xf32>
    %339 = arith.addf %335, %338 : vector<16x1xf32>
    %340 = math.rsqrt %339 : vector<16x1xf32>
    %341 = vector.broadcast %340 : vector<16x1xf32> to vector<16x32xf32>
    %342 = arith.mulf %337, %341 : vector<16x32xf32>
    %343 = vector.broadcast %235 : vector<1x32xf32> to vector<16x32xf32>
    %344 = arith.mulf %342, %343 : vector<16x32xf32>
    %345 = vector.broadcast %236 : vector<1x32xf32> to vector<16x32xf32>
    %346 = arith.addf %344, %345 : vector<16x32xf32>
    %c1_102 = arith.constant 1 : index
    %c0_103 = arith.constant 0 : index
    %c0_104 = arith.constant 0 : index
    %347 = vector.load %arg7[%c1_102, %c0_103, %c0_104] : memref<2x32x64xf32, #tpu.memory_space<vmem>>, vector<1x32x64xf32>
    %348 = vector.shape_cast %347 : vector<1x32x64xf32> to vector<32x64xf32>
    %cst_105 = arith.constant dense<0.000000e+00> : vector<16x64xf32>
    %349 = tpu.matmul %346, %348, %cst_105 {dimension_numbers = #tpu.dot_dimension_numbers<[1], [0], [0], [1], [0, 0, 1, 1], [], []>} : vector<16x32xf32>, vector<32x64xf32>, vector<16x64xf32> -> vector<16x64xf32>
    %350 = vector.broadcast %237 : vector<1x64xf32> to vector<16x64xf32>
    %351 = arith.addf %349, %350 : vector<16x64xf32>
    %cst_106 = arith.constant 5.000000e-01 : f32
    %352 = vector.broadcast %cst_106 : f32 to vector<16x64xf32>
    %353 = arith.mulf %352, %351 : vector<16x64xf32>
    %cst_107 = arith.constant 0.707106769 : f32
    %354 = vector.broadcast %cst_107 : f32 to vector<16x64xf32>
    %355 = arith.mulf %351, %354 : vector<16x64xf32>
    %356 = math.erf %355 : vector<16x64xf32>
    %cst_108 = arith.constant 1.000000e+00 : f32
    %357 = vector.broadcast %cst_108 : f32 to vector<16x64xf32>
    %358 = arith.addf %357, %356 : vector<16x64xf32>
    %359 = arith.mulf %353, %358 : vector<16x64xf32>
    %c1_109 = arith.constant 1 : index
    %c0_110 = arith.constant 0 : index
    %c0_111 = arith.constant 0 : index
    %360 = vector.load %arg8[%c1_109, %c0_110, %c0_111] : memref<2x64x32xf32, #tpu.memory_space<vmem>>, vector<1x64x32xf32>
    %361 = vector.shape_cast %360 : vector<1x64x32xf32> to vector<64x32xf32>
    %cst_112 = arith.constant dense<0.000000e+00> : vector<16x32xf32>
    %362 = tpu.matmul %359, %361, %cst_112 {dimension_numbers = #tpu.dot_dimension_numbers<[1], [0], [0], [1], [0, 0, 1, 1], [], []>} : vector<16x64xf32>, vector<64x32xf32>, vector<16x32xf32> -> vector<16x32xf32>
    %363 = vector.broadcast %238 : vector<1x32xf32> to vector<16x32xf32>
    %364 = arith.addf %362, %363 : vector<16x32xf32>
    %365 = arith.addf %364, %346 : vector<16x32xf32>
    %cst_113 = arith.constant dense<0.000000e+00> : vector<16xf32>
    %366 = vector.multi_reduction <add>, %365, %cst_113 [1] : vector<16x32xf32> to vector<16xf32>
    %367 = vector.shape_cast %366 : vector<16xf32> to vector<16x1xf32>
    %cst_114 = arith.constant 3.200000e+01 : f32
    %368 = vector.broadcast %cst_114 : f32 to vector<16x1xf32>
    %369 = arith.divf %367, %368 : vector<16x1xf32>
    %370 = vector.broadcast %369 : vector<16x1xf32> to vector<16x32xf32>
    %371 = arith.subf %365, %370 : vector<16x32xf32>
    %372 = arith.mulf %371, %371 : vector<16x32xf32>
    %cst_115 = arith.constant dense<0.000000e+00> : vector<16xf32>
    %373 = vector.multi_reduction <add>, %372, %cst_115 [1] : vector<16x32xf32> to vector<16xf32>
    %374 = vector.shape_cast %373 : vector<16xf32> to vector<16x1xf32>
    %cst_116 = arith.constant 3.200000e+01 : f32
    %375 = vector.broadcast %cst_116 : f32 to vector<16x1xf32>
    %376 = arith.divf %374, %375 : vector<16x1xf32>
    %377 = vector.broadcast %369 : vector<16x1xf32> to vector<16x32xf32>
    %378 = arith.subf %365, %377 : vector<16x32xf32>
    %cst_117 = arith.constant 9.99999996E-13 : f32
    %379 = vector.broadcast %cst_117 : f32 to vector<16x1xf32>
    %380 = arith.addf %376, %379 : vector<16x1xf32>
    %381 = math.rsqrt %380 : vector<16x1xf32>
    %382 = vector.broadcast %381 : vector<16x1xf32> to vector<16x32xf32>
    %383 = arith.mulf %378, %382 : vector<16x32xf32>
    %384 = vector.broadcast %239 : vector<1x32xf32> to vector<16x32xf32>
    %385 = arith.mulf %383, %384 : vector<16x32xf32>
    %386 = vector.broadcast %240 : vector<1x32xf32> to vector<16x32xf32>
    %387 = arith.addf %385, %386 : vector<16x32xf32>
    %c0_118 = arith.constant 0 : index
    %c0_119 = arith.constant 0 : index
    %388 = vector.load %arg10[%c0_118, %c0_119] : memref<16x32xf32, #tpu.memory_space<vmem>>, vector<16x32xf32>
    tpu.vector_store %arg10[%c0_118, %c0_119], %387 {strides = array<i32>} : memref<16x32xf32, #tpu.memory_space<vmem>>, vector<16x32xf32>,
    return
  }
}

</mosaic_0001>

<llo_original>
// kernel: transformer_encoder_forward.1
$region0: #{transformer_encoder_forward.1}
  #allocation0 [shape = 'u32[]', space=smem, size = 0x4, offset = 0x4, fixed_abs, tag = 'smem constant byte address 0x4 - core index']
  #allocation1 [shape = 'u32[144,128]{1,0:T(1,128)}', space=vmem, size = 0x12000, scoped, tag = 'internal scratch']
  %s0 = inlined_call_operand.vmem [shape: f32[50,16], index: 0, kind: input, shape index: {}]
  %s1 = inlined_call_operand.vmem [shape: s32[16,3], index: 1, kind: input, shape index: {}]
  %s2 = inlined_call_operand.vmem [shape: f32[16,32], index: 2, kind: input, shape index: {}]
  %s3 = inlined_call_operand.vmem [shape: f32[16,32], index: 3, kind: input, shape index: {}]
  %s4 = inlined_call_operand.vmem [shape: f32[3,32], index: 4, kind: input, shape index: {}]
  %s5 = inlined_call_operand.vmem [shape: f32[2,32,96], index: 5, kind: input, shape index: {}]
  %s6 = inlined_call_operand.vmem [shape: f32[2,32,32], index: 6, kind: input, shape index: {}]
  %s7 = inlined_call_operand.vmem [shape: f32[2,32,64], index: 7, kind: input, shape index: {}]
  %s8 = inlined_call_operand.vmem [shape: f32[2,64,32], index: 8, kind: input, shape index: {}]
  %s9 = inlined_call_operand.vmem [shape: f32[2,8,96], index: 9, kind: input, shape index: {}]
  %s10 = inlined_call_operand.hbm [shape: f32[16,32], index: 10, kind: output, shape index: {0}]
  %s11 = inlined_call_operand.hbm [shape: f32[16,32], index: 11, kind: output, shape index: {1}]
  %12 = xla_tuple %s10, %s11
  %s13 = sld [smem:[#allocation0]]
  $region58: #{transformer_encoder_forward.1} parent=0
    _
  %s15 = ssub.s32 1, %s13
  %s16 = scalar_select 0, %s15, %s13
  $region1: #{transformer_encoder_forward.1} parent=0
    #allocation2 [shape = 'u8[8192]{0}', space=vmem, size = 0x2000, scoped, tag = 'output window, operand 0, single buffered']
    #allocation3 [shape = 's32[1]{0}', space=sflag, size = 0x4, scoped, tag = 'scoped memory for transformer_encoder_forward.1']
    #allocation4 [shape = 'u8[8192]{0}', space=vmem, size = 0x2000, scoped, tag = 'output window, operand 1, single buffered']
    #allocation5 [shape = 's32[1]{0}', space=sflag, size = 0x4, scoped, tag = 'scoped memory for transformer_encoder_forward.1']
    %17 = vsyncpa [#allocation3], 0
    %18 = vsyncpa [#allocation5], 0
    // Predicated region
    $region2: #{transformer_encoder_forward.1} parent=1 // pred_check
      _
    $region3: #{transformer_encoder_forward.1} parent=1 // pred_check_branch
      %20 = sbr.rel (0) target = $region5
    $region4: #{transformer_encoder_forward.1} parent=1 // pred_region
      _
    $region5: #{transformer_encoder_forward.1} parent=1 // pred_fallthru
      _
    // Predicated region
    $region6: #{transformer_encoder_forward.1} parent=1 // pred_check
      _
    $region7: #{transformer_encoder_forward.1} parent=1 // pred_check_branch
      %22 = sbr.rel (0) target = $region9
    $region8: #{transformer_encoder_forward.1} parent=1 // pred_region
      _
    $region9: #{transformer_encoder_forward.1} parent=1 // pred_fallthru
      _
    // Predicated region
    $region10: #{transformer_encoder_forward.1} parent=1 // pred_check
      _
    $region11: #{transformer_encoder_forward.1} parent=1 // pred_check_branch
      %24 = sbr.rel (0) target = $region13
    $region12: #{transformer_encoder_forward.1} parent=1 // pred_region
      _
    $region13: #{transformer_encoder_forward.1} parent=1 // pred_fallthru
      _
    // Predicated region
    $region14: #{transformer_encoder_forward.1} parent=1 // pred_check
      _
    $region15: #{transformer_encoder_forward.1} parent=1 // pred_check_branch
      %26 = sbr.rel (0) target = $region17
    $region16: #{transformer_encoder_forward.1} parent=1 // pred_region
      _
    $region17: #{transformer_encoder_forward.1} parent=1 // pred_fallthru
      _
    // Predicated region
    $region18: #{transformer_encoder_forward.1} parent=1 // pred_check
      _
    $region19: #{transformer_encoder_forward.1} parent=1 // pred_check_branch
      %28 = sbr.rel (0) target = $region21
    $region20: #{transformer_encoder_forward.1} parent=1 // pred_region
      _
    $region21: #{transformer_encoder_forward.1} parent=1 // pred_fallthru
      _
    // Predicated region
    $region22: #{transformer_encoder_forward.1} parent=1 // pred_check
      _
    $region23: #{transformer_encoder_forward.1} parent=1 // pred_check_branch
      %30 = sbr.rel (0) target = $region25
    $region24: #{transformer_encoder_forward.1} parent=1 // pred_region
      _
    $region25: #{transformer_encoder_forward.1} parent=1 // pred_fallthru
      _
    // Predicated region
    $region26: #{transformer_encoder_forward.1} parent=1 // pred_check
      _
    $region27: #{transformer_encoder_forward.1} parent=1 // pred_check_branch
      %32 = sbr.rel (0) target = $region29
    $region28: #{transformer_encoder_forward.1} parent=1 // pred_region
      _
    $region29: #{transformer_encoder_forward.1} parent=1 // pred_fallthru
      _
    // Predicated region
    $region30: #{transformer_encoder_forward.1} parent=1 // pred_check
      _
    $region31: #{transformer_encoder_forward.1} parent=1 // pred_check_branch
      %34 = sbr.rel (0) target = $region33
    $region32: #{transformer_encoder_forward.1} parent=1 // pred_region
      _
    $region33: #{transformer_encoder_forward.1} parent=1 // pred_fallthru
      _
    // Predicated region
    $region34: #{transformer_encoder_forward.1} parent=1 // pred_check
      _
    $region35: #{transformer_encoder_forward.1} parent=1 // pred_check_branch
      %36 = sbr.rel (0) target = $region37
    $region36: #{transformer_encoder_forward.1} parent=1 // pred_region
      _
    $region37: #{transformer_encoder_forward.1} parent=1 // pred_fallthru
      _
    // Predicated region
    $region38: #{transformer_encoder_forward.1} parent=1 // pred_check
      _
    $region39: #{transformer_encoder_forward.1} parent=1 // pred_check_branch
      %38 = sbr.rel (0) target = $region41
    $region40: #{transformer_encoder_forward.1} parent=1 // pred_region
      _
    $region41: #{transformer_encoder_forward.1} parent=1 // pred_fallthru
      _
    %v39 = vld [vmem:[%s1] sm:$0xff]
    %v40 = vld [vmem:[%s1 + $0x8] sm:$0xff]
    %vm41 = vcmp.ne.s32.totalorder %v39, 0
    %vm42 = vcmp.ne.s32.totalorder %v40, 0
    %v43 = vsel %vm41, 1, 0
    %v44 = vsel %vm42, 1, 0
    %v45 = vcvt.s32.f32 %v43
    %v46 = vcvt.s32.f32 %v44
    %vm47 = vcmask 23552
    %v48 = vsel %vm47, %v45, 0.0
    %49 = vadd.xlane.f32.xlu0 %v48
    %v50 = vpop.xlane.xlu0 %49
    %v51 = vsel %vm47, %v46, 0.0
    %52 = vadd.xlane.f32.xlu0 %v51
    %v53 = vpop.xlane.xlu0 %52
    %v54 = vadd.f32 %v50, 1e-09
    %v55 = vadd.f32 %v53, 1e-09
    %v56 = vrcp.pop %v54
    %v57 = vmul.f32 %v45, %v56
    %v58 = vrcp.pop %v55
    %v59 = vmul.f32 %v46, %v58
    %v60 = vlaneseq
    %v61 = vand.u32 %v60, 127
    %62 = vset.pattern.permute.xlu0 0
    %63 = vperm.xlu0 %62, %v39
    %v64 = vpop.permute.xlu0 %63
    %65 = vset.pattern.permute.xlu0 0
    %66 = vperm.xlu0 %65, %v40
    %v67 = vpop.permute.xlu0 %66
    %vm68 = vcmp.eq.s32.totalorder %v61, %v64
    %vm69 = vcmp.eq.s32.totalorder %v61, %v67
    %v70 = vsel %vm68, 1, 0
    %v71 = vsel %vm69, 1, 0
    %v72 = vcvt.s32.f32 %v70
    %v73 = vcvt.s32.f32 %v71
    %75 = vset.pattern.permute.xlu0 0
    %76 = vperm.xlu0 %75, %v57
    %v77 = vpop.permute.xlu0 %76
    %80 = vset.pattern.permute.xlu0 0
    %81 = vperm.xlu0 %80, %v59
    %v82 = vpop.permute.xlu0 %81
    %v84 = vmul.f32 %v72, %v77
    %v85 = vmul.f32 %v73, %v82
    %v86 = vadd.f32 %v84, 0.0
    %v87 = vadd.f32 %v85, 0.0
    %88 = vset.pattern.permute.xlu0 1
    %89 = vperm.xlu0 %88, %v39
    %v90 = vpop.permute.xlu0 %89
    %91 = vset.pattern.permute.xlu0 1
    %92 = vperm.xlu0 %91, %v40
    %v93 = vpop.permute.xlu0 %92
    %vm94 = vcmp.eq.s32.totalorder %v61, %v90
    %vm95 = vcmp.eq.s32.totalorder %v61, %v93
    %v96 = vsel %vm94, 1, 0
    %v97 = vsel %vm95, 1, 0
    %v98 = vcvt.s32.f32 %v96
    %v99 = vcvt.s32.f32 %v97
    %100 = vset.pattern.permute.xlu0 1
    %101 = vperm.xlu0 %100, %v57
    %v102 = vpop.permute.xlu0 %101
    %104 = vset.pattern.permute.xlu0 1
    %105 = vperm.xlu0 %104, %v59
    %v106 = vpop.permute.xlu0 %105
    %v108 = vmul.f32 %v98, %v102
    %v109 = vmul.f32 %v99, %v106
    %v110 = vadd.f32 %v86, %v108
    %v111 = vadd.f32 %v87, %v109
    %112 = vset.pattern.permute.xlu0 2
    %113 = vperm.xlu0 %112, %v39
    %v114 = vpop.permute.xlu0 %113
    %115 = vset.pattern.permute.xlu0 2
    %116 = vperm.xlu0 %115, %v40
    %v117 = vpop.permute.xlu0 %116
    %vm118 = vcmp.eq.s32.totalorder %v61, %v114
    %vm119 = vcmp.eq.s32.totalorder %v61, %v117
    %v120 = vsel %vm118, 1, 0
    %v121 = vsel %vm119, 1, 0
    %v122 = vcvt.s32.f32 %v120
    %v123 = vcvt.s32.f32 %v121
    %124 = vset.pattern.permute.xlu0 2
    %125 = vperm.xlu0 %124, %v57
    %v126 = vpop.permute.xlu0 %125
    %128 = vset.pattern.permute.xlu0 2
    %129 = vperm.xlu0 %128, %v59
    %v130 = vpop.permute.xlu0 %129
    %v132 = vmul.f32 %v122, %v126
    %v133 = vmul.f32 %v123, %v130
    %v134 = vadd.f32 %v110, %v132
    %v135 = vadd.f32 %v111, %v133
    %v136 = vld [vmem:[%s0] sm:$0xff]
    %v137 = vld [vmem:[%s0 + $0x8] sm:$0xff]
    %v138 = vld [vmem:[%s0 + $0x10] sm:$0xff]
    %v139 = vld [vmem:[%s0 + $0x18] sm:$0xff]
    %v140 = vld [vmem:[%s0 + $0x20] sm:$0xff]
    %v141 = vld [vmem:[%s0 + $0x28] sm:$0xff]
    %v142 = vld [vmem:[%s0 + $0x30] sm:$0x3]
    %vm143 = vcmask 408576
    %v145 = vsel %vm143, %v134, 0
    %v148 = vsel %vm143, %v135, 0
    %vm150 = vcmask 1041408
    %v152 = vsel %vm150, %v142, 0
    %154 = vmatprep.subr.mxu0 0.0
    %155 = vmatpush1.msra.mxu0 %v136
    %156 = vmatprep.subr.mxu0 0.0
    %157 = vmatpush1.msra.mxu0 %v137
    %158 = vmatprep.subr.mxu0 0.0
    %159 = vmatpush1.msra.mxu0 %v138
    %160 = vmatprep.subr.mxu0 0.0
    %161 = vmatpush1.msra.mxu0 %v139
    %162 = vmatprep.subr.mxu0 0.0
    %163 = vmatpush1.msra.mxu0 %v140
    %164 = vmatprep.subr.mxu0 0.0
    %165 = vmatpush1.msra.mxu0 %v141
    %166 = vmatprep.subr.mxu0 0.0
    %167 = vmatpush1.msra.mxu0 %v152
    %168 = vmatprep.subr.mxu0 0.0
    %169 = vmatpush1.msra.mxu0 0.0
    %170 = vmatprep.subr.mxu0 0.0
    %171 = vmatpush1.msra.mxu0 0.0
    %172 = vmatprep.subr.mxu0 0.0
    %173 = vmatpush1.msra.mxu0 0.0
    %174 = vmatprep.subr.mxu0 0.0
    %175 = vmatpush1.msra.mxu0 0.0
    %176 = vmatprep.subr.mxu0 0.0
    %177 = vmatpush1.msra.mxu0 0.0
    %178 = vmatprep.subr.mxu0 0.0
    %179 = vmatpush1.msra.mxu0 0.0
    %180 = vmatprep.subr.mxu0 0.0
    %181 = vmatpush1.msra.mxu0 0.0
    %182 = vmatprep.subr.mxu0 0.0
    %183 = vmatpush1.msra.mxu0 0.0
    %184 = vmatprep.subr.mxu0 0.0
    %185 = vmatpush1.msra.mxu0 0.0
    %186 = vmatprep.subr.mxu0 0.0
    %187 = vmatpush1.msra.mxu0 0.0
    %188 = vmatprep.subr.mxu0 0.0
    %189 = vmatpush1.msra.mxu0 0.0
    %190 = vmatprep.subr.mxu0 0.0
    %191 = vmatpush1.msra.mxu0 0.0
    %192 = vmatprep.subr.mxu0 0.0
    %193 = vmatpush1.msra.mxu0 0.0
    %194 = vmatprep.subr.mxu0 0.0
    %195 = vmatpush1.msra.mxu0 0.0
    %196 = vmatprep.subr.mxu0 0.0
    %197 = vmatpush1.msra.mxu0 0.0
    %198 = vmatprep.subr.mxu0 0.0
    %199 = vmatpush1.msra.mxu0 0.0
    %200 = vmatprep.subr.mxu0 0.0
    %201 = vmatpush1.msra.mxu0 0.0
    %202 = vmatprep.subr.mxu0 0.0
    %203 = vmatpush1.msra.mxu0 0.0
    %204 = vmatprep.subr.mxu0 0.0
    %205 = vmatpush1.msra.mxu0 0.0
    %206 = vmatprep.subr.mxu0 0.0
    %207 = vmatpush1.msra.mxu0 0.0
    %208 = vmatprep.subr.mxu0 0.0
    %209 = vmatpush1.msra.mxu0 0.0
    %210 = vmatprep.subr.mxu0 0.0
    %211 = vmatpush1.msra.mxu0 0.0
    %212 = vmatprep.subr.mxu0 0.0
    %213 = vmatpush1.msra.mxu0 0.0
    %214 = vmatprep.subr.mxu0 0.0
    %215 = vmatpush1.msra.mxu0 0.0
    %216 = vmatprep.subr.mxu0 0.0
    %217 = vmatpush1.msra.mxu0 0.0
    %218 = vmatprep.mubr.f32.mxu0 0.0
    %219 = vmatmul.mubr.f32.gmra.mrb[0].mxu0 %v145
    %v220 = vpop.f32.mrb[0].mxu0
    %v221 = vadd.f32 0.0, %v220
    %v222 = vpop.f32.mrb[0].mxu0
    %223 = vmatprep.mubr.f32.mxu0 0.0
    %224 = vmatmul.mubr.f32.gmra.mrb[0].mxu0 %v148
    %v225 = vpop.f32.mrb[0].mxu0
    %v226 = vadd.f32 0.0, %v225
    %v227 = vpop.f32.mrb[0].mxu0
    %228 = vdwg.mxu0
    %v229 = vld [vmem:[%s4] sm:$0x1]
    %v230 = vld [vmem:[%s4 + $0x1] sm:$0x1]
    %v231 = vld [vmem:[%s4 + $0x2] sm:$0x1]
    %v232 = vld [vmem:[%s2] sm:$0xff]
    %v233 = vld [vmem:[%s2 + $0x8] sm:$0xff]
    %v234 = vlaneseq
    %v235 = vshrl.u32 %v234, 7
    %v236 = vsub.s32 0, %v235
    %v237 = vrot.slane %v229, %v236
    %vm238 = vcmask 130048
    %v240 = vsel %vm238, %v221, 0
    %v243 = vsel %vm238, %v226, 0
    %245 = vmatprep.subr.mxu0 0.0
    %246 = vmatpush1.msra.mxu0 %v232
    %247 = vmatprep.subr.mxu0 0.0
    %248 = vmatpush1.msra.mxu0 %v233
    %249 = vmatprep.subr.mxu0 0.0
    %250 = vmatpush1.msra.mxu0 0.0
    %251 = vmatprep.subr.mxu0 0.0
    %252 = vmatpush1.msra.mxu0 0.0
    %253 = vmatprep.subr.mxu0 0.0
    %254 = vmatpush1.msra.mxu0 0.0
    %255 = vmatprep.subr.mxu0 0.0
    %256 = vmatpush1.msra.mxu0 0.0
    %257 = vmatprep.subr.mxu0 0.0
    %258 = vmatpush1.msra.mxu0 0.0
    %259 = vmatprep.subr.mxu0 0.0
    %260 = vmatpush1.msra.mxu0 0.0
    %261 = vmatprep.subr.mxu0 0.0
    %262 = vmatpush1.msra.mxu0 0.0
    %263 = vmatprep.subr.mxu0 0.0
    %264 = vmatpush1.msra.mxu0 0.0
    %265 = vmatprep.subr.mxu0 0.0
    %266 = vmatpush1.msra.mxu0 0.0
    %267 = vmatprep.subr.mxu0 0.0
    %268 = vmatpush1.msra.mxu0 0.0
    %269 = vmatprep.subr.mxu0 0.0
    %270 = vmatpush1.msra.mxu0 0.0
    %271 = vmatprep.subr.mxu0 0.0
    %272 = vmatpush1.msra.mxu0 0.0
    %273 = vmatprep.subr.mxu0 0.0
    %274 = vmatpush1.msra.mxu0 0.0
    %275 = vmatprep.subr.mxu0 0.0
    %276 = vmatpush1.msra.mxu0 0.0
    %277 = vmatprep.subr.mxu0 0.0
    %278 = vmatpush1.msra.mxu0 0.0
    %279 = vmatprep.subr.mxu0 0.0
    %280 = vmatpush1.msra.mxu0 0.0
    %281 = vmatprep.subr.mxu0 0.0
    %282 = vmatpush1.msra.mxu0 0.0
    %283 = vmatprep.subr.mxu0 0.0
    %284 = vmatpush1.msra.mxu0 0.0
    %285 = vmatprep.subr.mxu0 0.0
    %286 = vmatpush1.msra.mxu0 0.0
    %287 = vmatprep.subr.mxu0 0.0
    %288 = vmatpush1.msra.mxu0 0.0
    %289 = vmatprep.subr.mxu0 0.0
    %290 = vmatpush1.msra.mxu0 0.0
    %291 = vmatprep.subr.mxu0 0.0
    %292 = vmatpush1.msra.mxu0 0.0
    %293 = vmatprep.subr.mxu0 0.0
    %294 = vmatpush1.msra.mxu0 0.0
    %295 = vmatprep.subr.mxu0 0.0
    %296 = vmatpush1.msra.mxu0 0.0
    %297 = vmatprep.subr.mxu0 0.0
    %298 = vmatpush1.msra.mxu0 0.0
    %299 = vmatprep.subr.mxu0 0.0
    %300 = vmatpush1.msra.mxu0 0.0
    %301 = vmatprep.subr.mxu0 0.0
    %302 = vmatpush1.msra.mxu0 0.0
    %303 = vmatprep.subr.mxu0 0.0
    %304 = vmatpush1.msra.mxu0 0.0
    %305 = vmatprep.subr.mxu0 0.0
    %306 = vmatpush1.msra.mxu0 0.0
    %307 = vmatprep.subr.mxu0 0.0
    %308 = vmatpush1.msra.mxu0 0.0
    %309 = vmatprep.mubr.f32.mxu0 0.0
    %310 = vmatmul.mubr.f32.gmra.mrb[0].mxu0 %v240
    %v311 = vpop.f32.mrb[0].mxu0
    %v312 = vadd.f32 %v237, %v311
    %v313 = vpop.f32.mrb[0].mxu0
    %314 = vmatprep.mubr.f32.mxu0 0.0
    %315 = vmatmul.mubr.f32.gmra.mrb[0].mxu0 %v243
    %v316 = vpop.f32.mrb[0].mxu0
    %v317 = vadd.f32 %v237, %v316
    %v318 = vpop.f32.mrb[0].mxu0
    %319 = vdwg.mxu0
    %vm320 = vcmask 261120
    %321 = vst.msk [vmem:[#allocation4] sm:$0xff] %vm320, %v312
    %322 = vst.msk [vmem:[#allocation4 + $0x8] sm:$0xff] %vm320, %v317
    %v323 = vld [vmem:[%s3] sm:$0xff]
    %v324 = vld [vmem:[%s3 + $0x8] sm:$0xff]
    %v325 = vadd.f32 %v312, %v323
    %v326 = vadd.f32 %v317, %v324
    %v327 = vsel %vm320, %v325, 0.0
    %328 = vadd.xlane.f32.xlu0 %v327
    %v329 = vpop.xlane.xlu0 %328
    %v330 = vsel %vm320, %v326, 0.0
    %331 = vadd.xlane.f32.xlu0 %v330
    %v332 = vpop.xlane.xlu0 %331
    %v333 = vrcp.pop 32.0
    %v334 = vmul.f32 %v329, %v333
    %v335 = vmul.f32 %v332, %v333
    %v336 = vsub.f32 %v325, %v334
    %v337 = vsub.f32 %v326, %v335
    %v338 = vmul.f32 %v336, %v336
    %v339 = vmul.f32 %v337, %v337
    %v340 = vsel %vm320, %v338, 0.0
    %341 = vadd.xlane.f32.xlu0 %v340
    %v342 = vpop.xlane.xlu0 %341
    %v343 = vsel %vm320, %v339, 0.0
    %344 = vadd.xlane.f32.xlu0 %v343
    %v345 = vpop.xlane.xlu0 %344
    %v346 = vmul.f32 %v342, %v333
    %v347 = vmul.f32 %v345, %v333
    %v348 = vadd.f32 %v346, 1e-12
    %v349 = vadd.f32 %v347, 1e-12
    %v350 = vrsqrt.pop %v348
    %v351 = vrsqrt.pop %v349
    %v352 = vmul.f32 %v336, %v350
    %v353 = vmul.f32 %v337, %v351
    %v354 = vlaneseq
    %v355 = vshrl.u32 %v354, 7
    %v356 = vsub.s32 0, %v355
    %v357 = vrot.slane %v230, %v356
    %v358 = vmul.f32 %v352, %v357
    %v359 = vmul.f32 %v353, %v357
    %v360 = vlaneseq
    %v361 = vshrl.u32 %v360, 7
    %v362 = vsub.s32 0, %v361
    %v363 = vrot.slane %v231, %v362
    %v364 = vadd.f32 %v358, %v363
    %v365 = vadd.f32 %v359, %v363
    %v366 = vld [vmem:[%s9] sm:$0xff]
    %v367 = vld [vmem:[%s5] sm:$0xff]
    %v368 = vld [vmem:[%s5 + $0x8] sm:$0xff]
    %v369 = vld [vmem:[%s5 + $0x10] sm:$0xff]
    %v370 = vld [vmem:[%s5 + $0x18] sm:$0xff]
    %v371 = vlaneseq
    %v372 = vshrl.u32 %v371, 7
    %v373 = vsub.s32 0, %v372
    %v374 = vrot.slane %v366, %v373
    %v376 = vsel %vm320, %v364, 0
    %v379 = vsel %vm320, %v365, 0
    %381 = vmatprep.subr.mxu0 0.0
    %382 = vmatpush1.msra.mxu0 %v367
    %383 = vmatprep.subr.mxu0 0.0
    %384 = vmatpush1.msra.mxu0 %v368
    %385 = vmatprep.subr.mxu0 0.0
    %386 = vmatpush1.msra.mxu0 %v369
    %387 = vmatprep.subr.mxu0 0.0
    %388 = vmatpush1.msra.mxu0 %v370
    %389 = vmatprep.subr.mxu0 0.0
    %390 = vmatpush1.msra.mxu0 0.0
    %391 = vmatprep.subr.mxu0 0.0
    %392 = vmatpush1.msra.mxu0 0.0
    %393 = vmatprep.subr.mxu0 0.0
    %394 = vmatpush1.msra.mxu0 0.0
    %395 = vmatprep.subr.mxu0 0.0
    %396 = vmatpush1.msra.mxu0 0.0
    %397 = vmatprep.subr.mxu0 0.0
    %398 = vmatpush1.msra.mxu0 0.0
    %399 = vmatprep.subr.mxu0 0.0
    %400 = vmatpush1.msra.mxu0 0.0
    %401 = vmatprep.subr.mxu0 0.0
    %402 = vmatpush1.msra.mxu0 0.0
    %403 = vmatprep.subr.mxu0 0.0
    %404 = vmatpush1.msra.mxu0 0.0
    %405 = vmatprep.subr.mxu0 0.0
    %406 = vmatpush1.msra.mxu0 0.0
    %407 = vmatprep.subr.mxu0 0.0
    %408 = vmatpush1.msra.mxu0 0.0
    %409 = vmatprep.subr.mxu0 0.0
    %410 = vmatpush1.msra.mxu0 0.0
    %411 = vmatprep.subr.mxu0 0.0
    %412 = vmatpush1.msra.mxu0 0.0
    %413 = vmatprep.subr.mxu0 0.0
    %414 = vmatpush1.msra.mxu0 0.0
    %415 = vmatprep.subr.mxu0 0.0
    %416 = vmatpush1.msra.mxu0 0.0
    %417 = vmatprep.subr.mxu0 0.0
    %418 = vmatpush1.msra.mxu0 0.0
    %419 = vmatprep.subr.mxu0 0.0
    %420 = vmatpush1.msra.mxu0 0.0
    %421 = vmatprep.subr.mxu0 0.0
    %422 = vmatpush1.msra.mxu0 0.0
    %423 = vmatprep.subr.mxu0 0.0
    %424 = vmatpush1.msra.mxu0 0.0
    %425 = vmatprep.subr.mxu0 0.0
    %426 = vmatpush1.msra.mxu0 0.0
    %427 = vmatprep.subr.mxu0 0.0
    %428 = vmatpush1.msra.mxu0 0.0
    %429 = vmatprep.subr.mxu0 0.0
    %430 = vmatpush1.msra.mxu0 0.0
    %431 = vmatprep.subr.mxu0 0.0
    %432 = vmatpush1.msra.mxu0 0.0
    %433 = vmatprep.subr.mxu0 0.0
    %434 = vmatpush1.msra.mxu0 0.0
    %435 = vmatprep.subr.mxu0 0.0
    %436 = vmatpush1.msra.mxu0 0.0
    %437 = vmatprep.subr.mxu0 0.0
    %438 = vmatpush1.msra.mxu0 0.0
    %439 = vmatprep.subr.mxu0 0.0
    %440 = vmatpush1.msra.mxu0 0.0
    %441 = vmatprep.subr.mxu0 0.0
    %442 = vmatpush1.msra.mxu0 0.0
    %443 = vmatprep.subr.mxu0 0.0
    %444 = vmatpush1.msra.mxu0 0.0
    %445 = vmatprep.mubr.f32.mxu0 0.0
    %446 = vmatmul.mubr.f32.gmra.mrb[0].mxu0 %v376
    %v447 = vpop.f32.mrb[0].mxu0
    %v448 = vadd.f32 %v374, %v447
    %v449 = vpop.f32.mrb[0].mxu0
    %450 = vmatprep.mubr.f32.mxu0 0.0
    %451 = vmatmul.mubr.f32.gmra.mrb[0].mxu0 %v379
    %v452 = vpop.f32.mrb[0].mxu0
    %v453 = vadd.f32 %v374, %v452
    %v454 = vpop.f32.mrb[0].mxu0
    %455 = vdwg.mxu0
    %457 = vrot.lane.b32.xlu0 %v448, 96
    %v458 = vpop.permute.xlu0 %457
    %vm459 = vcmask 64512
    %v460 = vsel %vm459, %v448, 0
    %v462 = vsel %vm459, %v458, 0
    %464 = vmatprep.subr.mxu0 0.0
    %465 = vmatpush1.xpose.msra.mxu0 %v462
    %466 = vmatprep.subr.mxu0 0.0
    %467 = vmatpush1.xpose.msra.mxu0 0.0
    %468 = vmatprep.subr.mxu0 0.0
    %469 = vmatpush1.xpose.msra.mxu0 0.0
    %470 = vmatprep.subr.mxu0 0.0
    %471 = vmatpush1.xpose.msra.mxu0 0.0
    %472 = vmatprep.subr.mxu0 0.0
    %473 = vmatpush1.xpose.msra.mxu0 0.0
    %474 = vmatprep.subr.mxu0 0.0
    %475 = vmatpush1.xpose.msra.mxu0 0.0
    %476 = vmatprep.subr.mxu0 0.0
    %477 = vmatpush1.xpose.msra.mxu0 0.0
    %478 = vmatprep.subr.mxu0 0.0
    %479 = vmatpush1.xpose.msra.mxu0 0.0
    %480 = vmatprep.subr.mxu0 0.0
    %481 = vmatpush1.xpose.msra.mxu0 0.0
    %482 = vmatprep.subr.mxu0 0.0
    %483 = vmatpush1.xpose.msra.mxu0 0.0
    %484 = vmatprep.subr.mxu0 0.0
    %485 = vmatpush1.xpose.msra.mxu0 0.0
    %486 = vmatprep.subr.mxu0 0.0
    %487 = vmatpush1.xpose.msra.mxu0 0.0
    %488 = vmatprep.subr.mxu0 0.0
    %489 = vmatpush1.xpose.msra.mxu0 0.0
    %490 = vmatprep.subr.mxu0 0.0
    %491 = vmatpush1.xpose.msra.mxu0 0.0
    %492 = vmatprep.subr.mxu0 0.0
    %493 = vmatpush1.xpose.msra.mxu0 0.0
    %494 = vmatprep.subr.mxu0 0.0
    %495 = vmatpush1.xpose.msra.mxu0 0.0
    %496 = vmatprep.subr.mxu0 0.0
    %497 = vmatpush1.xpose.msra.mxu0 0.0
    %498 = vmatprep.subr.mxu0 0.0
    %499 = vmatpush1.xpose.msra.mxu0 0.0
    %500 = vmatprep.subr.mxu0 0.0
    %501 = vmatpush1.xpose.msra.mxu0 0.0
    %502 = vmatprep.subr.mxu0 0.0
    %503 = vmatpush1.xpose.msra.mxu0 0.0
    %504 = vmatprep.subr.mxu0 0.0
    %505 = vmatpush1.xpose.msra.mxu0 0.0
    %506 = vmatprep.subr.mxu0 0.0
    %507 = vmatpush1.xpose.msra.mxu0 0.0
    %508 = vmatprep.subr.mxu0 0.0
    %509 = vmatpush1.xpose.msra.mxu0 0.0
    %510 = vmatprep.subr.mxu0 0.0
    %511 = vmatpush1.xpose.msra.mxu0 0.0
    %512 = vmatprep.subr.mxu0 0.0
    %513 = vmatpush1.xpose.msra.mxu0 0.0
    %514 = vmatprep.subr.mxu0 0.0
    %515 = vmatpush1.xpose.msra.mxu0 0.0
    %516 = vmatprep.subr.mxu0 0.0
    %517 = vmatpush1.xpose.msra.mxu0 0.0
    %518 = vmatprep.subr.mxu0 0.0
    %519 = vmatpush1.xpose.msra.mxu0 0.0
    %520 = vmatprep.subr.mxu0 0.0
    %521 = vmatpush1.xpose.msra.mxu0 0.0
    %522 = vmatprep.subr.mxu0 0.0
    %523 = vmatpush1.xpose.msra.mxu0 0.0
    %524 = vmatprep.subr.mxu0 0.0
    %525 = vmatpush1.xpose.msra.mxu0 0.0
    %526 = vmatprep.subr.mxu0 0.0
    %527 = vmatpush1.xpose.msra.mxu0 0.0
    %528 = vmatprep.mubr.f32.mxu0 0.0
    %529 = vmatmul.mubr.f32.gmra.mrb[0].mxu0 %v460
    %v530 = vpop.f32.mrb[0].mxu0
    %v531 = vadd.f32 0.0, %v530
    %v532 = vpop.f32.mrb[0].mxu0
    %533 = vdwg.mxu0
    %535 = vrot.lane.b32.xlu0 %v453, 96
    %v536 = vpop.permute.xlu0 %535
    %v537 = vsel %vm459, %v453, 0
    %v539 = vsel %vm459, %v536, 0
    %541 = vmatprep.subr.mxu0 0.0
    %542 = vmatpush1.xpose.msra.mxu0 %v539
    %543 = vmatprep.subr.mxu0 0.0
    %544 = vmatpush1.xpose.msra.mxu0 0.0
    %545 = vmatprep.subr.mxu0 0.0
    %546 = vmatpush1.xpose.msra.mxu0 0.0
    %547 = vmatprep.subr.mxu0 0.0
    %548 = vmatpush1.xpose.msra.mxu0 0.0
    %549 = vmatprep.subr.mxu0 0.0
    %550 = vmatpush1.xpose.msra.mxu0 0.0
    %551 = vmatprep.subr.mxu0 0.0
    %552 = vmatpush1.xpose.msra.mxu0 0.0
    %553 = vmatprep.subr.mxu0 0.0
    %554 = vmatpush1.xpose.msra.mxu0 0.0
    %555 = vmatprep.subr.mxu0 0.0
    %556 = vmatpush1.xpose.msra.mxu0 0.0
    %557 = vmatprep.subr.mxu0 0.0
    %558 = vmatpush1.xpose.msra.mxu0 0.0
    %559 = vmatprep.subr.mxu0 0.0
    %560 = vmatpush1.xpose.msra.mxu0 0.0
    %561 = vmatprep.subr.mxu0 0.0
    %562 = vmatpush1.xpose.msra.mxu0 0.0
    %563 = vmatprep.subr.mxu0 0.0
    %564 = vmatpush1.xpose.msra.mxu0 0.0
    %565 = vmatprep.subr.mxu0 0.0
    %566 = vmatpush1.xpose.msra.mxu0 0.0
    %567 = vmatprep.subr.mxu0 0.0
    %568 = vmatpush1.xpose.msra.mxu0 0.0
    %569 = vmatprep.subr.mxu0 0.0
    %570 = vmatpush1.xpose.msra.mxu0 0.0
    %571 = vmatprep.subr.mxu0 0.0
    %572 = vmatpush1.xpose.msra.mxu0 0.0
    %573 = vmatprep.subr.mxu0 0.0
    %574 = vmatpush1.xpose.msra.mxu0 0.0
    %575 = vmatprep.subr.mxu0 0.0
    %576 = vmatpush1.xpose.msra.mxu0 0.0
    %577 = vmatprep.subr.mxu0 0.0
    %578 = vmatpush1.xpose.msra.mxu0 0.0
    %579 = vmatprep.subr.mxu0 0.0
    %580 = vmatpush1.xpose.msra.mxu0 0.0
    %581 = vmatprep.subr.mxu0 0.0
    %582 = vmatpush1.xpose.msra.mxu0 0.0
    %583 = vmatprep.subr.mxu0 0.0
    %584 = vmatpush1.xpose.msra.mxu0 0.0
    %585 = vmatprep.subr.mxu0 0.0
    %586 = vmatpush1.xpose.msra.mxu0 0.0
    %587 = vmatprep.subr.mxu0 0.0
    %588 = vmatpush1.xpose.msra.mxu0 0.0
    %589 = vmatprep.subr.mxu0 0.0
    %590 = vmatpush1.xpose.msra.mxu0 0.0
    %591 = vmatprep.subr.mxu0 0.0
    %592 = vmatpush1.xpose.msra.mxu0 0.0
    %593 = vmatprep.subr.mxu0 0.0
    %594 = vmatpush1.xpose.msra.mxu0 0.0
    %595 = vmatprep.subr.mxu0 0.0
    %596 = vmatpush1.xpose.msra.mxu0 0.0
    %597 = vmatprep.subr.mxu0 0.0
    %598 = vmatpush1.xpose.msra.mxu0 0.0
    %599 = vmatprep.subr.mxu0 0.0
    %600 = vmatpush1.xpose.msra.mxu0 0.0
    %601 = vmatprep.subr.mxu0 0.0
    %602 = vmatpush1.xpose.msra.mxu0 0.0
    %603 = vmatprep.subr.mxu0 0.0
    %604 = vmatpush1.xpose.msra.mxu0 0.0
    %605 = vmatprep.mubr.f32.mxu0 0.0
    %606 = vmatmul.mubr.f32.gmra.mrb[0].mxu0 %v537
    %v607 = vpop.f32.mrb[0].mxu0
    %v608 = vadd.f32 0.0, %v607
    %v609 = vpop.f32.mrb[0].mxu0
    %610 = vdwg.mxu0
    %v611 = vsel %vm459, %v531, -inf
    %612 = vmax.xlane.f32.xlu0 %v611
    %v613 = vpop.xlane.xlu0 %612
    %v614 = vsel %vm459, %v608, -inf
    %615 = vmax.xlane.f32.xlu0 %v614
    %v616 = vpop.xlane.xlu0 %615
    %v617 = vsub.f32 %v531, %v613
    %v618 = vsub.f32 %v608, %v616
    %v619 = vmul.f32 %v617, 1.442695
    %v620 = vpow.pop %v619
    %v621 = vmul.f32 %v618, 1.442695
    %v622 = vpow.pop %v621
    %v623 = vsel %vm459, %v620, 0.0
    %624 = vadd.xlane.f32.xlu0 %v623
    %v625 = vpop.xlane.xlu0 %624
    %v626 = vsel %vm459, %v622, 0.0
    %627 = vadd.xlane.f32.xlu0 %v626
    %v628 = vpop.xlane.xlu0 %627
    %v629 = vrcp.pop %v625
    %v630 = vmul.f32 %v620, %v629
    %v631 = vrcp.pop %v628
    %v632 = vmul.f32 %v622, %v631
    %633 = vrot.lane.b32.xlu0 %v448, 64
    %v634 = vpop.permute.xlu0 %633
    %v637 = vsel %vm459, %v630, 0
    %639 = vmatprep.subr.mxu0 0.0
    %640 = vmatpush1.msra.mxu0 %v634
    %641 = vmatprep.subr.mxu0 0.0
    %642 = vmatpush1.msra.mxu0 0.0
    %643 = vmatprep.subr.mxu0 0.0
    %644 = vmatpush1.msra.mxu0 0.0
    %645 = vmatprep.subr.mxu0 0.0
    %646 = vmatpush1.msra.mxu0 0.0
    %647 = vmatprep.subr.mxu0 0.0
    %648 = vmatpush1.msra.mxu0 0.0
    %649 = vmatprep.subr.mxu0 0.0
    %650 = vmatpush1.msra.mxu0 0.0
    %651 = vmatprep.subr.mxu0 0.0
    %652 = vmatpush1.msra.mxu0 0.0
    %653 = vmatprep.subr.mxu0 0.0
    %654 = vmatpush1.msra.mxu0 0.0
    %655 = vmatprep.subr.mxu0 0.0
    %656 = vmatpush1.msra.mxu0 0.0
    %657 = vmatprep.subr.mxu0 0.0
    %658 = vmatpush1.msra.mxu0 0.0
    %659 = vmatprep.subr.mxu0 0.0
    %660 = vmatpush1.msra.mxu0 0.0
    %661 = vmatprep.subr.mxu0 0.0
    %662 = vmatpush1.msra.mxu0 0.0
    %663 = vmatprep.subr.mxu0 0.0
    %664 = vmatpush1.msra.mxu0 0.0
    %665 = vmatprep.subr.mxu0 0.0
    %666 = vmatpush1.msra.mxu0 0.0
    %667 = vmatprep.subr.mxu0 0.0
    %668 = vmatpush1.msra.mxu0 0.0
    %669 = vmatprep.subr.mxu0 0.0
    %670 = vmatpush1.msra.mxu0 0.0
    %671 = vmatprep.subr.mxu0 0.0
    %672 = vmatpush1.msra.mxu0 0.0
    %673 = vmatprep.subr.mxu0 0.0
    %674 = vmatpush1.msra.mxu0 0.0
    %675 = vmatprep.subr.mxu0 0.0
    %676 = vmatpush1.msra.mxu0 0.0
    %677 = vmatprep.subr.mxu0 0.0
    %678 = vmatpush1.msra.mxu0 0.0
    %679 = vmatprep.subr.mxu0 0.0
    %680 = vmatpush1.msra.mxu0 0.0
    %681 = vmatprep.subr.mxu0 0.0
    %682 = vmatpush1.msra.mxu0 0.0
    %683 = vmatprep.subr.mxu0 0.0
    %684 = vmatpush1.msra.mxu0 0.0
    %685 = vmatprep.subr.mxu0 0.0
    %686 = vmatpush1.msra.mxu0 0.0
    %687 = vmatprep.subr.mxu0 0.0
    %688 = vmatpush1.msra.mxu0 0.0
    %689 = vmatprep.subr.mxu0 0.0
    %690 = vmatpush1.msra.mxu0 0.0
    %691 = vmatprep.subr.mxu0 0.0
    %692 = vmatpush1.msra.mxu0 0.0
    %693 = vmatprep.subr.mxu0 0.0
    %694 = vmatpush1.msra.mxu0 0.0
    %695 = vmatprep.subr.mxu0 0.0
    %696 = vmatpush1.msra.mxu0 0.0
    %697 = vmatprep.subr.mxu0 0.0
    %698 = vmatpush1.msra.mxu0 0.0
    %699 = vmatprep.subr.mxu0 0.0
    %700 = vmatpush1.msra.mxu0 0.0
    %701 = vmatprep.subr.mxu0 0.0
    %702 = vmatpush1.msra.mxu0 0.0
    %703 = vmatprep.mubr.f32.mxu0 0.0
    %704 = vmatmul.mubr.f32.gmra.mrb[0].mxu0 %v637
    %v705 = vpop.f32.mrb[0].mxu0
    %v706 = vadd.f32 0.0, %v705
    %v707 = vpop.f32.mrb[0].mxu0
    %708 = vdwg.mxu0
    %709 = vrot.lane.b32.xlu0 %v453, 64
    %v710 = vpop.permute.xlu0 %709
    %v713 = vsel %vm459, %v632, 0
    %715 = vmatprep.subr.mxu0 0.0
    %716 = vmatpush1.msra.mxu0 %v710
    %717 = vmatprep.subr.mxu0 0.0
    %718 = vmatpush1.msra.mxu0 0.0
    %719 = vmatprep.subr.mxu0 0.0
    %720 = vmatpush1.msra.mxu0 0.0
    %721 = vmatprep.subr.mxu0 0.0
    %722 = vmatpush1.msra.mxu0 0.0
    %723 = vmatprep.subr.mxu0 0.0
    %724 = vmatpush1.msra.mxu0 0.0
    %725 = vmatprep.subr.mxu0 0.0
    %726 = vmatpush1.msra.mxu0 0.0
    %727 = vmatprep.subr.mxu0 0.0
    %728 = vmatpush1.msra.mxu0 0.0
    %729 = vmatprep.subr.mxu0 0.0
    %730 = vmatpush1.msra.mxu0 0.0
    %731 = vmatprep.subr.mxu0 0.0
    %732 = vmatpush1.msra.mxu0 0.0
    %733 = vmatprep.subr.mxu0 0.0
    %734 = vmatpush1.msra.mxu0 0.0
    %735 = vmatprep.subr.mxu0 0.0
    %736 = vmatpush1.msra.mxu0 0.0
    %737 = vmatprep.subr.mxu0 0.0
    %738 = vmatpush1.msra.mxu0 0.0
    %739 = vmatprep.subr.mxu0 0.0
    %740 = vmatpush1.msra.mxu0 0.0
    %741 = vmatprep.subr.mxu0 0.0
    %742 = vmatpush1.msra.mxu0 0.0
    %743 = vmatprep.subr.mxu0 0.0
    %744 = vmatpush1.msra.mxu0 0.0
    %745 = vmatprep.subr.mxu0 0.0
    %746 = vmatpush1.msra.mxu0 0.0
    %747 = vmatprep.subr.mxu0 0.0
    %748 = vmatpush1.msra.mxu0 0.0
    %749 = vmatprep.subr.mxu0 0.0
    %750 = vmatpush1.msra.mxu0 0.0
    %751 = vmatprep.subr.mxu0 0.0
    %752 = vmatpush1.msra.mxu0 0.0
    %753 = vmatprep.subr.mxu0 0.0
    %754 = vmatpush1.msra.mxu0 0.0
    %755 = vmatprep.subr.mxu0 0.0
    %756 = vmatpush1.msra.mxu0 0.0
    %757 = vmatprep.subr.mxu0 0.0
    %758 = vmatpush1.msra.mxu0 0.0
    %759 = vmatprep.subr.mxu0 0.0
    %760 = vmatpush1.msra.mxu0 0.0
    %761 = vmatprep.subr.mxu0 0.0
    %762 = vmatpush1.msra.mxu0 0.0
    %763 = vmatprep.subr.mxu0 0.0
    %764 = vmatpush1.msra.mxu0 0.0
    %765 = vmatprep.subr.mxu0 0.0
    %766 = vmatpush1.msra.mxu0 0.0
    %767 = vmatprep.subr.mxu0 0.0
    %768 = vmatpush1.msra.mxu0 0.0
    %769 = vmatprep.subr.mxu0 0.0
    %770 = vmatpush1.msra.mxu0 0.0
    %771 = vmatprep.subr.mxu0 0.0
    %772 = vmatpush1.msra.mxu0 0.0
    %773 = vmatprep.subr.mxu0 0.0
    %774 = vmatpush1.msra.mxu0 0.0
    %775 = vmatprep.subr.mxu0 0.0
    %776 = vmatpush1.msra.mxu0 0.0
    %777 = vmatprep.subr.mxu0 0.0
    %778 = vmatpush1.msra.mxu0 0.0
    %779 = vmatprep.mubr.f32.mxu0 0.0
    %780 = vmatmul.mubr.f32.gmra.mrb[0].mxu0 %v713
    %v781 = vpop.f32.mrb[0].mxu0
    %v782 = vadd.f32 0.0, %v781
    %v783 = vpop.f32.mrb[0].mxu0
    %784 = vdwg.mxu0
    %785 = vrot.lane.b32.xlu0 %v448, 120
    %v786 = vpop.permute.xlu0 %785
    %787 = vrot.lane.b32.xlu0 %v448, 88
    %v788 = vpop.permute.xlu0 %787
    %v789 = vsel %vm459, %v786, 0
    %v791 = vsel %vm459, %v788, 0
    %793 = vmatprep.subr.mxu0 0.0
    %794 = vmatpush1.xpose.msra.mxu0 %v791
    %795 = vmatprep.subr.mxu0 0.0
    %796 = vmatpush1.xpose.msra.mxu0 0.0
    %797 = vmatprep.subr.mxu0 0.0
    %798 = vmatpush1.xpose.msra.mxu0 0.0
    %799 = vmatprep.subr.mxu0 0.0
    %800 = vmatpush1.xpose.msra.mxu0 0.0
    %801 = vmatprep.subr.mxu0 0.0
    %802 = vmatpush1.xpose.msra.mxu0 0.0
    %803 = vmatprep.subr.mxu0 0.0
    %804 = vmatpush1.xpose.msra.mxu0 0.0
    %805 = vmatprep.subr.mxu0 0.0
    %806 = vmatpush1.xpose.msra.mxu0 0.0
    %807 = vmatprep.subr.mxu0 0.0
    %808 = vmatpush1.xpose.msra.mxu0 0.0
    %809 = vmatprep.subr.mxu0 0.0
    %810 = vmatpush1.xpose.msra.mxu0 0.0
    %811 = vmatprep.subr.mxu0 0.0
    %812 = vmatpush1.xpose.msra.mxu0 0.0
    %813 = vmatprep.subr.mxu0 0.0
    %814 = vmatpush1.xpose.msra.mxu0 0.0
    %815 = vmatprep.subr.mxu0 0.0
    %816 = vmatpush1.xpose.msra.mxu0 0.0
    %817 = vmatprep.subr.mxu0 0.0
    %818 = vmatpush1.xpose.msra.mxu0 0.0
    %819 = vmatprep.subr.mxu0 0.0
    %820 = vmatpush1.xpose.msra.mxu0 0.0
    %821 = vmatprep.subr.mxu0 0.0
    %822 = vmatpush1.xpose.msra.mxu0 0.0
    %823 = vmatprep.subr.mxu0 0.0
    %824 = vmatpush1.xpose.msra.mxu0 0.0
    %825 = vmatprep.subr.mxu0 0.0
    %826 = vmatpush1.xpose.msra.mxu0 0.0
    %827 = vmatprep.subr.mxu0 0.0
    %828 = vmatpush1.xpose.msra.mxu0 0.0
    %829 = vmatprep.subr.mxu0 0.0
    %830 = vmatpush1.xpose.msra.mxu0 0.0
    %831 = vmatprep.subr.mxu0 0.0
    %832 = vmatpush1.xpose.msra.mxu0 0.0
    %833 = vmatprep.subr.mxu0 0.0
    %834 = vmatpush1.xpose.msra.mxu0 0.0
    %835 = vmatprep.subr.mxu0 0.0
    %836 = vmatpush1.xpose.msra.mxu0 0.0
    %837 = vmatprep.subr.mxu0 0.0
    %838 = vmatpush1.xpose.msra.mxu0 0.0
    %839 = vmatprep.subr.mxu0 0.0
    %840 = vmatpush1.xpose.msra.mxu0 0.0
    %841 = vmatprep.subr.mxu0 0.0
    %842 = vmatpush1.xpose.msra.mxu0 0.0
    %843 = vmatprep.subr.mxu0 0.0
    %844 = vmatpush1.xpose.msra.mxu0 0.0
    %845 = vmatprep.subr.mxu0 0.0
    %846 = vmatpush1.xpose.msra.mxu0 0.0
    %847 = vmatprep.subr.mxu0 0.0
    %848 = vmatpush1.xpose.msra.mxu0 0.0
    %849 = vmatprep.subr.mxu0 0.0
    %850 = vmatpush1.xpose.msra.mxu0 0.0
    %851 = vmatprep.subr.mxu0 0.0
    %852 = vmatpush1.xpose.msra.mxu0 0.0
    %853 = vmatprep.subr.mxu0 0.0
    %854 = vmatpush1.xpose.msra.mxu0 0.0
    %855 = vmatprep.subr.mxu0 0.0
    %856 = vmatpush1.xpose.msra.mxu0 0.0
    %857 = vmatprep.mubr.f32.mxu0 0.0
    %858 = vmatmul.mubr.f32.gmra.mrb[0].mxu0 %v789
    %v859 = vpop.f32.mrb[0].mxu0
    %v860 = vadd.f32 0.0, %v859
    %v861 = vpop.f32.mrb[0].mxu0
    %862 = vdwg.mxu0
    %863 = vrot.lane.b32.xlu0 %v453, 120
    %v864 = vpop.permute.xlu0 %863
    %865 = vrot.lane.b32.xlu0 %v453, 88
    %v866 = vpop.permute.xlu0 %865
    %v867 = vsel %vm459, %v864, 0
    %v869 = vsel %vm459, %v866, 0
    %871 = vmatprep.subr.mxu0 0.0
    %872 = vmatpush1.xpose.msra.mxu0 %v869
    %873 = vmatprep.subr.mxu0 0.0
    %874 = vmatpush1.xpose.msra.mxu0 0.0
    %875 = vmatprep.subr.mxu0 0.0
    %876 = vmatpush1.xpose.msra.mxu0 0.0
    %877 = vmatprep.subr.mxu0 0.0
    %878 = vmatpush1.xpose.msra.mxu0 0.0
    %879 = vmatprep.subr.mxu0 0.0
    %880 = vmatpush1.xpose.msra.mxu0 0.0
    %881 = vmatprep.subr.mxu0 0.0
    %882 = vmatpush1.xpose.msra.mxu0 0.0
    %883 = vmatprep.subr.mxu0 0.0
    %884 = vmatpush1.xpose.msra.mxu0 0.0
    %885 = vmatprep.subr.mxu0 0.0
    %886 = vmatpush1.xpose.msra.mxu0 0.0
    %887 = vmatprep.subr.mxu0 0.0
    %888 = vmatpush1.xpose.msra.mxu0 0.0
    %889 = vmatprep.subr.mxu0 0.0
    %890 = vmatpush1.xpose.msra.mxu0 0.0
    %891 = vmatprep.subr.mxu0 0.0
    %892 = vmatpush1.xpose.msra.mxu0 0.0
    %893 = vmatprep.subr.mxu0 0.0
    %894 = vmatpush1.xpose.msra.mxu0 0.0
    %895 = vmatprep.subr.mxu0 0.0
    %896 = vmatpush1.xpose.msra.mxu0 0.0
    %897 = vmatprep.subr.mxu0 0.0
    %898 = vmatpush1.xpose.msra.mxu0 0.0
    %899 = vmatprep.subr.mxu0 0.0
    %900 = vmatpush1.xpose.msra.mxu0 0.0
    %901 = vmatprep.subr.mxu0 0.0
    %902 = vmatpush1.xpose.msra.mxu0 0.0
    %903 = vmatprep.subr.mxu0 0.0
    %904 = vmatpush1.xpose.msra.mxu0 0.0
    %905 = vmatprep.subr.mxu0 0.0
    %906 = vmatpush1.xpose.msra.mxu0 0.0
    %907 = vmatprep.subr.mxu0 0.0
    %908 = vmatpush1.xpose.msra.mxu0 0.0
    %909 = vmatprep.subr.mxu0 0.0
    %910 = vmatpush1.xpose.msra.mxu0 0.0
    %911 = vmatprep.subr.mxu0 0.0
    %912 = vmatpush1.xpose.msra.mxu0 0.0
    %913 = vmatprep.subr.mxu0 0.0
    %914 = vmatpush1.xpose.msra.mxu0 0.0
    %915 = vmatprep.subr.mxu0 0.0
    %916 = vmatpush1.xpose.msra.mxu0 0.0
    %917 = vmatprep.subr.mxu0 0.0
    %918 = vmatpush1.xpose.msra.mxu0 0.0
    %919 = vmatprep.subr.mxu0 0.0
    %920 = vmatpush1.xpose.msra.mxu0 0.0
    %921 = vmatprep.subr.mxu0 0.0
    %922 = vmatpush1.xpose.msra.mxu0 0.0
    %923 = vmatprep.subr.mxu0 0.0
    %924 = vmatpush1.xpose.msra.mxu0 0.0
    %925 = vmatprep.subr.mxu0 0.0
    %926 = vmatpush1.xpose.msra.mxu0 0.0
    %927 = vmatprep.subr.mxu0 0.0
    %928 = vmatpush1.xpose.msra.mxu0 0.0
    %929 = vmatprep.subr.mxu0 0.0
    %930 = vmatpush1.xpose.msra.mxu0 0.0
    %931 = vmatprep.subr.mxu0 0.0
    %932 = vmatpush1.xpose.msra.mxu0 0.0
    %933 = vmatprep.subr.mxu0 0.0
    %934 = vmatpush1.xpose.msra.mxu0 0.0
    %935 = vmatprep.mubr.f32.mxu0 0.0
    %936 = vmatmul.mubr.f32.gmra.mrb[0].mxu0 %v867
    %v937 = vpop.f32.mrb[0].mxu0
    %v938 = vadd.f32 0.0, %v937
    %v939 = vpop.f32.mrb[0].mxu0
    %940 = vdwg.mxu0
    %v941 = vsel %vm459, %v860, -inf
    %942 = vmax.xlane.f32.xlu0 %v941
    %v943 = vpop.xlane.xlu0 %942
    %v944 = vsel %vm459, %v938, -inf
    %945 = vmax.xlane.f32.xlu0 %v944
    %v946 = vpop.xlane.xlu0 %945
    %v947 = vsub.f32 %v860, %v943
    %v948 = vsub.f32 %v938, %v946
    %v949 = vmul.f32 %v947, 1.442695
    %v950 = vpow.pop %v949
    %v951 = vmul.f32 %v948, 1.442695
    %v952 = vpow.pop %v951
    %v953 = vsel %vm459, %v950, 0.0
    %954 = vadd.xlane.f32.xlu0 %v953
    %v955 = vpop.xlane.xlu0 %954
    %v956 = vsel %vm459, %v952, 0.0
    %957 = vadd.xlane.f32.xlu0 %v956
    %v958 = vpop.xlane.xlu0 %957
    %v959 = vrcp.pop %v955
    %v960 = vmul.f32 %v950, %v959
    %v961 = vrcp.pop %v958
    %v962 = vmul.f32 %v952, %v961
    %963 = vrot.lane.b32.xlu0 %v448, 56
    %v964 = vpop.permute.xlu0 %963
    %v967 = vsel %vm459, %v960, 0
    %969 = vmatprep.subr.mxu0 0.0
    %970 = vmatpush1.msra.mxu0 %v964
    %971 = vmatprep.subr.mxu0 0.0
    %972 = vmatpush1.msra.mxu0 0.0
    %973 = vmatprep.subr.mxu0 0.0
    %974 = vmatpush1.msra.mxu0 0.0
    %975 = vmatprep.subr.mxu0 0.0
    %976 = vmatpush1.msra.mxu0 0.0
    %977 = vmatprep.subr.mxu0 0.0
    %978 = vmatpush1.msra.mxu0 0.0
    %979 = vmatprep.subr.mxu0 0.0
    %980 = vmatpush1.msra.mxu0 0.0
    %981 = vmatprep.subr.mxu0 0.0
    %982 = vmatpush1.msra.mxu0 0.0
    %983 = vmatprep.subr.mxu0 0.0
    %984 = vmatpush1.msra.mxu0 0.0
    %985 = vmatprep.subr.mxu0 0.0
    %986 = vmatpush1.msra.mxu0 0.0
    %987 = vmatprep.subr.mxu0 0.0
    %988 = vmatpush1.msra.mxu0 0.0
    %989 = vmatprep.subr.mxu0 0.0
    %990 = vmatpush1.msra.mxu0 0.0
    %991 = vmatprep.subr.mxu0 0.0
    %992 = vmatpush1.msra.mxu0 0.0
    %993 = vmatprep.subr.mxu0 0.0
    %994 = vmatpush1.msra.mxu0 0.0
    %995 = vmatprep.subr.mxu0 0.0
    %996 = vmatpush1.msra.mxu0 0.0
    %997 = vmatprep.subr.mxu0 0.0
    %998 = vmatpush1.msra.mxu0 0.0
    %999 = vmatprep.subr.mxu0 0.0
    %1000 = vmatpush1.msra.mxu0 0.0
    %1001 = vmatprep.subr.mxu0 0.0
    %1002 = vmatpush1.msra.mxu0 0.0
    %1003 = vmatprep.subr.mxu0 0.0
    %1004 = vmatpush1.msra.mxu0 0.0
    %1005 = vmatprep.subr.mxu0 0.0
    %1006 = vmatpush1.msra.mxu0 0.0
    %1007 = vmatprep.subr.mxu0 0.0
    %1008 = vmatpush1.msra.mxu0 0.0
    %1009 = vmatprep.subr.mxu0 0.0
    %1010 = vmatpush1.msra.mxu0 0.0
    %1011 = vmatprep.subr.mxu0 0.0
    %1012 = vmatpush1.msra.mxu0 0.0
    %1013 = vmatprep.subr.mxu0 0.0
    %1014 = vmatpush1.msra.mxu0 0.0
    %1015 = vmatprep.subr.mxu0 0.0
    %1016 = vmatpush1.msra.mxu0 0.0
    %1017 = vmatprep.subr.mxu0 0.0
    %1018 = vmatpush1.msra.mxu0 0.0
    %1019 = vmatprep.subr.mxu0 0.0
    %1020 = vmatpush1.msra.mxu0 0.0
    %1021 = vmatprep.subr.mxu0 0.0
    %1022 = vmatpush1.msra.mxu0 0.0
    %1023 = vmatprep.subr.mxu0 0.0
    %1024 = vmatpush1.msra.mxu0 0.0
    %1025 = vmatprep.subr.mxu0 0.0
    %1026 = vmatpush1.msra.mxu0 0.0
    %1027 = vmatprep.subr.mxu0 0.0
    %1028 = vmatpush1.msra.mxu0 0.0
    %1029 = vmatprep.subr.mxu0 0.0
    %1030 = vmatpush1.msra.mxu0 0.0
    %1031 = vmatprep.subr.mxu0 0.0
    %1032 = vmatpush1.msra.mxu0 0.0
    %1033 = vmatprep.mubr.f32.mxu0 0.0
    %1034 = vmatmul.mubr.f32.gmra.mrb[0].mxu0 %v967
    %v1035 = vpop.f32.mrb[0].mxu0
    %v1036 = vadd.f32 0.0, %v1035
    %v1037 = vpop.f32.mrb[0].mxu0
    %1038 = vdwg.mxu0
    %1039 = vrot.lane.b32.xlu0 %v453, 56
    %v1040 = vpop.permute.xlu0 %1039
    %v1043 = vsel %vm459, %v962, 0
    %1045 = vmatprep.subr.mxu0 0.0
    %1046 = vmatpush1.msra.mxu0 %v1040
    %1047 = vmatprep.subr.mxu0 0.0
    %1048 = vmatpush1.msra.mxu0 0.0
    %1049 = vmatprep.subr.mxu0 0.0
    %1050 = vmatpush1.msra.mxu0 0.0
    %1051 = vmatprep.subr.mxu0 0.0
    %1052 = vmatpush1.msra.mxu0 0.0
    %1053 = vmatprep.subr.mxu0 0.0
    %1054 = vmatpush1.msra.mxu0 0.0
    %1055 = vmatprep.subr.mxu0 0.0
    %1056 = vmatpush1.msra.mxu0 0.0
    %1057 = vmatprep.subr.mxu0 0.0
    %1058 = vmatpush1.msra.mxu0 0.0
    %1059 = vmatprep.subr.mxu0 0.0
    %1060 = vmatpush1.msra.mxu0 0.0
    %1061 = vmatprep.subr.mxu0 0.0
    %1062 = vmatpush1.msra.mxu0 0.0
    %1063 = vmatprep.subr.mxu0 0.0
    %1064 = vmatpush1.msra.mxu0 0.0
    %1065 = vmatprep.subr.mxu0 0.0
    %1066 = vmatpush1.msra.mxu0 0.0
    %1067 = vmatprep.subr.mxu0 0.0
    %1068 = vmatpush1.msra.mxu0 0.0
    %1069 = vmatprep.subr.mxu0 0.0
    %1070 = vmatpush1.msra.mxu0 0.0
    %1071 = vmatprep.subr.mxu0 0.0
    %1072 = vmatpush1.msra.mxu0 0.0
    %1073 = vmatprep.subr.mxu0 0.0
    %1074 = vmatpush1.msra.mxu0 0.0
    %1075 = vmatprep.subr.mxu0 0.0
    %1076 = vmatpush1.msra.mxu0 0.0
    %1077 = vmatprep.subr.mxu0 0.0
    %1078 = vmatpush1.msra.mxu0 0.0
    %1079 = vmatprep.subr.mxu0 0.0
    %1080 = vmatpush1.msra.mxu0 0.0
    %1081 = vmatprep.subr.mxu0 0.0
    %1082 = vmatpush1.msra.mxu0 0.0
    %1083 = vmatprep.subr.mxu0 0.0
    %1084 = vmatpush1.msra.mxu0 0.0
    %1085 = vmatprep.subr.mxu0 0.0
    %1086 = vmatpush1.msra.mxu0 0.0
    %1087 = vmatprep.subr.mxu0 0.0
    %1088 = vmatpush1.msra.mxu0 0.0
    %1089 = vmatprep.subr.mxu0 0.0
    %1090 = vmatpush1.msra.mxu0 0.0
    %1091 = vmatprep.subr.mxu0 0.0
    %1092 = vmatpush1.msra.mxu0 0.0
    %1093 = vmatprep.subr.mxu0 0.0
    %1094 = vmatpush1.msra.mxu0 0.0
    %1095 = vmatprep.subr.mxu0 0.0
    %1096 = vmatpush1.msra.mxu0 0.0
    %1097 = vmatprep.subr.mxu0 0.0
    %1098 = vmatpush1.msra.mxu0 0.0
    %1099 = vmatprep.subr.mxu0 0.0
    %1100 = vmatpush1.msra.mxu0 0.0
    %1101 = vmatprep.subr.mxu0 0.0
    %1102 = vmatpush1.msra.mxu0 0.0
    %1103 = vmatprep.subr.mxu0 0.0
    %1104 = vmatpush1.msra.mxu0 0.0
    %1105 = vmatprep.subr.mxu0 0.0
    %1106 = vmatpush1.msra.mxu0 0.0
    %1107 = vmatprep.subr.mxu0 0.0
    %1108 = vmatpush1.msra.mxu0 0.0
    %1109 = vmatprep.mubr.f32.mxu0 0.0
    %1110 = vmatmul.mubr.f32.gmra.mrb[0].mxu0 %v1043
    %v1111 = vpop.f32.mrb[0].mxu0
    %v1112 = vadd.f32 0.0, %v1111
    %v1113 = vpop.f32.mrb[0].mxu0
    %1114 = vdwg.mxu0
    %1115 = vrot.lane.b32.xlu0 %v448, 112
    %v1116 = vpop.permute.xlu0 %1115
    %1117 = vrot.lane.b32.xlu0 %v448, 80
    %v1118 = vpop.permute.xlu0 %1117
    %v1119 = vsel %vm459, %v1116, 0
    %v1121 = vsel %vm459, %v1118, 0
    %1123 = vmatprep.subr.mxu0 0.0
    %1124 = vmatpush1.xpose.msra.mxu0 %v1121
    %1125 = vmatprep.subr.mxu0 0.0
    %1126 = vmatpush1.xpose.msra.mxu0 0.0
    %1127 = vmatprep.subr.mxu0 0.0
    %1128 = vmatpush1.xpose.msra.mxu0 0.0
    %1129 = vmatprep.subr.mxu0 0.0
    %1130 = vmatpush1.xpose.msra.mxu0 0.0
    %1131 = vmatprep.subr.mxu0 0.0
    %1132 = vmatpush1.xpose.msra.mxu0 0.0
    %1133 = vmatprep.subr.mxu0 0.0
    %1134 = vmatpush1.xpose.msra.mxu0 0.0
    %1135 = vmatprep.subr.mxu0 0.0
    %1136 = vmatpush1.xpose.msra.mxu0 0.0
    %1137 = vmatprep.subr.mxu0 0.0
    %1138 = vmatpush1.xpose.msra.mxu0 0.0
    %1139 = vmatprep.subr.mxu0 0.0
    %1140 = vmatpush1.xpose.msra.mxu0 0.0
    %1141 = vmatprep.subr.mxu0 0.0
    %1142 = vmatpush1.xpose.msra.mxu0 0.0
    %1143 = vmatprep.subr.mxu0 0.0
    %1144 = vmatpush1.xpose.msra.mxu0 0.0
    %1145 = vmatprep.subr.mxu0 0.0
    %1146 = vmatpush1.xpose.msra.mxu0 0.0
    %1147 = vmatprep.subr.mxu0 0.0
    %1148 = vmatpush1.xpose.msra.mxu0 0.0
    %1149 = vmatprep.subr.mxu0 0.0
    %1150 = vmatpush1.xpose.msra.mxu0 0.0
    %1151 = vmatprep.subr.mxu0 0.0
    %1152 = vmatpush1.xpose.msra.mxu0 0.0
    %1153 = vmatprep.subr.mxu0 0.0
    %1154 = vmatpush1.xpose.msra.mxu0 0.0
    %1155 = vmatprep.subr.mxu0 0.0
    %1156 = vmatpush1.xpose.msra.mxu0 0.0
    %1157 = vmatprep.subr.mxu0 0.0
    %1158 = vmatpush1.xpose.msra.mxu0 0.0
    %1159 = vmatprep.subr.mxu0 0.0
    %1160 = vmatpush1.xpose.msra.mxu0 0.0
    %1161 = vmatprep.subr.mxu0 0.0
    %1162 = vmatpush1.xpose.msra.mxu0 0.0
    %1163 = vmatprep.subr.mxu0 0.0
    %1164 = vmatpush1.xpose.msra.mxu0 0.0
    %1165 = vmatprep.subr.mxu0 0.0
    %1166 = vmatpush1.xpose.msra.mxu0 0.0
    %1167 = vmatprep.subr.mxu0 0.0
    %1168 = vmatpush1.xpose.msra.mxu0 0.0
    %1169 = vmatprep.subr.mxu0 0.0
    %1170 = vmatpush1.xpose.msra.mxu0 0.0
    %1171 = vmatprep.subr.mxu0 0.0
    %1172 = vmatpush1.xpose.msra.mxu0 0.0
    %1173 = vmatprep.subr.mxu0 0.0
    %1174 = vmatpush1.xpose.msra.mxu0 0.0
    %1175 = vmatprep.subr.mxu0 0.0
    %1176 = vmatpush1.xpose.msra.mxu0 0.0
    %1177 = vmatprep.subr.mxu0 0.0
    %1178 = vmatpush1.xpose.msra.mxu0 0.0
    %1179 = vmatprep.subr.mxu0 0.0
    %1180 = vmatpush1.xpose.msra.mxu0 0.0
    %1181 = vmatprep.subr.mxu0 0.0
    %1182 = vmatpush1.xpose.msra.mxu0 0.0
    %1183 = vmatprep.subr.mxu0 0.0
    %1184 = vmatpush1.xpose.msra.mxu0 0.0
    %1185 = vmatprep.subr.mxu0 0.0
    %1186 = vmatpush1.xpose.msra.mxu0 0.0
    %1187 = vmatprep.mubr.f32.mxu0 0.0
    %1188 = vmatmul.mubr.f32.gmra.mrb[0].mxu0 %v1119
    %v1189 = vpop.f32.mrb[0].mxu0
    %v1190 = vadd.f32 0.0, %v1189
    %v1191 = vpop.f32.mrb[0].mxu0
    %1192 = vdwg.mxu0
    %1193 = vrot.lane.b32.xlu0 %v453, 112
    %v1194 = vpop.permute.xlu0 %1193
    %1195 = vrot.lane.b32.xlu0 %v453, 80
    %v1196 = vpop.permute.xlu0 %1195
    %v1197 = vsel %vm459, %v1194, 0
    %v1199 = vsel %vm459, %v1196, 0
    %1201 = vmatprep.subr.mxu0 0.0
    %1202 = vmatpush1.xpose.msra.mxu0 %v1199
    %1203 = vmatprep.subr.mxu0 0.0
    %1204 = vmatpush1.xpose.msra.mxu0 0.0
    %1205 = vmatprep.subr.mxu0 0.0
    %1206 = vmatpush1.xpose.msra.mxu0 0.0
    %1207 = vmatprep.subr.mxu0 0.0
    %1208 = vmatpush1.xpose.msra.mxu0 0.0
    %1209 = vmatprep.subr.mxu0 0.0
    %1210 = vmatpush1.xpose.msra.mxu0 0.0
    %1211 = vmatprep.subr.mxu0 0.0
    %1212 = vmatpush1.xpose.msra.mxu0 0.0
    %1213 = vmatprep.subr.mxu0 0.0
    %1214 = vmatpush1.xpose.msra.mxu0 0.0
    %1215 = vmatprep.subr.mxu0 0.0
    %1216 = vmatpush1.xpose.msra.mxu0 0.0
    %1217 = vmatprep.subr.mxu0 0.0
    %1218 = vmatpush1.xpose.msra.mxu0 0.0
    %1219 = vmatprep.subr.mxu0 0.0
    %1220 = vmatpush1.xpose.msra.mxu0 0.0
    %1221 = vmatprep.subr.mxu0 0.0
    %1222 = vmatpush1.xpose.msra.mxu0 0.0
    %1223 = vmatprep.subr.mxu0 0.0
    %1224 = vmatpush1.xpose.msra.mxu0 0.0
    %1225 = vmatprep.subr.mxu0 0.0
    %1226 = vmatpush1.xpose.msra.mxu0 0.0
    %1227 = vmatprep.subr.mxu0 0.0
    %1228 = vmatpush1.xpose.msra.mxu0 0.0
    %1229 = vmatprep.subr.mxu0 0.0
    %1230 = vmatpush1.xpose.msra.mxu0 0.0
    %1231 = vmatprep.subr.mxu0 0.0
    %1232 = vmatpush1.xpose.msra.mxu0 0.0
    %1233 = vmatprep.subr.mxu0 0.0
    %1234 = vmatpush1.xpose.msra.mxu0 0.0
    %1235 = vmatprep.subr.mxu0 0.0
    %1236 = vmatpush1.xpose.msra.mxu0 0.0
    %1237 = vmatprep.subr.mxu0 0.0
    %1238 = vmatpush1.xpose.msra.mxu0 0.0
    %1239 = vmatprep.subr.mxu0 0.0
    %1240 = vmatpush1.xpose.msra.mxu0 0.0
    %1241 = vmatprep.subr.mxu0 0.0
    %1242 = vmatpush1.xpose.msra.mxu0 0.0
    %1243 = vmatprep.subr.mxu0 0.0
    %1244 = vmatpush1.xpose.msra.mxu0 0.0
    %1245 = vmatprep.subr.mxu0 0.0
    %1246 = vmatpush1.xpose.msra.mxu0 0.0
    %1247 = vmatprep.subr.mxu0 0.0
    %1248 = vmatpush1.xpose.msra.mxu0 0.0
    %1249 = vmatprep.subr.mxu0 0.0
    %1250 = vmatpush1.xpose.msra.mxu0 0.0
    %1251 = vmatprep.subr.mxu0 0.0
    %1252 = vmatpush1.xpose.msra.mxu0 0.0
    %1253 = vmatprep.subr.mxu0 0.0
    %1254 = vmatpush1.xpose.msra.mxu0 0.0
    %1255 = vmatprep.subr.mxu0 0.0
    %1256 = vmatpush1.xpose.msra.mxu0 0.0
    %1257 = vmatprep.subr.mxu0 0.0
    %1258 = vmatpush1.xpose.msra.mxu0 0.0
    %1259 = vmatprep.subr.mxu0 0.0
    %1260 = vmatpush1.xpose.msra.mxu0 0.0
    %1261 = vmatprep.subr.mxu0 0.0
    %1262 = vmatpush1.xpose.msra.mxu0 0.0
    %1263 = vmatprep.subr.mxu0 0.0
    %1264 = vmatpush1.xpose.msra.mxu0 0.0
    %1265 = vmatprep.mubr.f32.mxu0 0.0
    %1266 = vmatmul.mubr.f32.gmra.mrb[0].mxu0 %v1197
    %v1267 = vpop.f32.mrb[0].mxu0
    %v1268 = vadd.f32 0.0, %v1267
    %v1269 = vpop.f32.mrb[0].mxu0
    %1270 = vdwg.mxu0
    %v1271 = vsel %vm459, %v1190, -inf
    %1272 = vmax.xlane.f32.xlu0 %v1271
    %v1273 = vpop.xlane.xlu0 %1272
    %v1274 = vsel %vm459, %v1268, -inf
    %1275 = vmax.xlane.f32.xlu0 %v1274
    %v1276 = vpop.xlane.xlu0 %1275
    %v1277 = vsub.f32 %v1190, %v1273
    %v1278 = vsub.f32 %v1268, %v1276
    %v1279 = vmul.f32 %v1277, 1.442695
    %v1280 = vpow.pop %v1279
    %v1281 = vmul.f32 %v1278, 1.442695
    %v1282 = vpow.pop %v1281
    %v1283 = vsel %vm459, %v1280, 0.0
    %1284 = vadd.xlane.f32.xlu0 %v1283
    %v1285 = vpop.xlane.xlu0 %1284
    %v1286 = vsel %vm459, %v1282, 0.0
    %1287 = vadd.xlane.f32.xlu0 %v1286
    %v1288 = vpop.xlane.xlu0 %1287
    %v1289 = vrcp.pop %v1285
    %v1290 = vmul.f32 %v1280, %v1289
    %v1291 = vrcp.pop %v1288
    %v1292 = vmul.f32 %v1282, %v1291
    %1293 = vrot.lane.b32.xlu0 %v448, 48
    %v1294 = vpop.permute.xlu0 %1293
    %v1297 = vsel %vm459, %v1290, 0
    %1299 = vmatprep.subr.mxu0 0.0
    %1300 = vmatpush1.msra.mxu0 %v1294
    %1301 = vmatprep.subr.mxu0 0.0
    %1302 = vmatpush1.msra.mxu0 0.0
    %1303 = vmatprep.subr.mxu0 0.0
    %1304 = vmatpush1.msra.mxu0 0.0
    %1305 = vmatprep.subr.mxu0 0.0
    %1306 = vmatpush1.msra.mxu0 0.0
    %1307 = vmatprep.subr.mxu0 0.0
    %1308 = vmatpush1.msra.mxu0 0.0
    %1309 = vmatprep.subr.mxu0 0.0
    %1310 = vmatpush1.msra.mxu0 0.0
    %1311 = vmatprep.subr.mxu0 0.0
    %1312 = vmatpush1.msra.mxu0 0.0
    %1313 = vmatprep.subr.mxu0 0.0
    %1314 = vmatpush1.msra.mxu0 0.0
    %1315 = vmatprep.subr.mxu0 0.0
    %1316 = vmatpush1.msra.mxu0 0.0
    %1317 = vmatprep.subr.mxu0 0.0
    %1318 = vmatpush1.msra.mxu0 0.0
    %1319 = vmatprep.subr.mxu0 0.0
    %1320 = vmatpush1.msra.mxu0 0.0
    %1321 = vmatprep.subr.mxu0 0.0
    %1322 = vmatpush1.msra.mxu0 0.0
    %1323 = vmatprep.subr.mxu0 0.0
    %1324 = vmatpush1.msra.mxu0 0.0
    %1325 = vmatprep.subr.mxu0 0.0
    %1326 = vmatpush1.msra.mxu0 0.0
    %1327 = vmatprep.subr.mxu0 0.0
    %1328 = vmatpush1.msra.mxu0 0.0
    %1329 = vmatprep.subr.mxu0 0.0
    %1330 = vmatpush1.msra.mxu0 0.0
    %1331 = vmatprep.subr.mxu0 0.0
    %1332 = vmatpush1.msra.mxu0 0.0
    %1333 = vmatprep.subr.mxu0 0.0
    %1334 = vmatpush1.msra.mxu0 0.0
    %1335 = vmatprep.subr.mxu0 0.0
    %1336 = vmatpush1.msra.mxu0 0.0
    %1337 = vmatprep.subr.mxu0 0.0
    %1338 = vmatpush1.msra.mxu0 0.0
    %1339 = vmatprep.subr.mxu0 0.0
    %1340 = vmatpush1.msra.mxu0 0.0
    %1341 = vmatprep.subr.mxu0 0.0
    %1342 = vmatpush1.msra.mxu0 0.0
    %1343 = vmatprep.subr.mxu0 0.0
    %1344 = vmatpush1.msra.mxu0 0.0
    %1345 = vmatprep.subr.mxu0 0.0
    %1346 = vmatpush1.msra.mxu0 0.0
    %1347 = vmatprep.subr.mxu0 0.0
    %1348 = vmatpush1.msra.mxu0 0.0
    %1349 = vmatprep.subr.mxu0 0.0
    %1350 = vmatpush1.msra.mxu0 0.0
    %1351 = vmatprep.subr.mxu0 0.0
    %1352 = vmatpush1.msra.mxu0 0.0
    %1353 = vmatprep.subr.mxu0 0.0
    %1354 = vmatpush1.msra.mxu0 0.0
    %1355 = vmatprep.subr.mxu0 0.0
    %1356 = vmatpush1.msra.mxu0 0.0
    %1357 = vmatprep.subr.mxu0 0.0
    %1358 = vmatpush1.msra.mxu0 0.0
    %1359 = vmatprep.subr.mxu0 0.0
    %1360 = vmatpush1.msra.mxu0 0.0
    %1361 = vmatprep.subr.mxu0 0.0
    %1362 = vmatpush1.msra.mxu0 0.0
    %1363 = vmatprep.mubr.f32.mxu0 0.0
    %1364 = vmatmul.mubr.f32.gmra.mrb[0].mxu0 %v1297
    %v1365 = vpop.f32.mrb[0].mxu0
    %v1366 = vadd.f32 0.0, %v1365
    %v1367 = vpop.f32.mrb[0].mxu0
    %1368 = vdwg.mxu0
    %1369 = vrot.lane.b32.xlu0 %v453, 48
    %v1370 = vpop.permute.xlu0 %1369
    %v1373 = vsel %vm459, %v1292, 0
    %1375 = vmatprep.subr.mxu0 0.0
    %1376 = vmatpush1.msra.mxu0 %v1370
    %1377 = vmatprep.subr.mxu0 0.0
    %1378 = vmatpush1.msra.mxu0 0.0
    %1379 = vmatprep.subr.mxu0 0.0
    %1380 = vmatpush1.msra.mxu0 0.0
    %1381 = vmatprep.subr.mxu0 0.0
    %1382 = vmatpush1.msra.mxu0 0.0
    %1383 = vmatprep.subr.mxu0 0.0
    %1384 = vmatpush1.msra.mxu0 0.0
    %1385 = vmatprep.subr.mxu0 0.0
    %1386 = vmatpush1.msra.mxu0 0.0
    %1387 = vmatprep.subr.mxu0 0.0
    %1388 = vmatpush1.msra.mxu0 0.0
    %1389 = vmatprep.subr.mxu0 0.0
    %1390 = vmatpush1.msra.mxu0 0.0
    %1391 = vmatprep.subr.mxu0 0.0
    %1392 = vmatpush1.msra.mxu0 0.0
    %1393 = vmatprep.subr.mxu0 0.0
    %1394 = vmatpush1.msra.mxu0 0.0
    %1395 = vmatprep.subr.mxu0 0.0
    %1396 = vmatpush1.msra.mxu0 0.0
    %1397 = vmatprep.subr.mxu0 0.0
    %1398 = vmatpush1.msra.mxu0 0.0
    %1399 = vmatprep.subr.mxu0 0.0
    %1400 = vmatpush1.msra.mxu0 0.0
    %1401 = vmatprep.subr.mxu0 0.0
    %1402 = vmatpush1.msra.mxu0 0.0
    %1403 = vmatprep.subr.mxu0 0.0
    %1404 = vmatpush1.msra.mxu0 0.0
    %1405 = vmatprep.subr.mxu0 0.0
    %1406 = vmatpush1.msra.mxu0 0.0
    %1407 = vmatprep.subr.mxu0 0.0
    %1408 = vmatpush1.msra.mxu0 0.0
    %1409 = vmatprep.subr.mxu0 0.0
    %1410 = vmatpush1.msra.mxu0 0.0
    %1411 = vmatprep.subr.mxu0 0.0
    %1412 = vmatpush1.msra.mxu0 0.0
    %1413 = vmatprep.subr.mxu0 0.0
    %1414 = vmatpush1.msra.mxu0 0.0
    %1415 = vmatprep.subr.mxu0 0.0
    %1416 = vmatpush1.msra.mxu0 0.0
    %1417 = vmatprep.subr.mxu0 0.0
    %1418 = vmatpush1.msra.mxu0 0.0
    %1419 = vmatprep.subr.mxu0 0.0
    %1420 = vmatpush1.msra.mxu0 0.0
    %1421 = vmatprep.subr.mxu0 0.0
    %1422 = vmatpush1.msra.mxu0 0.0
    %1423 = vmatprep.subr.mxu0 0.0
    %1424 = vmatpush1.msra.mxu0 0.0
    %1425 = vmatprep.subr.mxu0 0.0
    %1426 = vmatpush1.msra.mxu0 0.0
    %1427 = vmatprep.subr.mxu0 0.0
    %1428 = vmatpush1.msra.mxu0 0.0
    %1429 = vmatprep.subr.mxu0 0.0
    %1430 = vmatpush1.msra.mxu0 0.0
    %1431 = vmatprep.subr.mxu0 0.0
    %1432 = vmatpush1.msra.mxu0 0.0
    %1433 = vmatprep.subr.mxu0 0.0
    %1434 = vmatpush1.msra.mxu0 0.0
    %1435 = vmatprep.subr.mxu0 0.0
    %1436 = vmatpush1.msra.mxu0 0.0
    %1437 = vmatprep.subr.mxu0 0.0
    %1438 = vmatpush1.msra.mxu0 0.0
    %1439 = vmatprep.mubr.f32.mxu0 0.0
    %1440 = vmatmul.mubr.f32.gmra.mrb[0].mxu0 %v1373
    %v1441 = vpop.f32.mrb[0].mxu0
    %v1442 = vadd.f32 0.0, %v1441
    %v1443 = vpop.f32.mrb[0].mxu0
    %1444 = vdwg.mxu0
    %1445 = vrot.lane.b32.xlu0 %v448, 104
    %v1446 = vpop.permute.xlu0 %1445
    %1447 = vrot.lane.b32.xlu0 %v448, 72
    %v1448 = vpop.permute.xlu0 %1447
    %v1449 = vsel %vm459, %v1446, 0
    %v1451 = vsel %vm459, %v1448, 0
    %1453 = vmatprep.subr.mxu0 0.0
    %1454 = vmatpush1.xpose.msra.mxu0 %v1451
    %1455 = vmatprep.subr.mxu0 0.0
    %1456 = vmatpush1.xpose.msra.mxu0 0.0
    %1457 = vmatprep.subr.mxu0 0.0
    %1458 = vmatpush1.xpose.msra.mxu0 0.0
    %1459 = vmatprep.subr.mxu0 0.0
    %1460 = vmatpush1.xpose.msra.mxu0 0.0
    %1461 = vmatprep.subr.mxu0 0.0
    %1462 = vmatpush1.xpose.msra.mxu0 0.0
    %1463 = vmatprep.subr.mxu0 0.0
    %1464 = vmatpush1.xpose.msra.mxu0 0.0
    %1465 = vmatprep.subr.mxu0 0.0
    %1466 = vmatpush1.xpose.msra.mxu0 0.0
    %1467 = vmatprep.subr.mxu0 0.0
    %1468 = vmatpush1.xpose.msra.mxu0 0.0
    %1469 = vmatprep.subr.mxu0 0.0
    %1470 = vmatpush1.xpose.msra.mxu0 0.0
    %1471 = vmatprep.subr.mxu0 0.0
    %1472 = vmatpush1.xpose.msra.mxu0 0.0
    %1473 = vmatprep.subr.mxu0 0.0
    %1474 = vmatpush1.xpose.msra.mxu0 0.0
    %1475 = vmatprep.subr.mxu0 0.0
    %1476 = vmatpush1.xpose.msra.mxu0 0.0
    %1477 = vmatprep.subr.mxu0 0.0
    %1478 = vmatpush1.xpose.msra.mxu0 0.0
    %1479 = vmatprep.subr.mxu0 0.0
    %1480 = vmatpush1.xpose.msra.mxu0 0.0
    %1481 = vmatprep.subr.mxu0 0.0
    %1482 = vmatpush1.xpose.msra.mxu0 0.0
    %1483 = vmatprep.subr.mxu0 0.0
    %1484 = vmatpush1.xpose.msra.mxu0 0.0
    %1485 = vmatprep.subr.mxu0 0.0
    %1486 = vmatpush1.xpose.msra.mxu0 0.0
    %1487 = vmatprep.subr.mxu0 0.0
    %1488 = vmatpush1.xpose.msra.mxu0 0.0
    %1489 = vmatprep.subr.mxu0 0.0
    %1490 = vmatpush1.xpose.msra.mxu0 0.0
    %1491 = vmatprep.subr.mxu0 0.0
    %1492 = vmatpush1.xpose.msra.mxu0 0.0
    %1493 = vmatprep.subr.mxu0 0.0
    %1494 = vmatpush1.xpose.msra.mxu0 0.0
    %1495 = vmatprep.subr.mxu0 0.0
    %1496 = vmatpush1.xpose.msra.mxu0 0.0
    %1497 = vmatprep.subr.mxu0 0.0
    %1498 = vmatpush1.xpose.msra.mxu0 0.0
    %1499 = vmatprep.subr.mxu0 0.0
    %1500 = vmatpush1.xpose.msra.mxu0 0.0
    %1501 = vmatprep.subr.mxu0 0.0
    %1502 = vmatpush1.xpose.msra.mxu0 0.0
    %1503 = vmatprep.subr.mxu0 0.0
    %1504 = vmatpush1.xpose.msra.mxu0 0.0
    %1505 = vmatprep.subr.mxu0 0.0
    %1506 = vmatpush1.xpose.msra.mxu0 0.0
    %1507 = vmatprep.subr.mxu0 0.0
    %1508 = vmatpush1.xpose.msra.mxu0 0.0
    %1509 = vmatprep.subr.mxu0 0.0
    %1510 = vmatpush1.xpose.msra.mxu0 0.0
    %1511 = vmatprep.subr.mxu0 0.0
    %1512 = vmatpush1.xpose.msra.mxu0 0.0
    %1513 = vmatprep.subr.mxu0 0.0
    %1514 = vmatpush1.xpose.msra.mxu0 0.0
    %1515 = vmatprep.subr.mxu0 0.0
    %1516 = vmatpush1.xpose.msra.mxu0 0.0
    %1517 = vmatprep.mubr.f32.mxu0 0.0
    %1518 = vmatmul.mubr.f32.gmra.mrb[0].mxu0 %v1449
    %v1519 = vpop.f32.mrb[0].mxu0
    %v1520 = vadd.f32 0.0, %v1519
    %v1521 = vpop.f32.mrb[0].mxu0
    %1522 = vdwg.mxu0
    %1523 = vrot.lane.b32.xlu0 %v453, 104
    %v1524 = vpop.permute.xlu0 %1523
    %1525 = vrot.lane.b32.xlu0 %v453, 72
    %v1526 = vpop.permute.xlu0 %1525
    %v1527 = vsel %vm459, %v1524, 0
    %v1529 = vsel %vm459, %v1526, 0
    %1531 = vmatprep.subr.mxu0 0.0
    %1532 = vmatpush1.xpose.msra.mxu0 %v1529
    %1533 = vmatprep.subr.mxu0 0.0
    %1534 = vmatpush1.xpose.msra.mxu0 0.0
    %1535 = vmatprep.subr.mxu0 0.0
    %1536 = vmatpush1.xpose.msra.mxu0 0.0
    %1537 = vmatprep.subr.mxu0 0.0
    %1538 = vmatpush1.xpose.msra.mxu0 0.0
    %1539 = vmatprep.subr.mxu0 0.0
    %1540 = vmatpush1.xpose.msra.mxu0 0.0
    %1541 = vmatprep.subr.mxu0 0.0
    %1542 = vmatpush1.xpose.msra.mxu0 0.0
    %1543 = vmatprep.subr.mxu0 0.0
    %1544 = vmatpush1.xpose.msra.mxu0 0.0
    %1545 = vmatprep.subr.mxu0 0.0
    %1546 = vmatpush1.xpose.msra.mxu0 0.0
    %1547 = vmatprep.subr.mxu0 0.0
    %1548 = vmatpush1.xpose.msra.mxu0 0.0
    %1549 = vmatprep.subr.mxu0 0.0
    %1550 = vmatpush1.xpose.msra.mxu0 0.0
    %1551 = vmatprep.subr.mxu0 0.0
    %1552 = vmatpush1.xpose.msra.mxu0 0.0
    %1553 = vmatprep.subr.mxu0 0.0
    %1554 = vmatpush1.xpose.msra.mxu0 0.0
    %1555 = vmatprep.subr.mxu0 0.0
    %1556 = vmatpush1.xpose.msra.mxu0 0.0
    %1557 = vmatprep.subr.mxu0 0.0
    %1558 = vmatpush1.xpose.msra.mxu0 0.0
    %1559 = vmatprep.subr.mxu0 0.0
    %1560 = vmatpush1.xpose.msra.mxu0 0.0
    %1561 = vmatprep.subr.mxu0 0.0
    %1562 = vmatpush1.xpose.msra.mxu0 0.0
    %1563 = vmatprep.subr.mxu0 0.0
    %1564 = vmatpush1.xpose.msra.mxu0 0.0
    %1565 = vmatprep.subr.mxu0 0.0
    %1566 = vmatpush1.xpose.msra.mxu0 0.0
    %1567 = vmatprep.subr.mxu0 0.0
    %1568 = vmatpush1.xpose.msra.mxu0 0.0
    %1569 = vmatprep.subr.mxu0 0.0
    %1570 = vmatpush1.xpose.msra.mxu0 0.0
    %1571 = vmatprep.subr.mxu0 0.0
    %1572 = vmatpush1.xpose.msra.mxu0 0.0
    %1573 = vmatprep.subr.mxu0 0.0
    %1574 = vmatpush1.xpose.msra.mxu0 0.0
    %1575 = vmatprep.subr.mxu0 0.0
    %1576 = vmatpush1.xpose.msra.mxu0 0.0
    %1577 = vmatprep.subr.mxu0 0.0
    %1578 = vmatpush1.xpose.msra.mxu0 0.0
    %1579 = vmatprep.subr.mxu0 0.0
    %1580 = vmatpush1.xpose.msra.mxu0 0.0
    %1581 = vmatprep.subr.mxu0 0.0
    %1582 = vmatpush1.xpose.msra.mxu0 0.0
    %1583 = vmatprep.subr.mxu0 0.0
    %1584 = vmatpush1.xpose.msra.mxu0 0.0
    %1585 = vmatprep.subr.mxu0 0.0
    %1586 = vmatpush1.xpose.msra.mxu0 0.0
    %1587 = vmatprep.subr.mxu0 0.0
    %1588 = vmatpush1.xpose.msra.mxu0 0.0
    %1589 = vmatprep.subr.mxu0 0.0
    %1590 = vmatpush1.xpose.msra.mxu0 0.0
    %1591 = vmatprep.subr.mxu0 0.0
    %1592 = vmatpush1.xpose.msra.mxu0 0.0
    %1593 = vmatprep.subr.mxu0 0.0
    %1594 = vmatpush1.xpose.msra.mxu0 0.0
    %1595 = vmatprep.mubr.f32.mxu0 0.0
    %1596 = vmatmul.mubr.f32.gmra.mrb[0].mxu0 %v1527
    %v1597 = vpop.f32.mrb[0].mxu0
    %v1598 = vadd.f32 0.0, %v1597
    %v1599 = vpop.f32.mrb[0].mxu0
    %1600 = vdwg.mxu0
    %v1601 = vsel %vm459, %v1520, -inf
    %1602 = vmax.xlane.f32.xlu0 %v1601
    %v1603 = vpop.xlane.xlu0 %1602
    %v1604 = vsel %vm459, %v1598, -inf
    %1605 = vmax.xlane.f32.xlu0 %v1604
    %v1606 = vpop.xlane.xlu0 %1605
    %v1607 = vsub.f32 %v1520, %v1603
    %v1608 = vsub.f32 %v1598, %v1606
    %v1609 = vmul.f32 %v1607, 1.442695
    %v1610 = vpow.pop %v1609
    %v1611 = vmul.f32 %v1608, 1.442695
    %v1612 = vpow.pop %v1611
    %v1613 = vsel %vm459, %v1610, 0.0
    %1614 = vadd.xlane.f32.xlu0 %v1613
    %v1615 = vpop.xlane.xlu0 %1614
    %v1616 = vsel %vm459, %v1612, 0.0
    %1617 = vadd.xlane.f32.xlu0 %v1616
    %v1618 = vpop.xlane.xlu0 %1617
    %v1619 = vrcp.pop %v1615
    %v1620 = vmul.f32 %v1610, %v1619
    %v1621 = vrcp.pop %v1618
    %v1622 = vmul.f32 %v1612, %v1621
    %1623 = vrot.lane.b32.xlu0 %v448, 40
    %v1624 = vpop.permute.xlu0 %1623
    %v1627 = vsel %vm459, %v1620, 0
    %1629 = vmatprep.subr.mxu0 0.0
    %1630 = vmatpush1.msra.mxu0 %v1624
    %1631 = vmatprep.subr.mxu0 0.0
    %1632 = vmatpush1.msra.mxu0 0.0
    %1633 = vmatprep.subr.mxu0 0.0
    %1634 = vmatpush1.msra.mxu0 0.0
    %1635 = vmatprep.subr.mxu0 0.0
    %1636 = vmatpush1.msra.mxu0 0.0
    %1637 = vmatprep.subr.mxu0 0.0
    %1638 = vmatpush1.msra.mxu0 0.0
    %1639 = vmatprep.subr.mxu0 0.0
    %1640 = vmatpush1.msra.mxu0 0.0
    %1641 = vmatprep.subr.mxu0 0.0
    %1642 = vmatpush1.msra.mxu0 0.0
    %1643 = vmatprep.subr.mxu0 0.0
    %1644 = vmatpush1.msra.mxu0 0.0
    %1645 = vmatprep.subr.mxu0 0.0
    %1646 = vmatpush1.msra.mxu0 0.0
    %1647 = vmatprep.subr.mxu0 0.0
    %1648 = vmatpush1.msra.mxu0 0.0
    %1649 = vmatprep.subr.mxu0 0.0
    %1650 = vmatpush1.msra.mxu0 0.0
    %1651 = vmatprep.subr.mxu0 0.0
    %1652 = vmatpush1.msra.mxu0 0.0
    %1653 = vmatprep.subr.mxu0 0.0
    %1654 = vmatpush1.msra.mxu0 0.0
    %1655 = vmatprep.subr.mxu0 0.0
    %1656 = vmatpush1.msra.mxu0 0.0
    %1657 = vmatprep.subr.mxu0 0.0
    %1658 = vmatpush1.msra.mxu0 0.0
    %1659 = vmatprep.subr.mxu0 0.0
    %1660 = vmatpush1.msra.mxu0 0.0
    %1661 = vmatprep.subr.mxu0 0.0
    %1662 = vmatpush1.msra.mxu0 0.0
    %1663 = vmatprep.subr.mxu0 0.0
    %1664 = vmatpush1.msra.mxu0 0.0
    %1665 = vmatprep.subr.mxu0 0.0
    %1666 = vmatpush1.msra.mxu0 0.0
    %1667 = vmatprep.subr.mxu0 0.0
    %1668 = vmatpush1.msra.mxu0 0.0
    %1669 = vmatprep.subr.mxu0 0.0
    %1670 = vmatpush1.msra.mxu0 0.0
    %1671 = vmatprep.subr.mxu0 0.0
    %1672 = vmatpush1.msra.mxu0 0.0
    %1673 = vmatprep.subr.mxu0 0.0
    %1674 = vmatpush1.msra.mxu0 0.0
    %1675 = vmatprep.subr.mxu0 0.0
    %1676 = vmatpush1.msra.mxu0 0.0
    %1677 = vmatprep.subr.mxu0 0.0
    %1678 = vmatpush1.msra.mxu0 0.0
    %1679 = vmatprep.subr.mxu0 0.0
    %1680 = vmatpush1.msra.mxu0 0.0
    %1681 = vmatprep.subr.mxu0 0.0
    %1682 = vmatpush1.msra.mxu0 0.0
    %1683 = vmatprep.subr.mxu0 0.0
    %1684 = vmatpush1.msra.mxu0 0.0
    %1685 = vmatprep.subr.mxu0 0.0
    %1686 = vmatpush1.msra.mxu0 0.0
    %1687 = vmatprep.subr.mxu0 0.0
    %1688 = vmatpush1.msra.mxu0 0.0
    %1689 = vmatprep.subr.mxu0 0.0
    %1690 = vmatpush1.msra.mxu0 0.0
    %1691 = vmatprep.subr.mxu0 0.0
    %1692 = vmatpush1.msra.mxu0 0.0
    %1693 = vmatprep.mubr.f32.mxu0 0.0
    %1694 = vmatmul.mubr.f32.gmra.mrb[0].mxu0 %v1627
    %v1695 = vpop.f32.mrb[0].mxu0
    %v1696 = vadd.f32 0.0, %v1695
    %v1697 = vpop.f32.mrb[0].mxu0
    %1698 = vdwg.mxu0
    %1699 = vrot.lane.b32.xlu0 %v453, 40
    %v1700 = vpop.permute.xlu0 %1699
    %v1703 = vsel %vm459, %v1622, 0
    %1705 = vmatprep.subr.mxu0 0.0
    %1706 = vmatpush1.msra.mxu0 %v1700
    %1707 = vmatprep.subr.mxu0 0.0
    %1708 = vmatpush1.msra.mxu0 0.0
    %1709 = vmatprep.subr.mxu0 0.0
    %1710 = vmatpush1.msra.mxu0 0.0
    %1711 = vmatprep.subr.mxu0 0.0
    %1712 = vmatpush1.msra.mxu0 0.0
    %1713 = vmatprep.subr.mxu0 0.0
    %1714 = vmatpush1.msra.mxu0 0.0
    %1715 = vmatprep.subr.mxu0 0.0
    %1716 = vmatpush1.msra.mxu0 0.0
    %1717 = vmatprep.subr.mxu0 0.0
    %1718 = vmatpush1.msra.mxu0 0.0
    %1719 = vmatprep.subr.mxu0 0.0
    %1720 = vmatpush1.msra.mxu0 0.0
    %1721 = vmatprep.subr.mxu0 0.0
    %1722 = vmatpush1.msra.mxu0 0.0
    %1723 = vmatprep.subr.mxu0 0.0
    %1724 = vmatpush1.msra.mxu0 0.0
    %1725 = vmatprep.subr.mxu0 0.0
    %1726 = vmatpush1.msra.mxu0 0.0
    %1727 = vmatprep.subr.mxu0 0.0
    %1728 = vmatpush1.msra.mxu0 0.0
    %1729 = vmatprep.subr.mxu0 0.0
    %1730 = vmatpush1.msra.mxu0 0.0
    %1731 = vmatprep.subr.mxu0 0.0
    %1732 = vmatpush1.msra.mxu0 0.0
    %1733 = vmatprep.subr.mxu0 0.0
    %1734 = vmatpush1.msra.mxu0 0.0
    %1735 = vmatprep.subr.mxu0 0.0
    %1736 = vmatpush1.msra.mxu0 0.0
    %1737 = vmatprep.subr.mxu0 0.0
    %1738 = vmatpush1.msra.mxu0 0.0
    %1739 = vmatprep.subr.mxu0 0.0
    %1740 = vmatpush1.msra.mxu0 0.0
    %1741 = vmatprep.subr.mxu0 0.0
    %1742 = vmatpush1.msra.mxu0 0.0
    %1743 = vmatprep.subr.mxu0 0.0
    %1744 = vmatpush1.msra.mxu0 0.0
    %1745 = vmatprep.subr.mxu0 0.0
    %1746 = vmatpush1.msra.mxu0 0.0
    %1747 = vmatprep.subr.mxu0 0.0
    %1748 = vmatpush1.msra.mxu0 0.0
    %1749 = vmatprep.subr.mxu0 0.0
    %1750 = vmatpush1.msra.mxu0 0.0
    %1751 = vmatprep.subr.mxu0 0.0
    %1752 = vmatpush1.msra.mxu0 0.0
    %1753 = vmatprep.subr.mxu0 0.0
    %1754 = vmatpush1.msra.mxu0 0.0
    %1755 = vmatprep.subr.mxu0 0.0
    %1756 = vmatpush1.msra.mxu0 0.0
    %1757 = vmatprep.subr.mxu0 0.0
    %1758 = vmatpush1.msra.mxu0 0.0
    %1759 = vmatprep.subr.mxu0 0.0
    %1760 = vmatpush1.msra.mxu0 0.0
    %1761 = vmatprep.subr.mxu0 0.0
    %1762 = vmatpush1.msra.mxu0 0.0
    %1763 = vmatprep.subr.mxu0 0.0
    %1764 = vmatpush1.msra.mxu0 0.0
    %1765 = vmatprep.subr.mxu0 0.0
    %1766 = vmatpush1.msra.mxu0 0.0
    %1767 = vmatprep.subr.mxu0 0.0
    %1768 = vmatpush1.msra.mxu0 0.0
    %1769 = vmatprep.mubr.f32.mxu0 0.0
    %1770 = vmatmul.mubr.f32.gmra.mrb[0].mxu0 %v1703
    %v1771 = vpop.f32.mrb[0].mxu0
    %v1772 = vadd.f32 0.0, %v1771
    %v1773 = vpop.f32.mrb[0].mxu0
    %1774 = vdwg.mxu0
    %1777 = vrot.lane.b32.xlu0 %v1036, 8
    %v1778 = vpop.permute.xlu0 %1777
    %1779 = vrot.lane.b32.xlu0 %v1112, 8
    %v1780 = vpop.permute.xlu0 %1779
    %1785 = vrot.lane.b32.xlu0 %v1366, 16
    %v1786 = vpop.permute.xlu0 %1785
    %1787 = vrot.lane.b32.xlu0 %v1442, 16
    %v1788 = vpop.permute.xlu0 %1787
    %1793 = vrot.lane.b32.xlu0 %v1696, 24
    %v1794 = vpop.permute.xlu0 %1793
    %1795 = vrot.lane.b32.xlu0 %v1772, 24
    %v1796 = vpop.permute.xlu0 %1795
    %v1799 = vsel %vm459, %v706, %v1778
    %v1800 = vsel %vm459, %v782, %v1780
    %v1801 = vsel %vm238, %v1799, %v1786
    %v1802 = vsel %vm238, %v1800, %v1788
    %vm1803 = vcmask 195584
    %v1804 = vsel %vm1803, %v1801, %v1794
    %v1805 = vsel %vm1803, %v1802, %v1796
    %v1806 = vld [vmem:[%s6] sm:$0xff]
    %v1807 = vld [vmem:[%s6 + $0x8] sm:$0xff]
    %v1808 = vld [vmem:[%s6 + $0x10] sm:$0xff]
    %v1809 = vld [vmem:[%s6 + $0x18] sm:$0xff]
    %v1810 = vlaneseq
    %v1811 = vshrl.u32 %v1810, 7
    %v1812 = vsub.s32 1, %v1811
    %v1813 = vrot.slane %v366, %v1812
    %v1815 = vsel %vm320, %v1804, 0
    %v1818 = vsel %vm320, %v1805, 0
    %1820 = vmatprep.subr.mxu0 0.0
    %1821 = vmatpush1.msra.mxu0 %v1806
    %1822 = vmatprep.subr.mxu0 0.0
    %1823 = vmatpush1.msra.mxu0 %v1807
    %1824 = vmatprep.subr.mxu0 0.0
    %1825 = vmatpush1.msra.mxu0 %v1808
    %1826 = vmatprep.subr.mxu0 0.0
    %1827 = vmatpush1.msra.mxu0 %v1809
    %1828 = vmatprep.subr.mxu0 0.0
    %1829 = vmatpush1.msra.mxu0 0.0
    %1830 = vmatprep.subr.mxu0 0.0
    %1831 = vmatpush1.msra.mxu0 0.0
    %1832 = vmatprep.subr.mxu0 0.0
    %1833 = vmatpush1.msra.mxu0 0.0
    %1834 = vmatprep.subr.mxu0 0.0
    %1835 = vmatpush1.msra.mxu0 0.0
    %1836 = vmatprep.subr.mxu0 0.0
    %1837 = vmatpush1.msra.mxu0 0.0
    %1838 = vmatprep.subr.mxu0 0.0
    %1839 = vmatpush1.msra.mxu0 0.0
    %1840 = vmatprep.subr.mxu0 0.0
    %1841 = vmatpush1.msra.mxu0 0.0
    %1842 = vmatprep.subr.mxu0 0.0
    %1843 = vmatpush1.msra.mxu0 0.0
    %1844 = vmatprep.subr.mxu0 0.0
    %1845 = vmatpush1.msra.mxu0 0.0
    %1846 = vmatprep.subr.mxu0 0.0
    %1847 = vmatpush1.msra.mxu0 0.0
    %1848 = vmatprep.subr.mxu0 0.0
    %1849 = vmatpush1.msra.mxu0 0.0
    %1850 = vmatprep.subr.mxu0 0.0
    %1851 = vmatpush1.msra.mxu0 0.0
    %1852 = vmatprep.subr.mxu0 0.0
    %1853 = vmatpush1.msra.mxu0 0.0
    %1854 = vmatprep.subr.mxu0 0.0
    %1855 = vmatpush1.msra.mxu0 0.0
    %1856 = vmatprep.subr.mxu0 0.0
    %1857 = vmatpush1.msra.mxu0 0.0
    %1858 = vmatprep.subr.mxu0 0.0
    %1859 = vmatpush1.msra.mxu0 0.0
    %1860 = vmatprep.subr.mxu0 0.0
    %1861 = vmatpush1.msra.mxu0 0.0
    %1862 = vmatprep.subr.mxu0 0.0
    %1863 = vmatpush1.msra.mxu0 0.0
    %1864 = vmatprep.subr.mxu0 0.0
    %1865 = vmatpush1.msra.mxu0 0.0
    %1866 = vmatprep.subr.mxu0 0.0
    %1867 = vmatpush1.msra.mxu0 0.0
    %1868 = vmatprep.subr.mxu0 0.0
    %1869 = vmatpush1.msra.mxu0 0.0
    %1870 = vmatprep.subr.mxu0 0.0
    %1871 = vmatpush1.msra.mxu0 0.0
    %1872 = vmatprep.subr.mxu0 0.0
    %1873 = vmatpush1.msra.mxu0 0.0
    %1874 = vmatprep.subr.mxu0 0.0
    %1875 = vmatpush1.msra.mxu0 0.0
    %1876 = vmatprep.subr.mxu0 0.0
    %1877 = vmatpush1.msra.mxu0 0.0
    %1878 = vmatprep.subr.mxu0 0.0
    %1879 = vmatpush1.msra.mxu0 0.0
    %1880 = vmatprep.subr.mxu0 0.0
    %1881 = vmatpush1.msra.mxu0 0.0
    %1882 = vmatprep.subr.mxu0 0.0
    %1883 = vmatpush1.msra.mxu0 0.0
    %1884 = vmatprep.mubr.f32.mxu0 0.0
    %1885 = vmatmul.mubr.f32.gmra.mrb[0].mxu0 %v1815
    %v1886 = vpop.f32.mrb[0].mxu0
    %v1887 = vadd.f32 %v1813, %v1886
    %v1888 = vpop.f32.mrb[0].mxu0
    %1889 = vmatprep.mubr.f32.mxu0 0.0
    %1890 = vmatmul.mubr.f32.gmra.mrb[0].mxu0 %v1818
    %v1891 = vpop.f32.mrb[0].mxu0
    %v1892 = vadd.f32 %v1813, %v1891
    %v1893 = vpop.f32.mrb[0].mxu0
    %1894 = vdwg.mxu0
    %v1895 = vadd.f32 %v1887, %v364
    %v1896 = vadd.f32 %v1892, %v365
    %v1897 = vsel %vm320, %v1895, 0.0
    %1898 = vadd.xlane.f32.xlu0 %v1897
    %v1899 = vpop.xlane.xlu0 %1898
    %v1900 = vsel %vm320, %v1896, 0.0
    %1901 = vadd.xlane.f32.xlu0 %v1900
    %v1902 = vpop.xlane.xlu0 %1901
    %v1903 = vmul.f32 %v1899, %v333
    %v1904 = vmul.f32 %v1902, %v333
    %v1905 = vsub.f32 %v1895, %v1903
    %v1906 = vsub.f32 %v1896, %v1904
    %v1907 = vmul.f32 %v1905, %v1905
    %v1908 = vmul.f32 %v1906, %v1906
    %v1909 = vsel %vm320, %v1907, 0.0
    %1910 = vadd.xlane.f32.xlu0 %v1909
    %v1911 = vpop.xlane.xlu0 %1910
    %v1912 = vsel %vm320, %v1908, 0.0
    %1913 = vadd.xlane.f32.xlu0 %v1912
    %v1914 = vpop.xlane.xlu0 %1913
    %v1915 = vmul.f32 %v1911, %v333
    %v1916 = vmul.f32 %v1914, %v333
    %v1917 = vadd.f32 %v1915, 1e-12
    %v1918 = vadd.f32 %v1916, 1e-12
    %v1919 = vrsqrt.pop %v1917
    %v1920 = vrsqrt.pop %v1918
    %v1921 = vmul.f32 %v1905, %v1919
    %v1922 = vmul.f32 %v1906, %v1920
    %v1923 = vlaneseq
    %v1924 = vshrl.u32 %v1923, 7
    %v1925 = vsub.s32 2, %v1924
    %v1926 = vrot.slane %v366, %v1925
    %v1927 = vmul.f32 %v1921, %v1926
    %v1928 = vmul.f32 %v1922, %v1926
    %v1929 = vlaneseq
    %v1930 = vshrl.u32 %v1929, 7
    %v1931 = vsub.s32 3, %v1930
    %v1932 = vrot.slane %v366, %v1931
    %v1933 = vadd.f32 %v1927, %v1932
    %v1934 = vadd.f32 %v1928, %v1932
    %v1935 = vld [vmem:[%s7] sm:$0xff]
    %v1936 = vld [vmem:[%s7 + $0x8] sm:$0xff]
    %v1937 = vld [vmem:[%s7 + $0x10] sm:$0xff]
    %v1938 = vld [vmem:[%s7 + $0x18] sm:$0xff]
    %v1939 = vlaneseq
    %v1940 = vshrl.u32 %v1939, 7
    %v1941 = vsub.s32 4, %v1940
    %v1942 = vrot.slane %v366, %v1941
    %v1944 = vsel %vm320, %v1933, 0
    %v1947 = vsel %vm320, %v1934, 0
    %1949 = vmatprep.subr.mxu0 0.0
    %1950 = vmatpush1.msra.mxu0 %v1935
    %1951 = vmatprep.subr.mxu0 0.0
    %1952 = vmatpush1.msra.mxu0 %v1936
    %1953 = vmatprep.subr.mxu0 0.0
    %1954 = vmatpush1.msra.mxu0 %v1937
    %1955 = vmatprep.subr.mxu0 0.0
    %1956 = vmatpush1.msra.mxu0 %v1938
    %1957 = vmatprep.subr.mxu0 0.0
    %1958 = vmatpush1.msra.mxu0 0.0
    %1959 = vmatprep.subr.mxu0 0.0
    %1960 = vmatpush1.msra.mxu0 0.0
    %1961 = vmatprep.subr.mxu0 0.0
    %1962 = vmatpush1.msra.mxu0 0.0
    %1963 = vmatprep.subr.mxu0 0.0
    %1964 = vmatpush1.msra.mxu0 0.0
    %1965 = vmatprep.subr.mxu0 0.0
    %1966 = vmatpush1.msra.mxu0 0.0
    %1967 = vmatprep.subr.mxu0 0.0
    %1968 = vmatpush1.msra.mxu0 0.0
    %1969 = vmatprep.subr.mxu0 0.0
    %1970 = vmatpush1.msra.mxu0 0.0
    %1971 = vmatprep.subr.mxu0 0.0
    %1972 = vmatpush1.msra.mxu0 0.0
    %1973 = vmatprep.subr.mxu0 0.0
    %1974 = vmatpush1.msra.mxu0 0.0
    %1975 = vmatprep.subr.mxu0 0.0
    %1976 = vmatpush1.msra.mxu0 0.0
    %1977 = vmatprep.subr.mxu0 0.0
    %1978 = vmatpush1.msra.mxu0 0.0
    %1979 = vmatprep.subr.mxu0 0.0
    %1980 = vmatpush1.msra.mxu0 0.0
    %1981 = vmatprep.subr.mxu0 0.0
    %1982 = vmatpush1.msra.mxu0 0.0
    %1983 = vmatprep.subr.mxu0 0.0
    %1984 = vmatpush1.msra.mxu0 0.0
    %1985 = vmatprep.subr.mxu0 0.0
    %1986 = vmatpush1.msra.mxu0 0.0
    %1987 = vmatprep.subr.mxu0 0.0
    %1988 = vmatpush1.msra.mxu0 0.0
    %1989 = vmatprep.subr.mxu0 0.0
    %1990 = vmatpush1.msra.mxu0 0.0
    %1991 = vmatprep.subr.mxu0 0.0
    %1992 = vmatpush1.msra.mxu0 0.0
    %1993 = vmatprep.subr.mxu0 0.0
    %1994 = vmatpush1.msra.mxu0 0.0
    %1995 = vmatprep.subr.mxu0 0.0
    %1996 = vmatpush1.msra.mxu0 0.0
    %1997 = vmatprep.subr.mxu0 0.0
    %1998 = vmatpush1.msra.mxu0 0.0
    %1999 = vmatprep.subr.mxu0 0.0
    %2000 = vmatpush1.msra.mxu0 0.0
    %2001 = vmatprep.subr.mxu0 0.0
    %2002 = vmatpush1.msra.mxu0 0.0
    %2003 = vmatprep.subr.mxu0 0.0
    %2004 = vmatpush1.msra.mxu0 0.0
    %2005 = vmatprep.subr.mxu0 0.0
    %2006 = vmatpush1.msra.mxu0 0.0
    %2007 = vmatprep.subr.mxu0 0.0
    %2008 = vmatpush1.msra.mxu0 0.0
    %2009 = vmatprep.subr.mxu0 0.0
    %2010 = vmatpush1.msra.mxu0 0.0
    %2011 = vmatprep.subr.mxu0 0.0
    %2012 = vmatpush1.msra.mxu0 0.0
    %2013 = vmatprep.mubr.f32.mxu0 0.0
    %2014 = vmatmul.mubr.f32.gmra.mrb[0].mxu0 %v1944
    %v2015 = vpop.f32.mrb[0].mxu0
    %v2016 = vadd.f32 %v1942, %v2015
    %v2017 = vpop.f32.mrb[0].mxu0
    %2018 = vmatprep.mubr.f32.mxu0 0.0
    %2019 = vmatmul.mubr.f32.gmra.mrb[0].mxu0 %v1947
    %v2020 = vpop.f32.mrb[0].mxu0
    %v2021 = vadd.f32 %v1942, %v2020
    %v2022 = vpop.f32.mrb[0].mxu0
    %2023 = vdwg.mxu0
    %v2024 = vmul.f32 %v2016, 0.5
    %v2025 = vmul.f32 %v2021, 0.5
    %v2026 = vmul.f32 %v2016, 0.70710677
    %v2027 = vmul.f32 %v2021, 0.70710677
    %v2028 = verf.f32.pop %v2026
    %v2029 = verf.f32.pop %v2027
    %v2030 = vadd.f32 %v2028, 1.0
    %v2031 = vadd.f32 %v2029, 1.0
    %v2032 = vmul.f32 %v2024, %v2030
    %v2033 = vmul.f32 %v2025, %v2031
    %v2034 = vld [vmem:[%s8] sm:$0xff]
    %v2035 = vld [vmem:[%s8 + $0x8] sm:$0xff]
    %v2036 = vld [vmem:[%s8 + $0x10] sm:$0xff]
    %v2037 = vld [vmem:[%s8 + $0x18] sm:$0xff]
    %v2038 = vld [vmem:[%s8 + $0x20] sm:$0xff]
    %v2039 = vld [vmem:[%s8 + $0x28] sm:$0xff]
    %v2040 = vld [vmem:[%s8 + $0x30] sm:$0xff]
    %v2041 = vld [vmem:[%s8 + $0x38] sm:$0xff]
    %v2042 = vlaneseq
    %v2043 = vshrl.u32 %v2042, 7
    %v2044 = vsub.s32 5, %v2043
    %v2045 = vrot.slane %v366, %v2044
    %vm2046 = vcmask 523264
    %v2048 = vsel %vm2046, %v2032, 0
    %v2051 = vsel %vm2046, %v2033, 0
    %2053 = vmatprep.subr.mxu0 0.0
    %2054 = vmatpush1.msra.mxu0 %v2034
    %2055 = vmatprep.subr.mxu0 0.0
    %2056 = vmatpush1.msra.mxu0 %v2035
    %2057 = vmatprep.subr.mxu0 0.0
    %2058 = vmatpush1.msra.mxu0 %v2036
    %2059 = vmatprep.subr.mxu0 0.0
    %2060 = vmatpush1.msra.mxu0 %v2037
    %2061 = vmatprep.subr.mxu0 0.0
    %2062 = vmatpush1.msra.mxu0 %v2038
    %2063 = vmatprep.subr.mxu0 0.0
    %2064 = vmatpush1.msra.mxu0 %v2039
    %2065 = vmatprep.subr.mxu0 0.0
    %2066 = vmatpush1.msra.mxu0 %v2040
    %2067 = vmatprep.subr.mxu0 0.0
    %2068 = vmatpush1.msra.mxu0 %v2041
    %2069 = vmatprep.subr.mxu0 0.0
    %2070 = vmatpush1.msra.mxu0 0.0
    %2071 = vmatprep.subr.mxu0 0.0
    %2072 = vmatpush1.msra.mxu0 0.0
    %2073 = vmatprep.subr.mxu0 0.0
    %2074 = vmatpush1.msra.mxu0 0.0
    %2075 = vmatprep.subr.mxu0 0.0
    %2076 = vmatpush1.msra.mxu0 0.0
    %2077 = vmatprep.subr.mxu0 0.0
    %2078 = vmatpush1.msra.mxu0 0.0
    %2079 = vmatprep.subr.mxu0 0.0
    %2080 = vmatpush1.msra.mxu0 0.0
    %2081 = vmatprep.subr.mxu0 0.0
    %2082 = vmatpush1.msra.mxu0 0.0
    %2083 = vmatprep.subr.mxu0 0.0
    %2084 = vmatpush1.msra.mxu0 0.0
    %2085 = vmatprep.subr.mxu0 0.0
    %2086 = vmatpush1.msra.mxu0 0.0
    %2087 = vmatprep.subr.mxu0 0.0
    %2088 = vmatpush1.msra.mxu0 0.0
    %2089 = vmatprep.subr.mxu0 0.0
    %2090 = vmatpush1.msra.mxu0 0.0
    %2091 = vmatprep.subr.mxu0 0.0
    %2092 = vmatpush1.msra.mxu0 0.0
    %2093 = vmatprep.subr.mxu0 0.0
    %2094 = vmatpush1.msra.mxu0 0.0
    %2095 = vmatprep.subr.mxu0 0.0
    %2096 = vmatpush1.msra.mxu0 0.0
    %2097 = vmatprep.subr.mxu0 0.0
    %2098 = vmatpush1.msra.mxu0 0.0
    %2099 = vmatprep.subr.mxu0 0.0
    %2100 = vmatpush1.msra.mxu0 0.0
    %2101 = vmatprep.subr.mxu0 0.0
    %2102 = vmatpush1.msra.mxu0 0.0
    %2103 = vmatprep.subr.mxu0 0.0
    %2104 = vmatpush1.msra.mxu0 0.0
    %2105 = vmatprep.subr.mxu0 0.0
    %2106 = vmatpush1.msra.mxu0 0.0
    %2107 = vmatprep.subr.mxu0 0.0
    %2108 = vmatpush1.msra.mxu0 0.0
    %2109 = vmatprep.subr.mxu0 0.0
    %2110 = vmatpush1.msra.mxu0 0.0
    %2111 = vmatprep.subr.mxu0 0.0
    %2112 = vmatpush1.msra.mxu0 0.0
    %2113 = vmatprep.subr.mxu0 0.0
    %2114 = vmatpush1.msra.mxu0 0.0
    %2115 = vmatprep.subr.mxu0 0.0
    %2116 = vmatpush1.msra.mxu0 0.0
    %2117 = vmatprep.mubr.f32.mxu0 0.0
    %2118 = vmatmul.mubr.f32.gmra.mrb[0].mxu0 %v2048
    %v2119 = vpop.f32.mrb[0].mxu0
    %v2120 = vadd.f32 %v2045, %v2119
    %v2121 = vpop.f32.mrb[0].mxu0
    %2122 = vmatprep.mubr.f32.mxu0 0.0
    %2123 = vmatmul.mubr.f32.gmra.mrb[0].mxu0 %v2051
    %v2124 = vpop.f32.mrb[0].mxu0
    %v2125 = vadd.f32 %v2045, %v2124
    %v2126 = vpop.f32.mrb[0].mxu0
    %2127 = vdwg.mxu0
    %v2128 = vadd.f32 %v2120, %v1933
    %v2129 = vadd.f32 %v2125, %v1934
    %v2130 = vsel %vm320, %v2128, 0.0
    %2131 = vadd.xlane.f32.xlu0 %v2130
    %v2132 = vpop.xlane.xlu0 %2131
    %v2133 = vsel %vm320, %v2129, 0.0
    %2134 = vadd.xlane.f32.xlu0 %v2133
    %v2135 = vpop.xlane.xlu0 %2134
    %v2136 = vmul.f32 %v2132, %v333
    %v2137 = vmul.f32 %v2135, %v333
    %v2138 = vsub.f32 %v2128, %v2136
    %v2139 = vsub.f32 %v2129, %v2137
    %v2140 = vmul.f32 %v2138, %v2138
    %v2141 = vmul.f32 %v2139, %v2139
    %v2142 = vsel %vm320, %v2140, 0.0
    %2143 = vadd.xlane.f32.xlu0 %v2142
    %v2144 = vpop.xlane.xlu0 %2143
    %v2145 = vsel %vm320, %v2141, 0.0
    %2146 = vadd.xlane.f32.xlu0 %v2145
    %v2147 = vpop.xlane.xlu0 %2146
    %v2148 = vmul.f32 %v2144, %v333
    %v2149 = vmul.f32 %v2147, %v333
    %v2150 = vadd.f32 %v2148, 1e-12
    %v2151 = vadd.f32 %v2149, 1e-12
    %v2152 = vrsqrt.pop %v2150
    %v2153 = vrsqrt.pop %v2151
    %v2154 = vmul.f32 %v2138, %v2152
    %v2155 = vmul.f32 %v2139, %v2153
    %v2156 = vlaneseq
    %v2157 = vshrl.u32 %v2156, 7
    %v2158 = vsub.s32 6, %v2157
    %v2159 = vrot.slane %v366, %v2158
    %v2160 = vmul.f32 %v2154, %v2159
    %v2161 = vmul.f32 %v2155, %v2159
    %v2162 = vlaneseq
    %v2163 = vshrl.u32 %v2162, 7
    %v2164 = vsub.s32 7, %v2163
    %v2165 = vrot.slane %v366, %v2164
    %v2166 = vadd.f32 %v2160, %v2165
    %v2167 = vadd.f32 %v2161, %v2165
    %s2168 = scalar_lea.vmem %s9, 8
    %v2169 = vld [vmem:[%s2168] sm:$0xff]
    %s2170 = scalar_lea.vmem %s5, 32
    %v2171 = vld [vmem:[%s2170] sm:$0xff]
    %v2172 = vld [vmem:[%s2170 + $0x8] sm:$0xff]
    %v2173 = vld [vmem:[%s2170 + $0x10] sm:$0xff]
    %v2174 = vld [vmem:[%s2170 + $0x18] sm:$0xff]
    %v2175 = vlaneseq
    %v2176 = vshrl.u32 %v2175, 7
    %v2177 = vsub.s32 0, %v2176
    %v2178 = vrot.slane %v2169, %v2177
    %v2180 = vsel %vm320, %v2166, 0
    %v2183 = vsel %vm320, %v2167, 0
    %2185 = vmatprep.subr.mxu0 0.0
    %2186 = vmatpush1.msra.mxu0 %v2171
    %2187 = vmatprep.subr.mxu0 0.0
    %2188 = vmatpush1.msra.mxu0 %v2172
    %2189 = vmatprep.subr.mxu0 0.0
    %2190 = vmatpush1.msra.mxu0 %v2173
    %2191 = vmatprep.subr.mxu0 0.0
    %2192 = vmatpush1.msra.mxu0 %v2174
    %2193 = vmatprep.subr.mxu0 0.0
    %2194 = vmatpush1.msra.mxu0 0.0
    %2195 = vmatprep.subr.mxu0 0.0
    %2196 = vmatpush1.msra.mxu0 0.0
    %2197 = vmatprep.subr.mxu0 0.0
    %2198 = vmatpush1.msra.mxu0 0.0
    %2199 = vmatprep.subr.mxu0 0.0
    %2200 = vmatpush1.msra.mxu0 0.0
    %2201 = vmatprep.subr.mxu0 0.0
    %2202 = vmatpush1.msra.mxu0 0.0
    %2203 = vmatprep.subr.mxu0 0.0
    %2204 = vmatpush1.msra.mxu0 0.0
    %2205 = vmatprep.subr.mxu0 0.0
    %2206 = vmatpush1.msra.mxu0 0.0
    %2207 = vmatprep.subr.mxu0 0.0
    %2208 = vmatpush1.msra.mxu0 0.0
    %2209 = vmatprep.subr.mxu0 0.0
    %2210 = vmatpush1.msra.mxu0 0.0
    %2211 = vmatprep.subr.mxu0 0.0
    %2212 = vmatpush1.msra.mxu0 0.0
    %2213 = vmatprep.subr.mxu0 0.0
    %2214 = vmatpush1.msra.mxu0 0.0
    %2215 = vmatprep.subr.mxu0 0.0
    %2216 = vmatpush1.msra.mxu0 0.0
    %2217 = vmatprep.subr.mxu0 0.0
    %2218 = vmatpush1.msra.mxu0 0.0
    %2219 = vmatprep.subr.mxu0 0.0
    %2220 = vmatpush1.msra.mxu0 0.0
    %2221 = vmatprep.subr.mxu0 0.0
    %2222 = vmatpush1.msra.mxu0 0.0
    %2223 = vmatprep.subr.mxu0 0.0
    %2224 = vmatpush1.msra.mxu0 0.0
    %2225 = vmatprep.subr.mxu0 0.0
    %2226 = vmatpush1.msra.mxu0 0.0
    %2227 = vmatprep.subr.mxu0 0.0
    %2228 = vmatpush1.msra.mxu0 0.0
    %2229 = vmatprep.subr.mxu0 0.0
    %2230 = vmatpush1.msra.mxu0 0.0
    %2231 = vmatprep.subr.mxu0 0.0
    %2232 = vmatpush1.msra.mxu0 0.0
    %2233 = vmatprep.subr.mxu0 0.0
    %2234 = vmatpush1.msra.mxu0 0.0
    %2235 = vmatprep.subr.mxu0 0.0
    %2236 = vmatpush1.msra.mxu0 0.0
    %2237 = vmatprep.subr.mxu0 0.0
    %2238 = vmatpush1.msra.mxu0 0.0
    %2239 = vmatprep.subr.mxu0 0.0
    %2240 = vmatpush1.msra.mxu0 0.0
    %2241 = vmatprep.subr.mxu0 0.0
    %2242 = vmatpush1.msra.mxu0 0.0
    %2243 = vmatprep.subr.mxu0 0.0
    %2244 = vmatpush1.msra.mxu0 0.0
    %2245 = vmatprep.subr.mxu0 0.0
    %2246 = vmatpush1.msra.mxu0 0.0
    %2247 = vmatprep.subr.mxu0 0.0
    %2248 = vmatpush1.msra.mxu0 0.0
    %2249 = vmatprep.mubr.f32.mxu0 0.0
    %2250 = vmatmul.mubr.f32.gmra.mrb[0].mxu0 %v2180
    %v2251 = vpop.f32.mrb[0].mxu0
    %v2252 = vadd.f32 %v2178, %v2251
    %v2253 = vpop.f32.mrb[0].mxu0
    %2254 = vmatprep.mubr.f32.mxu0 0.0
    %2255 = vmatmul.mubr.f32.gmra.mrb[0].mxu0 %v2183
    %v2256 = vpop.f32.mrb[0].mxu0
    %v2257 = vadd.f32 %v2178, %v2256
    %v2258 = vpop.f32.mrb[0].mxu0
    %2259 = vdwg.mxu0
    %2261 = vrot.lane.b32.xlu0 %v2252, 96
    %v2262 = vpop.permute.xlu0 %2261
    %v2263 = vsel %vm459, %v2252, 0
    %v2265 = vsel %vm459, %v2262, 0
    %2267 = vmatprep.subr.mxu0 0.0
    %2268 = vmatpush1.xpose.msra.mxu0 %v2265
    %2269 = vmatprep.subr.mxu0 0.0
    %2270 = vmatpush1.xpose.msra.mxu0 0.0
    %2271 = vmatprep.subr.mxu0 0.0
    %2272 = vmatpush1.xpose.msra.mxu0 0.0
    %2273 = vmatprep.subr.mxu0 0.0
    %2274 = vmatpush1.xpose.msra.mxu0 0.0
    %2275 = vmatprep.subr.mxu0 0.0
    %2276 = vmatpush1.xpose.msra.mxu0 0.0
    %2277 = vmatprep.subr.mxu0 0.0
    %2278 = vmatpush1.xpose.msra.mxu0 0.0
    %2279 = vmatprep.subr.mxu0 0.0
    %2280 = vmatpush1.xpose.msra.mxu0 0.0
    %2281 = vmatprep.subr.mxu0 0.0
    %2282 = vmatpush1.xpose.msra.mxu0 0.0
    %2283 = vmatprep.subr.mxu0 0.0
    %2284 = vmatpush1.xpose.msra.mxu0 0.0
    %2285 = vmatprep.subr.mxu0 0.0
    %2286 = vmatpush1.xpose.msra.mxu0 0.0
    %2287 = vmatprep.subr.mxu0 0.0
    %2288 = vmatpush1.xpose.msra.mxu0 0.0
    %2289 = vmatprep.subr.mxu0 0.0
    %2290 = vmatpush1.xpose.msra.mxu0 0.0
    %2291 = vmatprep.subr.mxu0 0.0
    %2292 = vmatpush1.xpose.msra.mxu0 0.0
    %2293 = vmatprep.subr.mxu0 0.0
    %2294 = vmatpush1.xpose.msra.mxu0 0.0
    %2295 = vmatprep.subr.mxu0 0.0
    %2296 = vmatpush1.xpose.msra.mxu0 0.0
    %2297 = vmatprep.subr.mxu0 0.0
    %2298 = vmatpush1.xpose.msra.mxu0 0.0
    %2299 = vmatprep.subr.mxu0 0.0
    %2300 = vmatpush1.xpose.msra.mxu0 0.0
    %2301 = vmatprep.subr.mxu0 0.0
    %2302 = vmatpush1.xpose.msra.mxu0 0.0
    %2303 = vmatprep.subr.mxu0 0.0
    %2304 = vmatpush1.xpose.msra.mxu0 0.0
    %2305 = vmatprep.subr.mxu0 0.0
    %2306 = vmatpush1.xpose.msra.mxu0 0.0
    %2307 = vmatprep.subr.mxu0 0.0
    %2308 = vmatpush1.xpose.msra.mxu0 0.0
    %2309 = vmatprep.subr.mxu0 0.0
    %2310 = vmatpush1.xpose.msra.mxu0 0.0
    %2311 = vmatprep.subr.mxu0 0.0
    %2312 = vmatpush1.xpose.msra.mxu0 0.0
    %2313 = vmatprep.subr.mxu0 0.0
    %2314 = vmatpush1.xpose.msra.mxu0 0.0
    %2315 = vmatprep.subr.mxu0 0.0
    %2316 = vmatpush1.xpose.msra.mxu0 0.0
    %2317 = vmatprep.subr.mxu0 0.0
    %2318 = vmatpush1.xpose.msra.mxu0 0.0
    %2319 = vmatprep.subr.mxu0 0.0
    %2320 = vmatpush1.xpose.msra.mxu0 0.0
    %2321 = vmatprep.subr.mxu0 0.0
    %2322 = vmatpush1.xpose.msra.mxu0 0.0
    %2323 = vmatprep.subr.mxu0 0.0
    %2324 = vmatpush1.xpose.msra.mxu0 0.0
    %2325 = vmatprep.subr.mxu0 0.0
    %2326 = vmatpush1.xpose.msra.mxu0 0.0
    %2327 = vmatprep.subr.mxu0 0.0
    %2328 = vmatpush1.xpose.msra.mxu0 0.0
    %2329 = vmatprep.subr.mxu0 0.0
    %2330 = vmatpush1.xpose.msra.mxu0 0.0
    %2331 = vmatprep.mubr.f32.mxu0 0.0
    %2332 = vmatmul.mubr.f32.gmra.mrb[0].mxu0 %v2263
    %v2333 = vpop.f32.mrb[0].mxu0
    %v2334 = vadd.f32 0.0, %v2333
    %v2335 = vpop.f32.mrb[0].mxu0
    %2336 = vdwg.mxu0
    %2338 = vrot.lane.b32.xlu0 %v2257, 96
    %v2339 = vpop.permute.xlu0 %2338
    %v2340 = vsel %vm459, %v2257, 0
    %v2342 = vsel %vm459, %v2339, 0
    %2344 = vmatprep.subr.mxu0 0.0
    %2345 = vmatpush1.xpose.msra.mxu0 %v2342
    %2346 = vmatprep.subr.mxu0 0.0
    %2347 = vmatpush1.xpose.msra.mxu0 0.0
    %2348 = vmatprep.subr.mxu0 0.0
    %2349 = vmatpush1.xpose.msra.mxu0 0.0
    %2350 = vmatprep.subr.mxu0 0.0
    %2351 = vmatpush1.xpose.msra.mxu0 0.0
    %2352 = vmatprep.subr.mxu0 0.0
    %2353 = vmatpush1.xpose.msra.mxu0 0.0
    %2354 = vmatprep.subr.mxu0 0.0
    %2355 = vmatpush1.xpose.msra.mxu0 0.0
    %2356 = vmatprep.subr.mxu0 0.0
    %2357 = vmatpush1.xpose.msra.mxu0 0.0
    %2358 = vmatprep.subr.mxu0 0.0
    %2359 = vmatpush1.xpose.msra.mxu0 0.0
    %2360 = vmatprep.subr.mxu0 0.0
    %2361 = vmatpush1.xpose.msra.mxu0 0.0
    %2362 = vmatprep.subr.mxu0 0.0
    %2363 = vmatpush1.xpose.msra.mxu0 0.0
    %2364 = vmatprep.subr.mxu0 0.0
    %2365 = vmatpush1.xpose.msra.mxu0 0.0
    %2366 = vmatprep.subr.mxu0 0.0
    %2367 = vmatpush1.xpose.msra.mxu0 0.0
    %2368 = vmatprep.subr.mxu0 0.0
    %2369 = vmatpush1.xpose.msra.mxu0 0.0
    %2370 = vmatprep.subr.mxu0 0.0
    %2371 = vmatpush1.xpose.msra.mxu0 0.0
    %2372 = vmatprep.subr.mxu0 0.0
    %2373 = vmatpush1.xpose.msra.mxu0 0.0
    %2374 = vmatprep.subr.mxu0 0.0
    %2375 = vmatpush1.xpose.msra.mxu0 0.0
    %2376 = vmatprep.subr.mxu0 0.0
    %2377 = vmatpush1.xpose.msra.mxu0 0.0
    %2378 = vmatprep.subr.mxu0 0.0
    %2379 = vmatpush1.xpose.msra.mxu0 0.0
    %2380 = vmatprep.subr.mxu0 0.0
    %2381 = vmatpush1.xpose.msra.mxu0 0.0
    %2382 = vmatprep.subr.mxu0 0.0
    %2383 = vmatpush1.xpose.msra.mxu0 0.0
    %2384 = vmatprep.subr.mxu0 0.0
    %2385 = vmatpush1.xpose.msra.mxu0 0.0
    %2386 = vmatprep.subr.mxu0 0.0
    %2387 = vmatpush1.xpose.msra.mxu0 0.0
    %2388 = vmatprep.subr.mxu0 0.0
    %2389 = vmatpush1.xpose.msra.mxu0 0.0
    %2390 = vmatprep.subr.mxu0 0.0
    %2391 = vmatpush1.xpose.msra.mxu0 0.0
    %2392 = vmatprep.subr.mxu0 0.0
    %2393 = vmatpush1.xpose.msra.mxu0 0.0
    %2394 = vmatprep.subr.mxu0 0.0
    %2395 = vmatpush1.xpose.msra.mxu0 0.0
    %2396 = vmatprep.subr.mxu0 0.0
    %2397 = vmatpush1.xpose.msra.mxu0 0.0
    %2398 = vmatprep.subr.mxu0 0.0
    %2399 = vmatpush1.xpose.msra.mxu0 0.0
    %2400 = vmatprep.subr.mxu0 0.0
    %2401 = vmatpush1.xpose.msra.mxu0 0.0
    %2402 = vmatprep.subr.mxu0 0.0
    %2403 = vmatpush1.xpose.msra.mxu0 0.0
    %2404 = vmatprep.subr.mxu0 0.0
    %2405 = vmatpush1.xpose.msra.mxu0 0.0
    %2406 = vmatprep.subr.mxu0 0.0
    %2407 = vmatpush1.xpose.msra.mxu0 0.0
    %2408 = vmatprep.mubr.f32.mxu0 0.0
    %2409 = vmatmul.mubr.f32.gmra.mrb[0].mxu0 %v2340
    %v2410 = vpop.f32.mrb[0].mxu0
    %v2411 = vadd.f32 0.0, %v2410
    %v2412 = vpop.f32.mrb[0].mxu0
    %2413 = vdwg.mxu0
    %v2414 = vsel %vm459, %v2334, -inf
    %2415 = vmax.xlane.f32.xlu0 %v2414
    %v2416 = vpop.xlane.xlu0 %2415
    %v2417 = vsel %vm459, %v2411, -inf
    %2418 = vmax.xlane.f32.xlu0 %v2417
    %v2419 = vpop.xlane.xlu0 %2418
    %v2420 = vsub.f32 %v2334, %v2416
    %v2421 = vsub.f32 %v2411, %v2419
    %v2422 = vmul.f32 %v2420, 1.442695
    %v2423 = vpow.pop %v2422
    %v2424 = vmul.f32 %v2421, 1.442695
    %v2425 = vpow.pop %v2424
    %v2426 = vsel %vm459, %v2423, 0.0
    %2427 = vadd.xlane.f32.xlu0 %v2426
    %v2428 = vpop.xlane.xlu0 %2427
    %v2429 = vsel %vm459, %v2425, 0.0
    %2430 = vadd.xlane.f32.xlu0 %v2429
    %v2431 = vpop.xlane.xlu0 %2430
    %v2432 = vrcp.pop %v2428
    %v2433 = vmul.f32 %v2423, %v2432
    %v2434 = vrcp.pop %v2431
    %v2435 = vmul.f32 %v2425, %v2434
    %2436 = vrot.lane.b32.xlu0 %v2252, 64
    %v2437 = vpop.permute.xlu0 %2436
    %v2440 = vsel %vm459, %v2433, 0
    %2442 = vmatprep.subr.mxu0 0.0
    %2443 = vmatpush1.msra.mxu0 %v2437
    %2444 = vmatprep.subr.mxu0 0.0
    %2445 = vmatpush1.msra.mxu0 0.0
    %2446 = vmatprep.subr.mxu0 0.0
    %2447 = vmatpush1.msra.mxu0 0.0
    %2448 = vmatprep.subr.mxu0 0.0
    %2449 = vmatpush1.msra.mxu0 0.0
    %2450 = vmatprep.subr.mxu0 0.0
    %2451 = vmatpush1.msra.mxu0 0.0
    %2452 = vmatprep.subr.mxu0 0.0
    %2453 = vmatpush1.msra.mxu0 0.0
    %2454 = vmatprep.subr.mxu0 0.0
    %2455 = vmatpush1.msra.mxu0 0.0
    %2456 = vmatprep.subr.mxu0 0.0
    %2457 = vmatpush1.msra.mxu0 0.0
    %2458 = vmatprep.subr.mxu0 0.0
    %2459 = vmatpush1.msra.mxu0 0.0
    %2460 = vmatprep.subr.mxu0 0.0
    %2461 = vmatpush1.msra.mxu0 0.0
    %2462 = vmatprep.subr.mxu0 0.0
    %2463 = vmatpush1.msra.mxu0 0.0
    %2464 = vmatprep.subr.mxu0 0.0
    %2465 = vmatpush1.msra.mxu0 0.0
    %2466 = vmatprep.subr.mxu0 0.0
    %2467 = vmatpush1.msra.mxu0 0.0
    %2468 = vmatprep.subr.mxu0 0.0
    %2469 = vmatpush1.msra.mxu0 0.0
    %2470 = vmatprep.subr.mxu0 0.0
    %2471 = vmatpush1.msra.mxu0 0.0
    %2472 = vmatprep.subr.mxu0 0.0
    %2473 = vmatpush1.msra.mxu0 0.0
    %2474 = vmatprep.subr.mxu0 0.0
    %2475 = vmatpush1.msra.mxu0 0.0
    %2476 = vmatprep.subr.mxu0 0.0
    %2477 = vmatpush1.msra.mxu0 0.0
    %2478 = vmatprep.subr.mxu0 0.0
    %2479 = vmatpush1.msra.mxu0 0.0
    %2480 = vmatprep.subr.mxu0 0.0
    %2481 = vmatpush1.msra.mxu0 0.0
    %2482 = vmatprep.subr.mxu0 0.0
    %2483 = vmatpush1.msra.mxu0 0.0
    %2484 = vmatprep.subr.mxu0 0.0
    %2485 = vmatpush1.msra.mxu0 0.0
    %2486 = vmatprep.subr.mxu0 0.0
    %2487 = vmatpush1.msra.mxu0 0.0
    %2488 = vmatprep.subr.mxu0 0.0
    %2489 = vmatpush1.msra.mxu0 0.0
    %2490 = vmatprep.subr.mxu0 0.0
    %2491 = vmatpush1.msra.mxu0 0.0
    %2492 = vmatprep.subr.mxu0 0.0
    %2493 = vmatpush1.msra.mxu0 0.0
    %2494 = vmatprep.subr.mxu0 0.0
    %2495 = vmatpush1.msra.mxu0 0.0
    %2496 = vmatprep.subr.mxu0 0.0
    %2497 = vmatpush1.msra.mxu0 0.0
    %2498 = vmatprep.subr.mxu0 0.0
    %2499 = vmatpush1.msra.mxu0 0.0
    %2500 = vmatprep.subr.mxu0 0.0
    %2501 = vmatpush1.msra.mxu0 0.0
    %2502 = vmatprep.subr.mxu0 0.0
    %2503 = vmatpush1.msra.mxu0 0.0
    %2504 = vmatprep.subr.mxu0 0.0
    %2505 = vmatpush1.msra.mxu0 0.0
    %2506 = vmatprep.mubr.f32.mxu0 0.0
    %2507 = vmatmul.mubr.f32.gmra.mrb[0].mxu0 %v2440
    %v2508 = vpop.f32.mrb[0].mxu0
    %v2509 = vadd.f32 0.0, %v2508
    %v2510 = vpop.f32.mrb[0].mxu0
    %2511 = vdwg.mxu0
    %2512 = vrot.lane.b32.xlu0 %v2257, 64
    %v2513 = vpop.permute.xlu0 %2512
    %v2516 = vsel %vm459, %v2435, 0
    %2518 = vmatprep.subr.mxu0 0.0
    %2519 = vmatpush1.msra.mxu0 %v2513
    %2520 = vmatprep.subr.mxu0 0.0
    %2521 = vmatpush1.msra.mxu0 0.0
    %2522 = vmatprep.subr.mxu0 0.0
    %2523 = vmatpush1.msra.mxu0 0.0
    %2524 = vmatprep.subr.mxu0 0.0
    %2525 = vmatpush1.msra.mxu0 0.0
    %2526 = vmatprep.subr.mxu0 0.0
    %2527 = vmatpush1.msra.mxu0 0.0
    %2528 = vmatprep.subr.mxu0 0.0
    %2529 = vmatpush1.msra.mxu0 0.0
    %2530 = vmatprep.subr.mxu0 0.0
    %2531 = vmatpush1.msra.mxu0 0.0
    %2532 = vmatprep.subr.mxu0 0.0
    %2533 = vmatpush1.msra.mxu0 0.0
    %2534 = vmatprep.subr.mxu0 0.0
    %2535 = vmatpush1.msra.mxu0 0.0
    %2536 = vmatprep.subr.mxu0 0.0
    %2537 = vmatpush1.msra.mxu0 0.0
    %2538 = vmatprep.subr.mxu0 0.0
    %2539 = vmatpush1.msra.mxu0 0.0
    %2540 = vmatprep.subr.mxu0 0.0
    %2541 = vmatpush1.msra.mxu0 0.0
    %2542 = vmatprep.subr.mxu0 0.0
    %2543 = vmatpush1.msra.mxu0 0.0
    %2544 = vmatprep.subr.mxu0 0.0
    %2545 = vmatpush1.msra.mxu0 0.0
    %2546 = vmatprep.subr.mxu0 0.0
    %2547 = vmatpush1.msra.mxu0 0.0
    %2548 = vmatprep.subr.mxu0 0.0
    %2549 = vmatpush1.msra.mxu0 0.0
    %2550 = vmatprep.subr.mxu0 0.0
    %2551 = vmatpush1.msra.mxu0 0.0
    %2552 = vmatprep.subr.mxu0 0.0
    %2553 = vmatpush1.msra.mxu0 0.0
    %2554 = vmatprep.subr.mxu0 0.0
    %2555 = vmatpush1.msra.mxu0 0.0
    %2556 = vmatprep.subr.mxu0 0.0
    %2557 = vmatpush1.msra.mxu0 0.0
    %2558 = vmatprep.subr.mxu0 0.0
    %2559 = vmatpush1.msra.mxu0 0.0
    %2560 = vmatprep.subr.mxu0 0.0
    %2561 = vmatpush1.msra.mxu0 0.0
    %2562 = vmatprep.subr.mxu0 0.0
    %2563 = vmatpush1.msra.mxu0 0.0
    %2564 = vmatprep.subr.mxu0 0.0
    %2565 = vmatpush1.msra.mxu0 0.0
    %2566 = vmatprep.subr.mxu0 0.0
    %2567 = vmatpush1.msra.mxu0 0.0
    %2568 = vmatprep.subr.mxu0 0.0
    %2569 = vmatpush1.msra.mxu0 0.0
    %2570 = vmatprep.subr.mxu0 0.0
    %2571 = vmatpush1.msra.mxu0 0.0
    %2572 = vmatprep.subr.mxu0 0.0
    %2573 = vmatpush1.msra.mxu0 0.0
    %2574 = vmatprep.subr.mxu0 0.0
    %2575 = vmatpush1.msra.mxu0 0.0
    %2576 = vmatprep.subr.mxu0 0.0
    %2577 = vmatpush1.msra.mxu0 0.0
    %2578 = vmatprep.subr.mxu0 0.0
    %2579 = vmatpush1.msra.mxu0 0.0
    %2580 = vmatprep.subr.mxu0 0.0
    %2581 = vmatpush1.msra.mxu0 0.0
    %2582 = vmatprep.mubr.f32.mxu0 0.0
    %2583 = vmatmul.mubr.f32.gmra.mrb[0].mxu0 %v2516
    %v2584 = vpop.f32.mrb[0].mxu0
    %v2585 = vadd.f32 0.0, %v2584
    %v2586 = vpop.f32.mrb[0].mxu0
    %2587 = vdwg.mxu0
    %2588 = vrot.lane.b32.xlu0 %v2252, 120
    %v2589 = vpop.permute.xlu0 %2588
    %2590 = vrot.lane.b32.xlu0 %v2252, 88
    %v2591 = vpop.permute.xlu0 %2590
    %v2592 = vsel %vm459, %v2589, 0
    %v2594 = vsel %vm459, %v2591, 0
    %2596 = vmatprep.subr.mxu0 0.0
    %2597 = vmatpush1.xpose.msra.mxu0 %v2594
    %2598 = vmatprep.subr.mxu0 0.0
    %2599 = vmatpush1.xpose.msra.mxu0 0.0
    %2600 = vmatprep.subr.mxu0 0.0
    %2601 = vmatpush1.xpose.msra.mxu0 0.0
    %2602 = vmatprep.subr.mxu0 0.0
    %2603 = vmatpush1.xpose.msra.mxu0 0.0
    %2604 = vmatprep.subr.mxu0 0.0
    %2605 = vmatpush1.xpose.msra.mxu0 0.0
    %2606 = vmatprep.subr.mxu0 0.0
    %2607 = vmatpush1.xpose.msra.mxu0 0.0
    %2608 = vmatprep.subr.mxu0 0.0
    %2609 = vmatpush1.xpose.msra.mxu0 0.0
    %2610 = vmatprep.subr.mxu0 0.0
    %2611 = vmatpush1.xpose.msra.mxu0 0.0
    %2612 = vmatprep.subr.mxu0 0.0
    %2613 = vmatpush1.xpose.msra.mxu0 0.0
    %2614 = vmatprep.subr.mxu0 0.0
    %2615 = vmatpush1.xpose.msra.mxu0 0.0
    %2616 = vmatprep.subr.mxu0 0.0
    %2617 = vmatpush1.xpose.msra.mxu0 0.0
    %2618 = vmatprep.subr.mxu0 0.0
    %2619 = vmatpush1.xpose.msra.mxu0 0.0
    %2620 = vmatprep.subr.mxu0 0.0
    %2621 = vmatpush1.xpose.msra.mxu0 0.0
    %2622 = vmatprep.subr.mxu0 0.0
    %2623 = vmatpush1.xpose.msra.mxu0 0.0
    %2624 = vmatprep.subr.mxu0 0.0
    %2625 = vmatpush1.xpose.msra.mxu0 0.0
    %2626 = vmatprep.subr.mxu0 0.0
    %2627 = vmatpush1.xpose.msra.mxu0 0.0
    %2628 = vmatprep.subr.mxu0 0.0
    %2629 = vmatpush1.xpose.msra.mxu0 0.0
    %2630 = vmatprep.subr.mxu0 0.0
    %2631 = vmatpush1.xpose.msra.mxu0 0.0
    %2632 = vmatprep.subr.mxu0 0.0
    %2633 = vmatpush1.xpose.msra.mxu0 0.0
    %2634 = vmatprep.subr.mxu0 0.0
    %2635 = vmatpush1.xpose.msra.mxu0 0.0
    %2636 = vmatprep.subr.mxu0 0.0
    %2637 = vmatpush1.xpose.msra.mxu0 0.0
    %2638 = vmatprep.subr.mxu0 0.0
    %2639 = vmatpush1.xpose.msra.mxu0 0.0
    %2640 = vmatprep.subr.mxu0 0.0
    %2641 = vmatpush1.xpose.msra.mxu0 0.0
    %2642 = vmatprep.subr.mxu0 0.0
    %2643 = vmatpush1.xpose.msra.mxu0 0.0
    %2644 = vmatprep.subr.mxu0 0.0
    %2645 = vmatpush1.xpose.msra.mxu0 0.0
    %2646 = vmatprep.subr.mxu0 0.0
    %2647 = vmatpush1.xpose.msra.mxu0 0.0
    %2648 = vmatprep.subr.mxu0 0.0
    %2649 = vmatpush1.xpose.msra.mxu0 0.0
    %2650 = vmatprep.subr.mxu0 0.0
    %2651 = vmatpush1.xpose.msra.mxu0 0.0
    %2652 = vmatprep.subr.mxu0 0.0
    %2653 = vmatpush1.xpose.msra.mxu0 0.0
    %2654 = vmatprep.subr.mxu0 0.0
    %2655 = vmatpush1.xpose.msra.mxu0 0.0
    %2656 = vmatprep.subr.mxu0 0.0
    %2657 = vmatpush1.xpose.msra.mxu0 0.0
    %2658 = vmatprep.subr.mxu0 0.0
    %2659 = vmatpush1.xpose.msra.mxu0 0.0
    %2660 = vmatprep.mubr.f32.mxu0 0.0
    %2661 = vmatmul.mubr.f32.gmra.mrb[0].mxu0 %v2592
    %v2662 = vpop.f32.mrb[0].mxu0
    %v2663 = vadd.f32 0.0, %v2662
    %v2664 = vpop.f32.mrb[0].mxu0
    %2665 = vdwg.mxu0
    %2666 = vrot.lane.b32.xlu0 %v2257, 120
    %v2667 = vpop.permute.xlu0 %2666
    %2668 = vrot.lane.b32.xlu0 %v2257, 88
    %v2669 = vpop.permute.xlu0 %2668
    %v2670 = vsel %vm459, %v2667, 0
    %v2672 = vsel %vm459, %v2669, 0
    %2674 = vmatprep.subr.mxu0 0.0
    %2675 = vmatpush1.xpose.msra.mxu0 %v2672
    %2676 = vmatprep.subr.mxu0 0.0
    %2677 = vmatpush1.xpose.msra.mxu0 0.0
    %2678 = vmatprep.subr.mxu0 0.0
    %2679 = vmatpush1.xpose.msra.mxu0 0.0
    %2680 = vmatprep.subr.mxu0 0.0
    %2681 = vmatpush1.xpose.msra.mxu0 0.0
    %2682 = vmatprep.subr.mxu0 0.0
    %2683 = vmatpush1.xpose.msra.mxu0 0.0
    %2684 = vmatprep.subr.mxu0 0.0
    %2685 = vmatpush1.xpose.msra.mxu0 0.0
    %2686 = vmatprep.subr.mxu0 0.0
    %2687 = vmatpush1.xpose.msra.mxu0 0.0
    %2688 = vmatprep.subr.mxu0 0.0
    %2689 = vmatpush1.xpose.msra.mxu0 0.0
    %2690 = vmatprep.subr.mxu0 0.0
    %2691 = vmatpush1.xpose.msra.mxu0 0.0
    %2692 = vmatprep.subr.mxu0 0.0
    %2693 = vmatpush1.xpose.msra.mxu0 0.0
    %2694 = vmatprep.subr.mxu0 0.0
    %2695 = vmatpush1.xpose.msra.mxu0 0.0
    %2696 = vmatprep.subr.mxu0 0.0
    %2697 = vmatpush1.xpose.msra.mxu0 0.0
    %2698 = vmatprep.subr.mxu0 0.0
    %2699 = vmatpush1.xpose.msra.mxu0 0.0
    %2700 = vmatprep.subr.mxu0 0.0
    %2701 = vmatpush1.xpose.msra.mxu0 0.0
    %2702 = vmatprep.subr.mxu0 0.0
    %2703 = vmatpush1.xpose.msra.mxu0 0.0
    %2704 = vmatprep.subr.mxu0 0.0
    %2705 = vmatpush1.xpose.msra.mxu0 0.0
    %2706 = vmatprep.subr.mxu0 0.0
    %2707 = vmatpush1.xpose.msra.mxu0 0.0
    %2708 = vmatprep.subr.mxu0 0.0
    %2709 = vmatpush1.xpose.msra.mxu0 0.0
    %2710 = vmatprep.subr.mxu0 0.0
    %2711 = vmatpush1.xpose.msra.mxu0 0.0
    %2712 = vmatprep.subr.mxu0 0.0
    %2713 = vmatpush1.xpose.msra.mxu0 0.0
    %2714 = vmatprep.subr.mxu0 0.0
    %2715 = vmatpush1.xpose.msra.mxu0 0.0
    %2716 = vmatprep.subr.mxu0 0.0
    %2717 = vmatpush1.xpose.msra.mxu0 0.0
    %2718 = vmatprep.subr.mxu0 0.0
    %2719 = vmatpush1.xpose.msra.mxu0 0.0
    %2720 = vmatprep.subr.mxu0 0.0
    %2721 = vmatpush1.xpose.msra.mxu0 0.0
    %2722 = vmatprep.subr.mxu0 0.0
    %2723 = vmatpush1.xpose.msra.mxu0 0.0
    %2724 = vmatprep.subr.mxu0 0.0
    %2725 = vmatpush1.xpose.msra.mxu0 0.0
    %2726 = vmatprep.subr.mxu0 0.0
    %2727 = vmatpush1.xpose.msra.mxu0 0.0
    %2728 = vmatprep.subr.mxu0 0.0
    %2729 = vmatpush1.xpose.msra.mxu0 0.0
    %2730 = vmatprep.subr.mxu0 0.0
    %2731 = vmatpush1.xpose.msra.mxu0 0.0
    %2732 = vmatprep.subr.mxu0 0.0
    %2733 = vmatpush1.xpose.msra.mxu0 0.0
    %2734 = vmatprep.subr.mxu0 0.0
    %2735 = vmatpush1.xpose.msra.mxu0 0.0
    %2736 = vmatprep.subr.mxu0 0.0
    %2737 = vmatpush1.xpose.msra.mxu0 0.0
    %2738 = vmatprep.mubr.f32.mxu0 0.0
    %2739 = vmatmul.mubr.f32.gmra.mrb[0].mxu0 %v2670
    %v2740 = vpop.f32.mrb[0].mxu0
    %v2741 = vadd.f32 0.0, %v2740
    %v2742 = vpop.f32.mrb[0].mxu0
    %2743 = vdwg.mxu0
    %v2744 = vsel %vm459, %v2663, -inf
    %2745 = vmax.xlane.f32.xlu0 %v2744
    %v2746 = vpop.xlane.xlu0 %2745
    %v2747 = vsel %vm459, %v2741, -inf
    %2748 = vmax.xlane.f32.xlu0 %v2747
    %v2749 = vpop.xlane.xlu0 %2748
    %v2750 = vsub.f32 %v2663, %v2746
    %v2751 = vsub.f32 %v2741, %v2749
    %v2752 = vmul.f32 %v2750, 1.442695
    %v2753 = vpow.pop %v2752
    %v2754 = vmul.f32 %v2751, 1.442695
    %v2755 = vpow.pop %v2754
    %v2756 = vsel %vm459, %v2753, 0.0
    %2757 = vadd.xlane.f32.xlu0 %v2756
    %v2758 = vpop.xlane.xlu0 %2757
    %v2759 = vsel %vm459, %v2755, 0.0
    %2760 = vadd.xlane.f32.xlu0 %v2759
    %v2761 = vpop.xlane.xlu0 %2760
    %v2762 = vrcp.pop %v2758
    %v2763 = vmul.f32 %v2753, %v2762
    %v2764 = vrcp.pop %v2761
    %v2765 = vmul.f32 %v2755, %v2764
    %2766 = vrot.lane.b32.xlu0 %v2252, 56
    %v2767 = vpop.permute.xlu0 %2766
    %v2770 = vsel %vm459, %v2763, 0
    %2772 = vmatprep.subr.mxu0 0.0
    %2773 = vmatpush1.msra.mxu0 %v2767
    %2774 = vmatprep.subr.mxu0 0.0
    %2775 = vmatpush1.msra.mxu0 0.0
    %2776 = vmatprep.subr.mxu0 0.0
    %2777 = vmatpush1.msra.mxu0 0.0
    %2778 = vmatprep.subr.mxu0 0.0
    %2779 = vmatpush1.msra.mxu0 0.0
    %2780 = vmatprep.subr.mxu0 0.0
    %2781 = vmatpush1.msra.mxu0 0.0
    %2782 = vmatprep.subr.mxu0 0.0
    %2783 = vmatpush1.msra.mxu0 0.0
    %2784 = vmatprep.subr.mxu0 0.0
    %2785 = vmatpush1.msra.mxu0 0.0
    %2786 = vmatprep.subr.mxu0 0.0
    %2787 = vmatpush1.msra.mxu0 0.0
    %2788 = vmatprep.subr.mxu0 0.0
    %2789 = vmatpush1.msra.mxu0 0.0
    %2790 = vmatprep.subr.mxu0 0.0
    %2791 = vmatpush1.msra.mxu0 0.0
    %2792 = vmatprep.subr.mxu0 0.0
    %2793 = vmatpush1.msra.mxu0 0.0
    %2794 = vmatprep.subr.mxu0 0.0
    %2795 = vmatpush1.msra.mxu0 0.0
    %2796 = vmatprep.subr.mxu0 0.0
    %2797 = vmatpush1.msra.mxu0 0.0
    %2798 = vmatprep.subr.mxu0 0.0
    %2799 = vmatpush1.msra.mxu0 0.0
    %2800 = vmatprep.subr.mxu0 0.0
    %2801 = vmatpush1.msra.mxu0 0.0
    %2802 = vmatprep.subr.mxu0 0.0
    %2803 = vmatpush1.msra.mxu0 0.0
    %2804 = vmatprep.subr.mxu0 0.0
    %2805 = vmatpush1.msra.mxu0 0.0
    %2806 = vmatprep.subr.mxu0 0.0
    %2807 = vmatpush1.msra.mxu0 0.0
    %2808 = vmatprep.subr.mxu0 0.0
    %2809 = vmatpush1.msra.mxu0 0.0
    %2810 = vmatprep.subr.mxu0 0.0
    %2811 = vmatpush1.msra.mxu0 0.0
    %2812 = vmatprep.subr.mxu0 0.0
    %2813 = vmatpush1.msra.mxu0 0.0
    %2814 = vmatprep.subr.mxu0 0.0
    %2815 = vmatpush1.msra.mxu0 0.0
    %2816 = vmatprep.subr.mxu0 0.0
    %2817 = vmatpush1.msra.mxu0 0.0
    %2818 = vmatprep.subr.mxu0 0.0
    %2819 = vmatpush1.msra.mxu0 0.0
    %2820 = vmatprep.subr.mxu0 0.0
    %2821 = vmatpush1.msra.mxu0 0.0
    %2822 = vmatprep.subr.mxu0 0.0
    %2823 = vmatpush1.msra.mxu0 0.0
    %2824 = vmatprep.subr.mxu0 0.0
    %2825 = vmatpush1.msra.mxu0 0.0
    %2826 = vmatprep.subr.mxu0 0.0
    %2827 = vmatpush1.msra.mxu0 0.0
    %2828 = vmatprep.subr.mxu0 0.0
    %2829 = vmatpush1.msra.mxu0 0.0
    %2830 = vmatprep.subr.mxu0 0.0
    %2831 = vmatpush1.msra.mxu0 0.0
    %2832 = vmatprep.subr.mxu0 0.0
    %2833 = vmatpush1.msra.mxu0 0.0
    %2834 = vmatprep.subr.mxu0 0.0
    %2835 = vmatpush1.msra.mxu0 0.0
    %2836 = vmatprep.mubr.f32.mxu0 0.0
    %2837 = vmatmul.mubr.f32.gmra.mrb[0].mxu0 %v2770
    %v2838 = vpop.f32.mrb[0].mxu0
    %v2839 = vadd.f32 0.0, %v2838
    %v2840 = vpop.f32.mrb[0].mxu0
    %2841 = vdwg.mxu0
    %2842 = vrot.lane.b32.xlu0 %v2257, 56
    %v2843 = vpop.permute.xlu0 %2842
    %v2846 = vsel %vm459, %v2765, 0
    %2848 = vmatprep.subr.mxu0 0.0
    %2849 = vmatpush1.msra.mxu0 %v2843
    %2850 = vmatprep.subr.mxu0 0.0
    %2851 = vmatpush1.msra.mxu0 0.0
    %2852 = vmatprep.subr.mxu0 0.0
    %2853 = vmatpush1.msra.mxu0 0.0
    %2854 = vmatprep.subr.mxu0 0.0
    %2855 = vmatpush1.msra.mxu0 0.0
    %2856 = vmatprep.subr.mxu0 0.0
    %2857 = vmatpush1.msra.mxu0 0.0
    %2858 = vmatprep.subr.mxu0 0.0
    %2859 = vmatpush1.msra.mxu0 0.0
    %2860 = vmatprep.subr.mxu0 0.0
    %2861 = vmatpush1.msra.mxu0 0.0
    %2862 = vmatprep.subr.mxu0 0.0
    %2863 = vmatpush1.msra.mxu0 0.0
    %2864 = vmatprep.subr.mxu0 0.0
    %2865 = vmatpush1.msra.mxu0 0.0
    %2866 = vmatprep.subr.mxu0 0.0
    %2867 = vmatpush1.msra.mxu0 0.0
    %2868 = vmatprep.subr.mxu0 0.0
    %2869 = vmatpush1.msra.mxu0 0.0
    %2870 = vmatprep.subr.mxu0 0.0
    %2871 = vmatpush1.msra.mxu0 0.0
    %2872 = vmatprep.subr.mxu0 0.0
    %2873 = vmatpush1.msra.mxu0 0.0
    %2874 = vmatprep.subr.mxu0 0.0
    %2875 = vmatpush1.msra.mxu0 0.0
    %2876 = vmatprep.subr.mxu0 0.0
    %2877 = vmatpush1.msra.mxu0 0.0
    %2878 = vmatprep.subr.mxu0 0.0
    %2879 = vmatpush1.msra.mxu0 0.0
    %2880 = vmatprep.subr.mxu0 0.0
    %2881 = vmatpush1.msra.mxu0 0.0
    %2882 = vmatprep.subr.mxu0 0.0
    %2883 = vmatpush1.msra.mxu0 0.0
    %2884 = vmatprep.subr.mxu0 0.0
    %2885 = vmatpush1.msra.mxu0 0.0
    %2886 = vmatprep.subr.mxu0 0.0
    %2887 = vmatpush1.msra.mxu0 0.0
    %2888 = vmatprep.subr.mxu0 0.0
    %2889 = vmatpush1.msra.mxu0 0.0
    %2890 = vmatprep.subr.mxu0 0.0
    %2891 = vmatpush1.msra.mxu0 0.0
    %2892 = vmatprep.subr.mxu0 0.0
    %2893 = vmatpush1.msra.mxu0 0.0
    %2894 = vmatprep.subr.mxu0 0.0
    %2895 = vmatpush1.msra.mxu0 0.0
    %2896 = vmatprep.subr.mxu0 0.0
    %2897 = vmatpush1.msra.mxu0 0.0
    %2898 = vmatprep.subr.mxu0 0.0
    %2899 = vmatpush1.msra.mxu0 0.0
    %2900 = vmatprep.subr.mxu0 0.0
    %2901 = vmatpush1.msra.mxu0 0.0
    %2902 = vmatprep.subr.mxu0 0.0
    %2903 = vmatpush1.msra.mxu0 0.0
    %2904 = vmatprep.subr.mxu0 0.0
    %2905 = vmatpush1.msra.mxu0 0.0
    %2906 = vmatprep.subr.mxu0 0.0
    %2907 = vmatpush1.msra.mxu0 0.0
    %2908 = vmatprep.subr.mxu0 0.0
    %2909 = vmatpush1.msra.mxu0 0.0
    %2910 = vmatprep.subr.mxu0 0.0
    %2911 = vmatpush1.msra.mxu0 0.0
    %2912 = vmatprep.mubr.f32.mxu0 0.0
    %2913 = vmatmul.mubr.f32.gmra.mrb[0].mxu0 %v2846
    %v2914 = vpop.f32.mrb[0].mxu0
    %v2915 = vadd.f32 0.0, %v2914
    %v2916 = vpop.f32.mrb[0].mxu0
    %2917 = vdwg.mxu0
    %2918 = vrot.lane.b32.xlu0 %v2252, 112
    %v2919 = vpop.permute.xlu0 %2918
    %2920 = vrot.lane.b32.xlu0 %v2252, 80
    %v2921 = vpop.permute.xlu0 %2920
    %v2922 = vsel %vm459, %v2919, 0
    %v2924 = vsel %vm459, %v2921, 0
    %2926 = vmatprep.subr.mxu0 0.0
    %2927 = vmatpush1.xpose.msra.mxu0 %v2924
    %2928 = vmatprep.subr.mxu0 0.0
    %2929 = vmatpush1.xpose.msra.mxu0 0.0
    %2930 = vmatprep.subr.mxu0 0.0
    %2931 = vmatpush1.xpose.msra.mxu0 0.0
    %2932 = vmatprep.subr.mxu0 0.0
    %2933 = vmatpush1.xpose.msra.mxu0 0.0
    %2934 = vmatprep.subr.mxu0 0.0
    %2935 = vmatpush1.xpose.msra.mxu0 0.0
    %2936 = vmatprep.subr.mxu0 0.0
    %2937 = vmatpush1.xpose.msra.mxu0 0.0
    %2938 = vmatprep.subr.mxu0 0.0
    %2939 = vmatpush1.xpose.msra.mxu0 0.0
    %2940 = vmatprep.subr.mxu0 0.0
    %2941 = vmatpush1.xpose.msra.mxu0 0.0
    %2942 = vmatprep.subr.mxu0 0.0
    %2943 = vmatpush1.xpose.msra.mxu0 0.0
    %2944 = vmatprep.subr.mxu0 0.0
    %2945 = vmatpush1.xpose.msra.mxu0 0.0
    %2946 = vmatprep.subr.mxu0 0.0
    %2947 = vmatpush1.xpose.msra.mxu0 0.0
    %2948 = vmatprep.subr.mxu0 0.0
    %2949 = vmatpush1.xpose.msra.mxu0 0.0
    %2950 = vmatprep.subr.mxu0 0.0
    %2951 = vmatpush1.xpose.msra.mxu0 0.0
    %2952 = vmatprep.subr.mxu0 0.0
    %2953 = vmatpush1.xpose.msra.mxu0 0.0
    %2954 = vmatprep.subr.mxu0 0.0
    %2955 = vmatpush1.xpose.msra.mxu0 0.0
    %2956 = vmatprep.subr.mxu0 0.0
    %2957 = vmatpush1.xpose.msra.mxu0 0.0
    %2958 = vmatprep.subr.mxu0 0.0
    %2959 = vmatpush1.xpose.msra.mxu0 0.0
    %2960 = vmatprep.subr.mxu0 0.0
    %2961 = vmatpush1.xpose.msra.mxu0 0.0
    %2962 = vmatprep.subr.mxu0 0.0
    %2963 = vmatpush1.xpose.msra.mxu0 0.0
    %2964 = vmatprep.subr.mxu0 0.0
    %2965 = vmatpush1.xpose.msra.mxu0 0.0
    %2966 = vmatprep.subr.mxu0 0.0
    %2967 = vmatpush1.xpose.msra.mxu0 0.0
    %2968 = vmatprep.subr.mxu0 0.0
    %2969 = vmatpush1.xpose.msra.mxu0 0.0
    %2970 = vmatprep.subr.mxu0 0.0
    %2971 = vmatpush1.xpose.msra.mxu0 0.0
    %2972 = vmatprep.subr.mxu0 0.0
    %2973 = vmatpush1.xpose.msra.mxu0 0.0
    %2974 = vmatprep.subr.mxu0 0.0
    %2975 = vmatpush1.xpose.msra.mxu0 0.0
    %2976 = vmatprep.subr.mxu0 0.0
    %2977 = vmatpush1.xpose.msra.mxu0 0.0
    %2978 = vmatprep.subr.mxu0 0.0
    %2979 = vmatpush1.xpose.msra.mxu0 0.0
    %2980 = vmatprep.subr.mxu0 0.0
    %2981 = vmatpush1.xpose.msra.mxu0 0.0
    %2982 = vmatprep.subr.mxu0 0.0
    %2983 = vmatpush1.xpose.msra.mxu0 0.0
    %2984 = vmatprep.subr.mxu0 0.0
    %2985 = vmatpush1.xpose.msra.mxu0 0.0
    %2986 = vmatprep.subr.mxu0 0.0
    %2987 = vmatpush1.xpose.msra.mxu0 0.0
    %2988 = vmatprep.subr.mxu0 0.0
    %2989 = vmatpush1.xpose.msra.mxu0 0.0
    %2990 = vmatprep.mubr.f32.mxu0 0.0
    %2991 = vmatmul.mubr.f32.gmra.mrb[0].mxu0 %v2922
    %v2992 = vpop.f32.mrb[0].mxu0
    %v2993 = vadd.f32 0.0, %v2992
    %v2994 = vpop.f32.mrb[0].mxu0
    %2995 = vdwg.mxu0
    %2996 = vrot.lane.b32.xlu0 %v2257, 112
    %v2997 = vpop.permute.xlu0 %2996
    %2998 = vrot.lane.b32.xlu0 %v2257, 80
    %v2999 = vpop.permute.xlu0 %2998
    %v3000 = vsel %vm459, %v2997, 0
    %v3002 = vsel %vm459, %v2999, 0
    %3004 = vmatprep.subr.mxu0 0.0
    %3005 = vmatpush1.xpose.msra.mxu0 %v3002
    %3006 = vmatprep.subr.mxu0 0.0
    %3007 = vmatpush1.xpose.msra.mxu0 0.0
    %3008 = vmatprep.subr.mxu0 0.0
    %3009 = vmatpush1.xpose.msra.mxu0 0.0
    %3010 = vmatprep.subr.mxu0 0.0
    %3011 = vmatpush1.xpose.msra.mxu0 0.0
    %3012 = vmatprep.subr.mxu0 0.0
    %3013 = vmatpush1.xpose.msra.mxu0 0.0
    %3014 = vmatprep.subr.mxu0 0.0
    %3015 = vmatpush1.xpose.msra.mxu0 0.0
    %3016 = vmatprep.subr.mxu0 0.0
    %3017 = vmatpush1.xpose.msra.mxu0 0.0
    %3018 = vmatprep.subr.mxu0 0.0
    %3019 = vmatpush1.xpose.msra.mxu0 0.0
    %3020 = vmatprep.subr.mxu0 0.0
    %3021 = vmatpush1.xpose.msra.mxu0 0.0
    %3022 = vmatprep.subr.mxu0 0.0
    %3023 = vmatpush1.xpose.msra.mxu0 0.0
    %3024 = vmatprep.subr.mxu0 0.0
    %3025 = vmatpush1.xpose.msra.mxu0 0.0
    %3026 = vmatprep.subr.mxu0 0.0
    %3027 = vmatpush1.xpose.msra.mxu0 0.0
    %3028 = vmatprep.subr.mxu0 0.0
    %3029 = vmatpush1.xpose.msra.mxu0 0.0
    %3030 = vmatprep.subr.mxu0 0.0
    %3031 = vmatpush1.xpose.msra.mxu0 0.0
    %3032 = vmatprep.subr.mxu0 0.0
    %3033 = vmatpush1.xpose.msra.mxu0 0.0
    %3034 = vmatprep.subr.mxu0 0.0
    %3035 = vmatpush1.xpose.msra.mxu0 0.0
    %3036 = vmatprep.subr.mxu0 0.0
    %3037 = vmatpush1.xpose.msra.mxu0 0.0
    %3038 = vmatprep.subr.mxu0 0.0
    %3039 = vmatpush1.xpose.msra.mxu0 0.0
    %3040 = vmatprep.subr.mxu0 0.0
    %3041 = vmatpush1.xpose.msra.mxu0 0.0
    %3042 = vmatprep.subr.mxu0 0.0
    %3043 = vmatpush1.xpose.msra.mxu0 0.0
    %3044 = vmatprep.subr.mxu0 0.0
    %3045 = vmatpush1.xpose.msra.mxu0 0.0
    %3046 = vmatprep.subr.mxu0 0.0
    %3047 = vmatpush1.xpose.msra.mxu0 0.0
    %3048 = vmatprep.subr.mxu0 0.0
    %3049 = vmatpush1.xpose.msra.mxu0 0.0
    %3050 = vmatprep.subr.mxu0 0.0
    %3051 = vmatpush1.xpose.msra.mxu0 0.0
    %3052 = vmatprep.subr.mxu0 0.0
    %3053 = vmatpush1.xpose.msra.mxu0 0.0
    %3054 = vmatprep.subr.mxu0 0.0
    %3055 = vmatpush1.xpose.msra.mxu0 0.0
    %3056 = vmatprep.subr.mxu0 0.0
    %3057 = vmatpush1.xpose.msra.mxu0 0.0
    %3058 = vmatprep.subr.mxu0 0.0
    %3059 = vmatpush1.xpose.msra.mxu0 0.0
    %3060 = vmatprep.subr.mxu0 0.0
    %3061 = vmatpush1.xpose.msra.mxu0 0.0
    %3062 = vmatprep.subr.mxu0 0.0
    %3063 = vmatpush1.xpose.msra.mxu0 0.0
    %3064 = vmatprep.subr.mxu0 0.0
    %3065 = vmatpush1.xpose.msra.mxu0 0.0
    %3066 = vmatprep.subr.mxu0 0.0
    %3067 = vmatpush1.xpose.msra.mxu0 0.0
    %3068 = vmatprep.mubr.f32.mxu0 0.0
    %3069 = vmatmul.mubr.f32.gmra.mrb[0].mxu0 %v3000
    %v3070 = vpop.f32.mrb[0].mxu0
    %v3071 = vadd.f32 0.0, %v3070
    %v3072 = vpop.f32.mrb[0].mxu0
    %3073 = vdwg.mxu0
    %v3074 = vsel %vm459, %v2993, -inf
    %3075 = vmax.xlane.f32.xlu0 %v3074
    %v3076 = vpop.xlane.xlu0 %3075
    %v3077 = vsel %vm459, %v3071, -inf
    %3078 = vmax.xlane.f32.xlu0 %v3077
    %v3079 = vpop.xlane.xlu0 %3078
    %v3080 = vsub.f32 %v2993, %v3076
    %v3081 = vsub.f32 %v3071, %v3079
    %v3082 = vmul.f32 %v3080, 1.442695
    %v3083 = vpow.pop %v3082
    %v3084 = vmul.f32 %v3081, 1.442695
    %v3085 = vpow.pop %v3084
    %v3086 = vsel %vm459, %v3083, 0.0
    %3087 = vadd.xlane.f32.xlu0 %v3086
    %v3088 = vpop.xlane.xlu0 %3087
    %v3089 = vsel %vm459, %v3085, 0.0
    %3090 = vadd.xlane.f32.xlu0 %v3089
    %v3091 = vpop.xlane.xlu0 %3090
    %v3092 = vrcp.pop %v3088
    %v3093 = vmul.f32 %v3083, %v3092
    %v3094 = vrcp.pop %v3091
    %v3095 = vmul.f32 %v3085, %v3094
    %3096 = vrot.lane.b32.xlu0 %v2252, 48
    %v3097 = vpop.permute.xlu0 %3096
    %v3100 = vsel %vm459, %v3093, 0
    %3102 = vmatprep.subr.mxu0 0.0
    %3103 = vmatpush1.msra.mxu0 %v3097
    %3104 = vmatprep.subr.mxu0 0.0
    %3105 = vmatpush1.msra.mxu0 0.0
    %3106 = vmatprep.subr.mxu0 0.0
    %3107 = vmatpush1.msra.mxu0 0.0
    %3108 = vmatprep.subr.mxu0 0.0
    %3109 = vmatpush1.msra.mxu0 0.0
    %3110 = vmatprep.subr.mxu0 0.0
    %3111 = vmatpush1.msra.mxu0 0.0
    %3112 = vmatprep.subr.mxu0 0.0
    %3113 = vmatpush1.msra.mxu0 0.0
    %3114 = vmatprep.subr.mxu0 0.0
    %3115 = vmatpush1.msra.mxu0 0.0
    %3116 = vmatprep.subr.mxu0 0.0
    %3117 = vmatpush1.msra.mxu0 0.0
    %3118 = vmatprep.subr.mxu0 0.0
    %3119 = vmatpush1.msra.mxu0 0.0
    %3120 = vmatprep.subr.mxu0 0.0
    %3121 = vmatpush1.msra.mxu0 0.0
    %3122 = vmatprep.subr.mxu0 0.0
    %3123 = vmatpush1.msra.mxu0 0.0
    %3124 = vmatprep.subr.mxu0 0.0
    %3125 = vmatpush1.msra.mxu0 0.0
    %3126 = vmatprep.subr.mxu0 0.0
    %3127 = vmatpush1.msra.mxu0 0.0
    %3128 = vmatprep.subr.mxu0 0.0
    %3129 = vmatpush1.msra.mxu0 0.0
    %3130 = vmatprep.subr.mxu0 0.0
    %3131 = vmatpush1.msra.mxu0 0.0
    %3132 = vmatprep.subr.mxu0 0.0
    %3133 = vmatpush1.msra.mxu0 0.0
    %3134 = vmatprep.subr.mxu0 0.0
    %3135 = vmatpush1.msra.mxu0 0.0
    %3136 = vmatprep.subr.mxu0 0.0
    %3137 = vmatpush1.msra.mxu0 0.0
    %3138 = vmatprep.subr.mxu0 0.0
    %3139 = vmatpush1.msra.mxu0 0.0
    %3140 = vmatprep.subr.mxu0 0.0
    %3141 = vmatpush1.msra.mxu0 0.0
    %3142 = vmatprep.subr.mxu0 0.0
    %3143 = vmatpush1.msra.mxu0 0.0
    %3144 = vmatprep.subr.mxu0 0.0
    %3145 = vmatpush1.msra.mxu0 0.0
    %3146 = vmatprep.subr.mxu0 0.0
    %3147 = vmatpush1.msra.mxu0 0.0
    %3148 = vmatprep.subr.mxu0 0.0
    %3149 = vmatpush1.msra.mxu0 0.0
    %3150 = vmatprep.subr.mxu0 0.0
    %3151 = vmatpush1.msra.mxu0 0.0
    %3152 = vmatprep.subr.mxu0 0.0
    %3153 = vmatpush1.msra.mxu0 0.0
    %3154 = vmatprep.subr.mxu0 0.0
    %3155 = vmatpush1.msra.mxu0 0.0
    %3156 = vmatprep.subr.mxu0 0.0
    %3157 = vmatpush1.msra.mxu0 0.0
    %3158 = vmatprep.subr.mxu0 0.0
    %3159 = vmatpush1.msra.mxu0 0.0
    %3160 = vmatprep.subr.mxu0 0.0
    %3161 = vmatpush1.msra.mxu0 0.0
    %3162 = vmatprep.subr.mxu0 0.0
    %3163 = vmatpush1.msra.mxu0 0.0
    %3164 = vmatprep.subr.mxu0 0.0
    %3165 = vmatpush1.msra.mxu0 0.0
    %3166 = vmatprep.mubr.f32.mxu0 0.0
    %3167 = vmatmul.mubr.f32.gmra.mrb[0].mxu0 %v3100
    %v3168 = vpop.f32.mrb[0].mxu0
    %v3169 = vadd.f32 0.0, %v3168
    %v3170 = vpop.f32.mrb[0].mxu0
    %3171 = vdwg.mxu0
    %3172 = vrot.lane.b32.xlu0 %v2257, 48
    %v3173 = vpop.permute.xlu0 %3172
    %v3176 = vsel %vm459, %v3095, 0
    %3178 = vmatprep.subr.mxu0 0.0
    %3179 = vmatpush1.msra.mxu0 %v3173
    %3180 = vmatprep.subr.mxu0 0.0
    %3181 = vmatpush1.msra.mxu0 0.0
    %3182 = vmatprep.subr.mxu0 0.0
    %3183 = vmatpush1.msra.mxu0 0.0
    %3184 = vmatprep.subr.mxu0 0.0
    %3185 = vmatpush1.msra.mxu0 0.0
    %3186 = vmatprep.subr.mxu0 0.0
    %3187 = vmatpush1.msra.mxu0 0.0
    %3188 = vmatprep.subr.mxu0 0.0
    %3189 = vmatpush1.msra.mxu0 0.0
    %3190 = vmatprep.subr.mxu0 0.0
    %3191 = vmatpush1.msra.mxu0 0.0
    %3192 = vmatprep.subr.mxu0 0.0
    %3193 = vmatpush1.msra.mxu0 0.0
    %3194 = vmatprep.subr.mxu0 0.0
    %3195 = vmatpush1.msra.mxu0 0.0
    %3196 = vmatprep.subr.mxu0 0.0
    %3197 = vmatpush1.msra.mxu0 0.0
    %3198 = vmatprep.subr.mxu0 0.0
    %3199 = vmatpush1.msra.mxu0 0.0
    %3200 = vmatprep.subr.mxu0 0.0
    %3201 = vmatpush1.msra.mxu0 0.0
    %3202 = vmatprep.subr.mxu0 0.0
    %3203 = vmatpush1.msra.mxu0 0.0
    %3204 = vmatprep.subr.mxu0 0.0
    %3205 = vmatpush1.msra.mxu0 0.0
    %3206 = vmatprep.subr.mxu0 0.0
    %3207 = vmatpush1.msra.mxu0 0.0
    %3208 = vmatprep.subr.mxu0 0.0
    %3209 = vmatpush1.msra.mxu0 0.0
    %3210 = vmatprep.subr.mxu0 0.0
    %3211 = vmatpush1.msra.mxu0 0.0
    %3212 = vmatprep.subr.mxu0 0.0
    %3213 = vmatpush1.msra.mxu0 0.0
    %3214 = vmatprep.subr.mxu0 0.0
    %3215 = vmatpush1.msra.mxu0 0.0
    %3216 = vmatprep.subr.mxu0 0.0
    %3217 = vmatpush1.msra.mxu0 0.0
    %3218 = vmatprep.subr.mxu0 0.0
    %3219 = vmatpush1.msra.mxu0 0.0
    %3220 = vmatprep.subr.mxu0 0.0
    %3221 = vmatpush1.msra.mxu0 0.0
    %3222 = vmatprep.subr.mxu0 0.0
    %3223 = vmatpush1.msra.mxu0 0.0
    %3224 = vmatprep.subr.mxu0 0.0
    %3225 = vmatpush1.msra.mxu0 0.0
    %3226 = vmatprep.subr.mxu0 0.0
    %3227 = vmatpush1.msra.mxu0 0.0
    %3228 = vmatprep.subr.mxu0 0.0
    %3229 = vmatpush1.msra.mxu0 0.0
    %3230 = vmatprep.subr.mxu0 0.0
    %3231 = vmatpush1.msra.mxu0 0.0
    %3232 = vmatprep.subr.mxu0 0.0
    %3233 = vmatpush1.msra.mxu0 0.0
    %3234 = vmatprep.subr.mxu0 0.0
    %3235 = vmatpush1.msra.mxu0 0.0
    %3236 = vmatprep.subr.mxu0 0.0
    %3237 = vmatpush1.msra.mxu0 0.0
    %3238 = vmatprep.subr.mxu0 0.0
    %3239 = vmatpush1.msra.mxu0 0.0
    %3240 = vmatprep.subr.mxu0 0.0
    %3241 = vmatpush1.msra.mxu0 0.0
    %3242 = vmatprep.mubr.f32.mxu0 0.0
    %3243 = vmatmul.mubr.f32.gmra.mrb[0].mxu0 %v3176
    %v3244 = vpop.f32.mrb[0].mxu0
    %v3245 = vadd.f32 0.0, %v3244
    %v3246 = vpop.f32.mrb[0].mxu0
    %3247 = vdwg.mxu0
    %3248 = vrot.lane.b32.xlu0 %v2252, 104
    %v3249 = vpop.permute.xlu0 %3248
    %3250 = vrot.lane.b32.xlu0 %v2252, 72
    %v3251 = vpop.permute.xlu0 %3250
    %v3252 = vsel %vm459, %v3249, 0
    %v3254 = vsel %vm459, %v3251, 0
    %3256 = vmatprep.subr.mxu0 0.0
    %3257 = vmatpush1.xpose.msra.mxu0 %v3254
    %3258 = vmatprep.subr.mxu0 0.0
    %3259 = vmatpush1.xpose.msra.mxu0 0.0
    %3260 = vmatprep.subr.mxu0 0.0
    %3261 = vmatpush1.xpose.msra.mxu0 0.0
    %3262 = vmatprep.subr.mxu0 0.0
    %3263 = vmatpush1.xpose.msra.mxu0 0.0
    %3264 = vmatprep.subr.mxu0 0.0
    %3265 = vmatpush1.xpose.msra.mxu0 0.0
    %3266 = vmatprep.subr.mxu0 0.0
    %3267 = vmatpush1.xpose.msra.mxu0 0.0
    %3268 = vmatprep.subr.mxu0 0.0
    %3269 = vmatpush1.xpose.msra.mxu0 0.0
    %3270 = vmatprep.subr.mxu0 0.0
    %3271 = vmatpush1.xpose.msra.mxu0 0.0
    %3272 = vmatprep.subr.mxu0 0.0
    %3273 = vmatpush1.xpose.msra.mxu0 0.0
    %3274 = vmatprep.subr.mxu0 0.0
    %3275 = vmatpush1.xpose.msra.mxu0 0.0
    %3276 = vmatprep.subr.mxu0 0.0
    %3277 = vmatpush1.xpose.msra.mxu0 0.0
    %3278 = vmatprep.subr.mxu0 0.0
    %3279 = vmatpush1.xpose.msra.mxu0 0.0
    %3280 = vmatprep.subr.mxu0 0.0
    %3281 = vmatpush1.xpose.msra.mxu0 0.0
    %3282 = vmatprep.subr.mxu0 0.0
    %3283 = vmatpush1.xpose.msra.mxu0 0.0
    %3284 = vmatprep.subr.mxu0 0.0
    %3285 = vmatpush1.xpose.msra.mxu0 0.0
    %3286 = vmatprep.subr.mxu0 0.0
    %3287 = vmatpush1.xpose.msra.mxu0 0.0
    %3288 = vmatprep.subr.mxu0 0.0
    %3289 = vmatpush1.xpose.msra.mxu0 0.0
    %3290 = vmatprep.subr.mxu0 0.0
    %3291 = vmatpush1.xpose.msra.mxu0 0.0
    %3292 = vmatprep.subr.mxu0 0.0
    %3293 = vmatpush1.xpose.msra.mxu0 0.0
    %3294 = vmatprep.subr.mxu0 0.0
    %3295 = vmatpush1.xpose.msra.mxu0 0.0
    %3296 = vmatprep.subr.mxu0 0.0
    %3297 = vmatpush1.xpose.msra.mxu0 0.0
    %3298 = vmatprep.subr.mxu0 0.0
    %3299 = vmatpush1.xpose.msra.mxu0 0.0
    %3300 = vmatprep.subr.mxu0 0.0
    %3301 = vmatpush1.xpose.msra.mxu0 0.0
    %3302 = vmatprep.subr.mxu0 0.0
    %3303 = vmatpush1.xpose.msra.mxu0 0.0
    %3304 = vmatprep.subr.mxu0 0.0
    %3305 = vmatpush1.xpose.msra.mxu0 0.0
    %3306 = vmatprep.subr.mxu0 0.0
    %3307 = vmatpush1.xpose.msra.mxu0 0.0
    %3308 = vmatprep.subr.mxu0 0.0
    %3309 = vmatpush1.xpose.msra.mxu0 0.0
    %3310 = vmatprep.subr.mxu0 0.0
    %3311 = vmatpush1.xpose.msra.mxu0 0.0
    %3312 = vmatprep.subr.mxu0 0.0
    %3313 = vmatpush1.xpose.msra.mxu0 0.0
    %3314 = vmatprep.subr.mxu0 0.0
    %3315 = vmatpush1.xpose.msra.mxu0 0.0
    %3316 = vmatprep.subr.mxu0 0.0
    %3317 = vmatpush1.xpose.msra.mxu0 0.0
    %3318 = vmatprep.subr.mxu0 0.0
    %3319 = vmatpush1.xpose.msra.mxu0 0.0
    %3320 = vmatprep.mubr.f32.mxu0 0.0
    %3321 = vmatmul.mubr.f32.gmra.mrb[0].mxu0 %v3252
    %v3322 = vpop.f32.mrb[0].mxu0
    %v3323 = vadd.f32 0.0, %v3322
    %v3324 = vpop.f32.mrb[0].mxu0
    %3325 = vdwg.mxu0
    %3326 = vrot.lane.b32.xlu0 %v2257, 104
    %v3327 = vpop.permute.xlu0 %3326
    %3328 = vrot.lane.b32.xlu0 %v2257, 72
    %v3329 = vpop.permute.xlu0 %3328
    %v3330 = vsel %vm459, %v3327, 0
    %v3332 = vsel %vm459, %v3329, 0
    %3334 = vmatprep.subr.mxu0 0.0
    %3335 = vmatpush1.xpose.msra.mxu0 %v3332
    %3336 = vmatprep.subr.mxu0 0.0
    %3337 = vmatpush1.xpose.msra.mxu0 0.0
    %3338 = vmatprep.subr.mxu0 0.0
    %3339 = vmatpush1.xpose.msra.mxu0 0.0
    %3340 = vmatprep.subr.mxu0 0.0
    %3341 = vmatpush1.xpose.msra.mxu0 0.0
    %3342 = vmatprep.subr.mxu0 0.0
    %3343 = vmatpush1.xpose.msra.mxu0 0.0
    %3344 = vmatprep.subr.mxu0 0.0
    %3345 = vmatpush1.xpose.msra.mxu0 0.0
    %3346 = vmatprep.subr.mxu0 0.0
    %3347 = vmatpush1.xpose.msra.mxu0 0.0
    %3348 = vmatprep.subr.mxu0 0.0
    %3349 = vmatpush1.xpose.msra.mxu0 0.0
    %3350 = vmatprep.subr.mxu0 0.0
    %3351 = vmatpush1.xpose.msra.mxu0 0.0
    %3352 = vmatprep.subr.mxu0 0.0
    %3353 = vmatpush1.xpose.msra.mxu0 0.0
    %3354 = vmatprep.subr.mxu0 0.0
    %3355 = vmatpush1.xpose.msra.mxu0 0.0
    %3356 = vmatprep.subr.mxu0 0.0
    %3357 = vmatpush1.xpose.msra.mxu0 0.0
    %3358 = vmatprep.subr.mxu0 0.0
    %3359 = vmatpush1.xpose.msra.mxu0 0.0
    %3360 = vmatprep.subr.mxu0 0.0
    %3361 = vmatpush1.xpose.msra.mxu0 0.0
    %3362 = vmatprep.subr.mxu0 0.0
    %3363 = vmatpush1.xpose.msra.mxu0 0.0
    %3364 = vmatprep.subr.mxu0 0.0
    %3365 = vmatpush1.xpose.msra.mxu0 0.0
    %3366 = vmatprep.subr.mxu0 0.0
    %3367 = vmatpush1.xpose.msra.mxu0 0.0
    %3368 = vmatprep.subr.mxu0 0.0
    %3369 = vmatpush1.xpose.msra.mxu0 0.0
    %3370 = vmatprep.subr.mxu0 0.0
    %3371 = vmatpush1.xpose.msra.mxu0 0.0
    %3372 = vmatprep.subr.mxu0 0.0
    %3373 = vmatpush1.xpose.msra.mxu0 0.0
    %3374 = vmatprep.subr.mxu0 0.0
    %3375 = vmatpush1.xpose.msra.mxu0 0.0
    %3376 = vmatprep.subr.mxu0 0.0
    %3377 = vmatpush1.xpose.msra.mxu0 0.0
    %3378 = vmatprep.subr.mxu0 0.0
    %3379 = vmatpush1.xpose.msra.mxu0 0.0
    %3380 = vmatprep.subr.mxu0 0.0
    %3381 = vmatpush1.xpose.msra.mxu0 0.0
    %3382 = vmatprep.subr.mxu0 0.0
    %3383 = vmatpush1.xpose.msra.mxu0 0.0
    %3384 = vmatprep.subr.mxu0 0.0
    %3385 = vmatpush1.xpose.msra.mxu0 0.0
    %3386 = vmatprep.subr.mxu0 0.0
    %3387 = vmatpush1.xpose.msra.mxu0 0.0
    %3388 = vmatprep.subr.mxu0 0.0
    %3389 = vmatpush1.xpose.msra.mxu0 0.0
    %3390 = vmatprep.subr.mxu0 0.0
    %3391 = vmatpush1.xpose.msra.mxu0 0.0
    %3392 = vmatprep.subr.mxu0 0.0
    %3393 = vmatpush1.xpose.msra.mxu0 0.0
    %3394 = vmatprep.subr.mxu0 0.0
    %3395 = vmatpush1.xpose.msra.mxu0 0.0
    %3396 = vmatprep.subr.mxu0 0.0
    %3397 = vmatpush1.xpose.msra.mxu0 0.0
    %3398 = vmatprep.mubr.f32.mxu0 0.0
    %3399 = vmatmul.mubr.f32.gmra.mrb[0].mxu0 %v3330
    %v3400 = vpop.f32.mrb[0].mxu0
    %v3401 = vadd.f32 0.0, %v3400
    %v3402 = vpop.f32.mrb[0].mxu0
    %3403 = vdwg.mxu0
    %v3404 = vsel %vm459, %v3323, -inf
    %3405 = vmax.xlane.f32.xlu0 %v3404
    %v3406 = vpop.xlane.xlu0 %3405
    %v3407 = vsel %vm459, %v3401, -inf
    %3408 = vmax.xlane.f32.xlu0 %v3407
    %v3409 = vpop.xlane.xlu0 %3408
    %v3410 = vsub.f32 %v3323, %v3406
    %v3411 = vsub.f32 %v3401, %v3409
    %v3412 = vmul.f32 %v3410, 1.442695
    %v3413 = vpow.pop %v3412
    %v3414 = vmul.f32 %v3411, 1.442695
    %v3415 = vpow.pop %v3414
    %v3416 = vsel %vm459, %v3413, 0.0
    %3417 = vadd.xlane.f32.xlu0 %v3416
    %v3418 = vpop.xlane.xlu0 %3417
    %v3419 = vsel %vm459, %v3415, 0.0
    %3420 = vadd.xlane.f32.xlu0 %v3419
    %v3421 = vpop.xlane.xlu0 %3420
    %v3422 = vrcp.pop %v3418
    %v3423 = vmul.f32 %v3413, %v3422
    %v3424 = vrcp.pop %v3421
    %v3425 = vmul.f32 %v3415, %v3424
    %3426 = vrot.lane.b32.xlu0 %v2252, 40
    %v3427 = vpop.permute.xlu0 %3426
    %v3430 = vsel %vm459, %v3423, 0
    %3432 = vmatprep.subr.mxu0 0.0
    %3433 = vmatpush1.msra.mxu0 %v3427
    %3434 = vmatprep.subr.mxu0 0.0
    %3435 = vmatpush1.msra.mxu0 0.0
    %3436 = vmatprep.subr.mxu0 0.0
    %3437 = vmatpush1.msra.mxu0 0.0
    %3438 = vmatprep.subr.mxu0 0.0
    %3439 = vmatpush1.msra.mxu0 0.0
    %3440 = vmatprep.subr.mxu0 0.0
    %3441 = vmatpush1.msra.mxu0 0.0
    %3442 = vmatprep.subr.mxu0 0.0
    %3443 = vmatpush1.msra.mxu0 0.0
    %3444 = vmatprep.subr.mxu0 0.0
    %3445 = vmatpush1.msra.mxu0 0.0
    %3446 = vmatprep.subr.mxu0 0.0
    %3447 = vmatpush1.msra.mxu0 0.0
    %3448 = vmatprep.subr.mxu0 0.0
    %3449 = vmatpush1.msra.mxu0 0.0
    %3450 = vmatprep.subr.mxu0 0.0
    %3451 = vmatpush1.msra.mxu0 0.0
    %3452 = vmatprep.subr.mxu0 0.0
    %3453 = vmatpush1.msra.mxu0 0.0
    %3454 = vmatprep.subr.mxu0 0.0
    %3455 = vmatpush1.msra.mxu0 0.0
    %3456 = vmatprep.subr.mxu0 0.0
    %3457 = vmatpush1.msra.mxu0 0.0
    %3458 = vmatprep.subr.mxu0 0.0
    %3459 = vmatpush1.msra.mxu0 0.0
    %3460 = vmatprep.subr.mxu0 0.0
    %3461 = vmatpush1.msra.mxu0 0.0
    %3462 = vmatprep.subr.mxu0 0.0
    %3463 = vmatpush1.msra.mxu0 0.0
    %3464 = vmatprep.subr.mxu0 0.0
    %3465 = vmatpush1.msra.mxu0 0.0
    %3466 = vmatprep.subr.mxu0 0.0
    %3467 = vmatpush1.msra.mxu0 0.0
    %3468 = vmatprep.subr.mxu0 0.0
    %3469 = vmatpush1.msra.mxu0 0.0
    %3470 = vmatprep.subr.mxu0 0.0
    %3471 = vmatpush1.msra.mxu0 0.0
    %3472 = vmatprep.subr.mxu0 0.0
    %3473 = vmatpush1.msra.mxu0 0.0
    %3474 = vmatprep.subr.mxu0 0.0
    %3475 = vmatpush1.msra.mxu0 0.0
    %3476 = vmatprep.subr.mxu0 0.0
    %3477 = vmatpush1.msra.mxu0 0.0
    %3478 = vmatprep.subr.mxu0 0.0
    %3479 = vmatpush1.msra.mxu0 0.0
    %3480 = vmatprep.subr.mxu0 0.0
    %3481 = vmatpush1.msra.mxu0 0.0
    %3482 = vmatprep.subr.mxu0 0.0
    %3483 = vmatpush1.msra.mxu0 0.0
    %3484 = vmatprep.subr.mxu0 0.0
    %3485 = vmatpush1.msra.mxu0 0.0
    %3486 = vmatprep.subr.mxu0 0.0
    %3487 = vmatpush1.msra.mxu0 0.0
    %3488 = vmatprep.subr.mxu0 0.0
    %3489 = vmatpush1.msra.mxu0 0.0
    %3490 = vmatprep.subr.mxu0 0.0
    %3491 = vmatpush1.msra.mxu0 0.0
    %3492 = vmatprep.subr.mxu0 0.0
    %3493 = vmatpush1.msra.mxu0 0.0
    %3494 = vmatprep.subr.mxu0 0.0
    %3495 = vmatpush1.msra.mxu0 0.0
    %3496 = vmatprep.mubr.f32.mxu0 0.0
    %3497 = vmatmul.mubr.f32.gmra.mrb[0].mxu0 %v3430
    %v3498 = vpop.f32.mrb[0].mxu0
    %v3499 = vadd.f32 0.0, %v3498
    %v3500 = vpop.f32.mrb[0].mxu0
    %3501 = vdwg.mxu0
    %3502 = vrot.lane.b32.xlu0 %v2257, 40
    %v3503 = vpop.permute.xlu0 %3502
    %v3506 = vsel %vm459, %v3425, 0
    %3508 = vmatprep.subr.mxu0 0.0
    %3509 = vmatpush1.msra.mxu0 %v3503
    %3510 = vmatprep.subr.mxu0 0.0
    %3511 = vmatpush1.msra.mxu0 0.0
    %3512 = vmatprep.subr.mxu0 0.0
    %3513 = vmatpush1.msra.mxu0 0.0
    %3514 = vmatprep.subr.mxu0 0.0
    %3515 = vmatpush1.msra.mxu0 0.0
    %3516 = vmatprep.subr.mxu0 0.0
    %3517 = vmatpush1.msra.mxu0 0.0
    %3518 = vmatprep.subr.mxu0 0.0
    %3519 = vmatpush1.msra.mxu0 0.0
    %3520 = vmatprep.subr.mxu0 0.0
    %3521 = vmatpush1.msra.mxu0 0.0
    %3522 = vmatprep.subr.mxu0 0.0
    %3523 = vmatpush1.msra.mxu0 0.0
    %3524 = vmatprep.subr.mxu0 0.0
    %3525 = vmatpush1.msra.mxu0 0.0
    %3526 = vmatprep.subr.mxu0 0.0
    %3527 = vmatpush1.msra.mxu0 0.0
    %3528 = vmatprep.subr.mxu0 0.0
    %3529 = vmatpush1.msra.mxu0 0.0
    %3530 = vmatprep.subr.mxu0 0.0
    %3531 = vmatpush1.msra.mxu0 0.0
    %3532 = vmatprep.subr.mxu0 0.0
    %3533 = vmatpush1.msra.mxu0 0.0
    %3534 = vmatprep.subr.mxu0 0.0
    %3535 = vmatpush1.msra.mxu0 0.0
    %3536 = vmatprep.subr.mxu0 0.0
    %3537 = vmatpush1.msra.mxu0 0.0
    %3538 = vmatprep.subr.mxu0 0.0
    %3539 = vmatpush1.msra.mxu0 0.0
    %3540 = vmatprep.subr.mxu0 0.0
    %3541 = vmatpush1.msra.mxu0 0.0
    %3542 = vmatprep.subr.mxu0 0.0
    %3543 = vmatpush1.msra.mxu0 0.0
    %3544 = vmatprep.subr.mxu0 0.0
    %3545 = vmatpush1.msra.mxu0 0.0
    %3546 = vmatprep.subr.mxu0 0.0
    %3547 = vmatpush1.msra.mxu0 0.0
    %3548 = vmatprep.subr.mxu0 0.0
    %3549 = vmatpush1.msra.mxu0 0.0
    %3550 = vmatprep.subr.mxu0 0.0
    %3551 = vmatpush1.msra.mxu0 0.0
    %3552 = vmatprep.subr.mxu0 0.0
    %3553 = vmatpush1.msra.mxu0 0.0
    %3554 = vmatprep.subr.mxu0 0.0
    %3555 = vmatpush1.msra.mxu0 0.0
    %3556 = vmatprep.subr.mxu0 0.0
    %3557 = vmatpush1.msra.mxu0 0.0
    %3558 = vmatprep.subr.mxu0 0.0
    %3559 = vmatpush1.msra.mxu0 0.0
    %3560 = vmatprep.subr.mxu0 0.0
    %3561 = vmatpush1.msra.mxu0 0.0
    %3562 = vmatprep.subr.mxu0 0.0
    %3563 = vmatpush1.msra.mxu0 0.0
    %3564 = vmatprep.subr.mxu0 0.0
    %3565 = vmatpush1.msra.mxu0 0.0
    %3566 = vmatprep.subr.mxu0 0.0
    %3567 = vmatpush1.msra.mxu0 0.0
    %3568 = vmatprep.subr.mxu0 0.0
    %3569 = vmatpush1.msra.mxu0 0.0
    %3570 = vmatprep.subr.mxu0 0.0
    %3571 = vmatpush1.msra.mxu0 0.0
    %3572 = vmatprep.mubr.f32.mxu0 0.0
    %3573 = vmatmul.mubr.f32.gmra.mrb[0].mxu0 %v3506
    %v3574 = vpop.f32.mrb[0].mxu0
    %v3575 = vadd.f32 0.0, %v3574
    %v3576 = vpop.f32.mrb[0].mxu0
    %3577 = vdwg.mxu0
    %3580 = vrot.lane.b32.xlu0 %v2839, 8
    %v3581 = vpop.permute.xlu0 %3580
    %3582 = vrot.lane.b32.xlu0 %v2915, 8
    %v3583 = vpop.permute.xlu0 %3582
    %3588 = vrot.lane.b32.xlu0 %v3169, 16
    %v3589 = vpop.permute.xlu0 %3588
    %3590 = vrot.lane.b32.xlu0 %v3245, 16
    %v3591 = vpop.permute.xlu0 %3590
    %3596 = vrot.lane.b32.xlu0 %v3499, 24
    %v3597 = vpop.permute.xlu0 %3596
    %3598 = vrot.lane.b32.xlu0 %v3575, 24
    %v3599 = vpop.permute.xlu0 %3598
    %v3602 = vsel %vm459, %v2509, %v3581
    %v3603 = vsel %vm459, %v2585, %v3583
    %v3604 = vsel %vm238, %v3602, %v3589
    %v3605 = vsel %vm238, %v3603, %v3591
    %v3606 = vsel %vm1803, %v3604, %v3597
    %v3607 = vsel %vm1803, %v3605, %v3599
    %s3608 = scalar_lea.vmem %s6, 32
    %v3609 = vld [vmem:[%s3608] sm:$0xff]
    %v3610 = vld [vmem:[%s3608 + $0x8] sm:$0xff]
    %v3611 = vld [vmem:[%s3608 + $0x10] sm:$0xff]
    %v3612 = vld [vmem:[%s3608 + $0x18] sm:$0xff]
    %v3613 = vlaneseq
    %v3614 = vshrl.u32 %v3613, 7
    %v3615 = vsub.s32 1, %v3614
    %v3616 = vrot.slane %v2169, %v3615
    %v3618 = vsel %vm320, %v3606, 0
    %v3621 = vsel %vm320, %v3607, 0
    %3623 = vmatprep.subr.mxu0 0.0
    %3624 = vmatpush1.msra.mxu0 %v3609
    %3625 = vmatprep.subr.mxu0 0.0
    %3626 = vmatpush1.msra.mxu0 %v3610
    %3627 = vmatprep.subr.mxu0 0.0
    %3628 = vmatpush1.msra.mxu0 %v3611
    %3629 = vmatprep.subr.mxu0 0.0
    %3630 = vmatpush1.msra.mxu0 %v3612
    %3631 = vmatprep.subr.mxu0 0.0
    %3632 = vmatpush1.msra.mxu0 0.0
    %3633 = vmatprep.subr.mxu0 0.0
    %3634 = vmatpush1.msra.mxu0 0.0
    %3635 = vmatprep.subr.mxu0 0.0
    %3636 = vmatpush1.msra.mxu0 0.0
    %3637 = vmatprep.subr.mxu0 0.0
    %3638 = vmatpush1.msra.mxu0 0.0
    %3639 = vmatprep.subr.mxu0 0.0
    %3640 = vmatpush1.msra.mxu0 0.0
    %3641 = vmatprep.subr.mxu0 0.0
    %3642 = vmatpush1.msra.mxu0 0.0
    %3643 = vmatprep.subr.mxu0 0.0
    %3644 = vmatpush1.msra.mxu0 0.0
    %3645 = vmatprep.subr.mxu0 0.0
    %3646 = vmatpush1.msra.mxu0 0.0
    %3647 = vmatprep.subr.mxu0 0.0
    %3648 = vmatpush1.msra.mxu0 0.0
    %3649 = vmatprep.subr.mxu0 0.0
    %3650 = vmatpush1.msra.mxu0 0.0
    %3651 = vmatprep.subr.mxu0 0.0
    %3652 = vmatpush1.msra.mxu0 0.0
    %3653 = vmatprep.subr.mxu0 0.0
    %3654 = vmatpush1.msra.mxu0 0.0
    %3655 = vmatprep.subr.mxu0 0.0
    %3656 = vmatpush1.msra.mxu0 0.0
    %3657 = vmatprep.subr.mxu0 0.0
    %3658 = vmatpush1.msra.mxu0 0.0
    %3659 = vmatprep.subr.mxu0 0.0
    %3660 = vmatpush1.msra.mxu0 0.0
    %3661 = vmatprep.subr.mxu0 0.0
    %3662 = vmatpush1.msra.mxu0 0.0
    %3663 = vmatprep.subr.mxu0 0.0
    %3664 = vmatpush1.msra.mxu0 0.0
    %3665 = vmatprep.subr.mxu0 0.0
    %3666 = vmatpush1.msra.mxu0 0.0
    %3667 = vmatprep.subr.mxu0 0.0
    %3668 = vmatpush1.msra.mxu0 0.0
    %3669 = vmatprep.subr.mxu0 0.0
    %3670 = vmatpush1.msra.mxu0 0.0
    %3671 = vmatprep.subr.mxu0 0.0
    %3672 = vmatpush1.msra.mxu0 0.0
    %3673 = vmatprep.subr.mxu0 0.0
    %3674 = vmatpush1.msra.mxu0 0.0
    %3675 = vmatprep.subr.mxu0 0.0
    %3676 = vmatpush1.msra.mxu0 0.0
    %3677 = vmatprep.subr.mxu0 0.0
    %3678 = vmatpush1.msra.mxu0 0.0
    %3679 = vmatprep.subr.mxu0 0.0
    %3680 = vmatpush1.msra.mxu0 0.0
    %3681 = vmatprep.subr.mxu0 0.0
    %3682 = vmatpush1.msra.mxu0 0.0
    %3683 = vmatprep.subr.mxu0 0.0
    %3684 = vmatpush1.msra.mxu0 0.0
    %3685 = vmatprep.subr.mxu0 0.0
    %3686 = vmatpush1.msra.mxu0 0.0
    %3687 = vmatprep.mubr.f32.mxu0 0.0
    %3688 = vmatmul.mubr.f32.gmra.mrb[0].mxu0 %v3618
    %v3689 = vpop.f32.mrb[0].mxu0
    %v3690 = vadd.f32 %v3616, %v3689
    %v3691 = vpop.f32.mrb[0].mxu0
    %3692 = vmatprep.mubr.f32.mxu0 0.0
    %3693 = vmatmul.mubr.f32.gmra.mrb[0].mxu0 %v3621
    %v3694 = vpop.f32.mrb[0].mxu0
    %v3695 = vadd.f32 %v3616, %v3694
    %v3696 = vpop.f32.mrb[0].mxu0
    %3697 = vdwg.mxu0
    %v3698 = vadd.f32 %v3690, %v2166
    %v3699 = vadd.f32 %v3695, %v2167
    %v3700 = vsel %vm320, %v3698, 0.0
    %3701 = vadd.xlane.f32.xlu0 %v3700
    %v3702 = vpop.xlane.xlu0 %3701
    %v3703 = vsel %vm320, %v3699, 0.0
    %3704 = vadd.xlane.f32.xlu0 %v3703
    %v3705 = vpop.xlane.xlu0 %3704
    %v3706 = vmul.f32 %v3702, %v333
    %v3707 = vmul.f32 %v3705, %v333
    %v3708 = vsub.f32 %v3698, %v3706
    %v3709 = vsub.f32 %v3699, %v3707
    %v3710 = vmul.f32 %v3708, %v3708
    %v3711 = vmul.f32 %v3709, %v3709
    %v3712 = vsel %vm320, %v3710, 0.0
    %3713 = vadd.xlane.f32.xlu0 %v3712
    %v3714 = vpop.xlane.xlu0 %3713
    %v3715 = vsel %vm320, %v3711, 0.0
    %3716 = vadd.xlane.f32.xlu0 %v3715
    %v3717 = vpop.xlane.xlu0 %3716
    %v3718 = vmul.f32 %v3714, %v333
    %v3719 = vmul.f32 %v3717, %v333
    %v3720 = vadd.f32 %v3718, 1e-12
    %v3721 = vadd.f32 %v3719, 1e-12
    %v3722 = vrsqrt.pop %v3720
    %v3723 = vrsqrt.pop %v3721
    %v3724 = vmul.f32 %v3708, %v3722
    %v3725 = vmul.f32 %v3709, %v3723
    %v3726 = vlaneseq
    %v3727 = vshrl.u32 %v3726, 7
    %v3728 = vsub.s32 2, %v3727
    %v3729 = vrot.slane %v2169, %v3728
    %v3730 = vmul.f32 %v3724, %v3729
    %v3731 = vmul.f32 %v3725, %v3729
    %v3732 = vlaneseq
    %v3733 = vshrl.u32 %v3732, 7
    %v3734 = vsub.s32 3, %v3733
    %v3735 = vrot.slane %v2169, %v3734
    %v3736 = vadd.f32 %v3730, %v3735
    %v3737 = vadd.f32 %v3731, %v3735
    %s3738 = scalar_lea.vmem %s7, 32
    %v3739 = vld [vmem:[%s3738] sm:$0xff]
    %v3740 = vld [vmem:[%s3738 + $0x8] sm:$0xff]
    %v3741 = vld [vmem:[%s3738 + $0x10] sm:$0xff]
    %v3742 = vld [vmem:[%s3738 + $0x18] sm:$0xff]
    %v3743 = vlaneseq
    %v3744 = vshrl.u32 %v3743, 7
    %v3745 = vsub.s32 4, %v3744
    %v3746 = vrot.slane %v2169, %v3745
    %v3748 = vsel %vm320, %v3736, 0
    %v3751 = vsel %vm320, %v3737, 0
    %3753 = vmatprep.subr.mxu0 0.0
    %3754 = vmatpush1.msra.mxu0 %v3739
    %3755 = vmatprep.subr.mxu0 0.0
    %3756 = vmatpush1.msra.mxu0 %v3740
    %3757 = vmatprep.subr.mxu0 0.0
    %3758 = vmatpush1.msra.mxu0 %v3741
    %3759 = vmatprep.subr.mxu0 0.0
    %3760 = vmatpush1.msra.mxu0 %v3742
    %3761 = vmatprep.subr.mxu0 0.0
    %3762 = vmatpush1.msra.mxu0 0.0
    %3763 = vmatprep.subr.mxu0 0.0
    %3764 = vmatpush1.msra.mxu0 0.0
    %3765 = vmatprep.subr.mxu0 0.0
    %3766 = vmatpush1.msra.mxu0 0.0
    %3767 = vmatprep.subr.mxu0 0.0
    %3768 = vmatpush1.msra.mxu0 0.0
    %3769 = vmatprep.subr.mxu0 0.0
    %3770 = vmatpush1.msra.mxu0 0.0
    %3771 = vmatprep.subr.mxu0 0.0
    %3772 = vmatpush1.msra.mxu0 0.0
    %3773 = vmatprep.subr.mxu0 0.0
    %3774 = vmatpush1.msra.mxu0 0.0
    %3775 = vmatprep.subr.mxu0 0.0
    %3776 = vmatpush1.msra.mxu0 0.0
    %3777 = vmatprep.subr.mxu0 0.0
    %3778 = vmatpush1.msra.mxu0 0.0
    %3779 = vmatprep.subr.mxu0 0.0
    %3780 = vmatpush1.msra.mxu0 0.0
    %3781 = vmatprep.subr.mxu0 0.0
    %3782 = vmatpush1.msra.mxu0 0.0
    %3783 = vmatprep.subr.mxu0 0.0
    %3784 = vmatpush1.msra.mxu0 0.0
    %3785 = vmatprep.subr.mxu0 0.0
    %3786 = vmatpush1.msra.mxu0 0.0
    %3787 = vmatprep.subr.mxu0 0.0
    %3788 = vmatpush1.msra.mxu0 0.0
    %3789 = vmatprep.subr.mxu0 0.0
    %3790 = vmatpush1.msra.mxu0 0.0
    %3791 = vmatprep.subr.mxu0 0.0
    %3792 = vmatpush1.msra.mxu0 0.0
    %3793 = vmatprep.subr.mxu0 0.0
    %3794 = vmatpush1.msra.mxu0 0.0
    %3795 = vmatprep.subr.mxu0 0.0
    %3796 = vmatpush1.msra.mxu0 0.0
    %3797 = vmatprep.subr.mxu0 0.0
    %3798 = vmatpush1.msra.mxu0 0.0
    %3799 = vmatprep.subr.mxu0 0.0
    %3800 = vmatpush1.msra.mxu0 0.0
    %3801 = vmatprep.subr.mxu0 0.0
    %3802 = vmatpush1.msra.mxu0 0.0
    %3803 = vmatprep.subr.mxu0 0.0
    %3804 = vmatpush1.msra.mxu0 0.0
    %3805 = vmatprep.subr.mxu0 0.0
    %3806 = vmatpush1.msra.mxu0 0.0
    %3807 = vmatprep.subr.mxu0 0.0
    %3808 = vmatpush1.msra.mxu0 0.0
    %3809 = vmatprep.subr.mxu0 0.0
    %3810 = vmatpush1.msra.mxu0 0.0
    %3811 = vmatprep.subr.mxu0 0.0
    %3812 = vmatpush1.msra.mxu0 0.0
    %3813 = vmatprep.subr.mxu0 0.0
    %3814 = vmatpush1.msra.mxu0 0.0
    %3815 = vmatprep.subr.mxu0 0.0
    %3816 = vmatpush1.msra.mxu0 0.0
    %3817 = vmatprep.mubr.f32.mxu0 0.0
    %3818 = vmatmul.mubr.f32.gmra.mrb[0].mxu0 %v3748
    %v3819 = vpop.f32.mrb[0].mxu0
    %v3820 = vadd.f32 %v3746, %v3819
    %v3821 = vpop.f32.mrb[0].mxu0
    %3822 = vmatprep.mubr.f32.mxu0 0.0
    %3823 = vmatmul.mubr.f32.gmra.mrb[0].mxu0 %v3751
    %v3824 = vpop.f32.mrb[0].mxu0
    %v3825 = vadd.f32 %v3746, %v3824
    %v3826 = vpop.f32.mrb[0].mxu0
    %3827 = vdwg.mxu0
    %v3828 = vmul.f32 %v3820, 0.5
    %v3829 = vmul.f32 %v3825, 0.5
    %v3830 = vmul.f32 %v3820, 0.70710677
    %v3831 = vmul.f32 %v3825, 0.70710677
    %v3832 = verf.f32.pop %v3830
    %v3833 = verf.f32.pop %v3831
    %v3834 = vadd.f32 %v3832, 1.0
    %v3835 = vadd.f32 %v3833, 1.0
    %v3836 = vmul.f32 %v3828, %v3834
    %v3837 = vmul.f32 %v3829, %v3835
    %s3838 = scalar_lea.vmem %s8, 64
    %v3839 = vld [vmem:[%s3838] sm:$0xff]
    %v3840 = vld [vmem:[%s3838 + $0x8] sm:$0xff]
    %v3841 = vld [vmem:[%s3838 + $0x10] sm:$0xff]
    %v3842 = vld [vmem:[%s3838 + $0x18] sm:$0xff]
    %v3843 = vld [vmem:[%s3838 + $0x20] sm:$0xff]
    %v3844 = vld [vmem:[%s3838 + $0x28] sm:$0xff]
    %v3845 = vld [vmem:[%s3838 + $0x30] sm:$0xff]
    %v3846 = vld [vmem:[%s3838 + $0x38] sm:$0xff]
    %v3847 = vlaneseq
    %v3848 = vshrl.u32 %v3847, 7
    %v3849 = vsub.s32 5, %v3848
    %v3850 = vrot.slane %v2169, %v3849
    %v3852 = vsel %vm2046, %v3836, 0
    %v3855 = vsel %vm2046, %v3837, 0
    %3857 = vmatprep.subr.mxu0 0.0
    %3858 = vmatpush1.msra.mxu0 %v3839
    %3859 = vmatprep.subr.mxu0 0.0
    %3860 = vmatpush1.msra.mxu0 %v3840
    %3861 = vmatprep.subr.mxu0 0.0
    %3862 = vmatpush1.msra.mxu0 %v3841
    %3863 = vmatprep.subr.mxu0 0.0
    %3864 = vmatpush1.msra.mxu0 %v3842
    %3865 = vmatprep.subr.mxu0 0.0
    %3866 = vmatpush1.msra.mxu0 %v3843
    %3867 = vmatprep.subr.mxu0 0.0
    %3868 = vmatpush1.msra.mxu0 %v3844
    %3869 = vmatprep.subr.mxu0 0.0
    %3870 = vmatpush1.msra.mxu0 %v3845
    %3871 = vmatprep.subr.mxu0 0.0
    %3872 = vmatpush1.msra.mxu0 %v3846
    %3873 = vmatprep.subr.mxu0 0.0
    %3874 = vmatpush1.msra.mxu0 0.0
    %3875 = vmatprep.subr.mxu0 0.0
    %3876 = vmatpush1.msra.mxu0 0.0
    %3877 = vmatprep.subr.mxu0 0.0
    %3878 = vmatpush1.msra.mxu0 0.0
    %3879 = vmatprep.subr.mxu0 0.0
    %3880 = vmatpush1.msra.mxu0 0.0
    %3881 = vmatprep.subr.mxu0 0.0
    %3882 = vmatpush1.msra.mxu0 0.0
    %3883 = vmatprep.subr.mxu0 0.0
    %3884 = vmatpush1.msra.mxu0 0.0
    %3885 = vmatprep.subr.mxu0 0.0
    %3886 = vmatpush1.msra.mxu0 0.0
    %3887 = vmatprep.subr.mxu0 0.0
    %3888 = vmatpush1.msra.mxu0 0.0
    %3889 = vmatprep.subr.mxu0 0.0
    %3890 = vmatpush1.msra.mxu0 0.0
    %3891 = vmatprep.subr.mxu0 0.0
    %3892 = vmatpush1.msra.mxu0 0.0
    %3893 = vmatprep.subr.mxu0 0.0
    %3894 = vmatpush1.msra.mxu0 0.0
    %3895 = vmatprep.subr.mxu0 0.0
    %3896 = vmatpush1.msra.mxu0 0.0
    %3897 = vmatprep.subr.mxu0 0.0
    %3898 = vmatpush1.msra.mxu0 0.0
    %3899 = vmatprep.subr.mxu0 0.0
    %3900 = vmatpush1.msra.mxu0 0.0
    %3901 = vmatprep.subr.mxu0 0.0
    %3902 = vmatpush1.msra.mxu0 0.0
    %3903 = vmatprep.subr.mxu0 0.0
    %3904 = vmatpush1.msra.mxu0 0.0
    %3905 = vmatprep.subr.mxu0 0.0
    %3906 = vmatpush1.msra.mxu0 0.0
    %3907 = vmatprep.subr.mxu0 0.0
    %3908 = vmatpush1.msra.mxu0 0.0
    %3909 = vmatprep.subr.mxu0 0.0
    %3910 = vmatpush1.msra.mxu0 0.0
    %3911 = vmatprep.subr.mxu0 0.0
    %3912 = vmatpush1.msra.mxu0 0.0
    %3913 = vmatprep.subr.mxu0 0.0
    %3914 = vmatpush1.msra.mxu0 0.0
    %3915 = vmatprep.subr.mxu0 0.0
    %3916 = vmatpush1.msra.mxu0 0.0
    %3917 = vmatprep.subr.mxu0 0.0
    %3918 = vmatpush1.msra.mxu0 0.0
    %3919 = vmatprep.subr.mxu0 0.0
    %3920 = vmatpush1.msra.mxu0 0.0
    %3921 = vmatprep.mubr.f32.mxu0 0.0
    %3922 = vmatmul.mubr.f32.gmra.mrb[0].mxu0 %v3852
    %v3923 = vpop.f32.mrb[0].mxu0
    %v3924 = vadd.f32 %v3850, %v3923
    %v3925 = vpop.f32.mrb[0].mxu0
    %3926 = vmatprep.mubr.f32.mxu0 0.0
    %3927 = vmatmul.mubr.f32.gmra.mrb[0].mxu0 %v3855
    %v3928 = vpop.f32.mrb[0].mxu0
    %v3929 = vadd.f32 %v3850, %v3928
    %v3930 = vpop.f32.mrb[0].mxu0
    %3931 = vdwg.mxu0
    %v3932 = vadd.f32 %v3924, %v3736
    %v3933 = vadd.f32 %v3929, %v3737
    %v3934 = vsel %vm320, %v3932, 0.0
    %3935 = vadd.xlane.f32.xlu0 %v3934
    %v3936 = vpop.xlane.xlu0 %3935
    %v3937 = vsel %vm320, %v3933, 0.0
    %3938 = vadd.xlane.f32.xlu0 %v3937
    %v3939 = vpop.xlane.xlu0 %3938
    %v3940 = vmul.f32 %v3936, %v333
    %v3941 = vmul.f32 %v3939, %v333
    %v3942 = vsub.f32 %v3932, %v3940
    %v3943 = vsub.f32 %v3933, %v3941
    %v3944 = vmul.f32 %v3942, %v3942
    %v3945 = vmul.f32 %v3943, %v3943
    %v3946 = vsel %vm320, %v3944, 0.0
    %3947 = vadd.xlane.f32.xlu0 %v3946
    %v3948 = vpop.xlane.xlu0 %3947
    %v3949 = vsel %vm320, %v3945, 0.0
    %3950 = vadd.xlane.f32.xlu0 %v3949
    %v3951 = vpop.xlane.xlu0 %3950
    %v3952 = vmul.f32 %v3948, %v333
    %v3953 = vmul.f32 %v3951, %v333
    %v3954 = vadd.f32 %v3952, 1e-12
    %v3955 = vadd.f32 %v3953, 1e-12
    %v3956 = vrsqrt.pop %v3954
    %v3957 = vrsqrt.pop %v3955
    %v3958 = vmul.f32 %v3942, %v3956
    %v3959 = vmul.f32 %v3943, %v3957
    %v3960 = vlaneseq
    %v3961 = vshrl.u32 %v3960, 7
    %v3962 = vsub.s32 6, %v3961
    %v3963 = vrot.slane %v2169, %v3962
    %v3964 = vmul.f32 %v3958, %v3963
    %v3965 = vmul.f32 %v3959, %v3963
    %v3966 = vlaneseq
    %v3967 = vshrl.u32 %v3966, 7
    %v3968 = vsub.s32 7, %v3967
    %v3969 = vrot.slane %v2169, %v3968
    %v3970 = vadd.f32 %v3964, %v3969
    %v3971 = vadd.f32 %v3965, %v3969
    %3972 = vst.msk [vmem:[#allocation2] sm:$0xff] %vm320, %v3970
    %3973 = vst.msk [vmem:[#allocation2 + $0x8] sm:$0xff] %vm320, %v3971
    // Predicated region
    $region42: #{transformer_encoder_forward.1} parent=1 // pred_check
      _
    $region43: #{transformer_encoder_forward.1} parent=1 // pred_check_branch
      %3975 = sbr.rel (0) target = $region45
    $region44: #{transformer_encoder_forward.1} parent=1 // pred_region
      %s3977 = ssub.s32 256, 256
      %3978 = vsyncadd [#allocation3], %s3977
      %s3979 = sshll.u32 [#allocation2], 4
      %s3980 = int_to_ptr.vmem [resolvable:$true] %s3979
      %3985 = dma.vmem_to_hbm [thread:$0]  %s3980, 256, %s10, [#allocation3], 128, 128, 8
    $region45: #{transformer_encoder_forward.1} parent=1 // pred_fallthru
      _
    // Predicated region
    $region46: #{transformer_encoder_forward.1} parent=1 // pred_check
      _
    $region47: #{transformer_encoder_forward.1} parent=1 // pred_check_branch
      %3987 = sbr.rel (0) target = $region49
    $region48: #{transformer_encoder_forward.1} parent=1 // pred_region
      %s3989 = ssub.s32 256, 256
      %3990 = vsyncadd [#allocation5], %s3989
      %s3991 = sshll.u32 [#allocation4], 4
      %s3992 = int_to_ptr.vmem [resolvable:$true] %s3991
      %3997 = dma.vmem_to_hbm [thread:$0]  %s3992, 256, %s11, [#allocation5], 128, 128, 8
    $region49: #{transformer_encoder_forward.1} parent=1 // pred_fallthru
      _
    // Predicated region
    $region50: #{transformer_encoder_forward.1} parent=1 // pred_check
      _
    $region51: #{transformer_encoder_forward.1} parent=1 // pred_check_branch
      %3999 = sbr.rel (0) target = $region53
    $region52: #{transformer_encoder_forward.1} parent=1 // pred_region
      %4000 = dma.done [#allocation3], 256
    $region53: #{transformer_encoder_forward.1} parent=1 // pred_fallthru
      _
    // Predicated region
    $region54: #{transformer_encoder_forward.1} parent=1 // pred_check
      _
    $region55: #{transformer_encoder_forward.1} parent=1 // pred_check_branch
      %4002 = sbr.rel (0) target = $region57
    $region56: #{transformer_encoder_forward.1} parent=1 // pred_region
      %4003 = dma.done [#allocation5], 256
    $region57: #{transformer_encoder_forward.1} parent=1 // pred_fallthru
      _
    %4004 = vsyncpa [#allocation3], 1
    %4005 = vsyncpa [#allocation5], 1

</llo_original>
